<compile_context>
chip_gen: v6e
topology: v6e:2x2x1
jax: 0.10.0
libtpu: 0.0.40
codegen_flags: <defaults>
</compile_context>

<pallas_src>
import functools
import math

import jax
import jax.numpy as jnp
from jax.experimental import pallas as pl
from jax.experimental.pallas import tpu as pltpu


# ---------------------------------------------------------------------------
# Generic gridded linear:  y = x @ w + b  (optional ReLU), tiled over rows.
# ---------------------------------------------------------------------------

def _linear_kernel(x_ref, w_ref, b_ref, o_ref, *, act):
    y = jnp.dot(x_ref[...], w_ref[...], preferred_element_type=jnp.float32)
    y = y + b_ref[...]
    if act == "relu":
        y = jnp.maximum(y, 0.0)
    o_ref[...] = y.astype(o_ref.dtype)


def linear(x, w, b, act=None, tm=256):
    """x: (M, K), w: (K, N), b: (N,) -> (M, N).  Row-tiled so big M pipelines."""
    M, K = x.shape
    N = w.shape[1]
    TM = M if M <= tm else tm
    Mp = -(-M // TM) * TM
    xp = jnp.pad(x, ((0, Mp - M), (0, 0))) if Mp != M else x
    out = pl.pallas_call(
        functools.partial(_linear_kernel, act=act),
        out_shape=jax.ShapeDtypeStruct((Mp, N), jnp.float32),
        grid=(Mp // TM,),
        in_specs=[
            pl.BlockSpec((TM, K), lambda i: (i, 0)),
            pl.BlockSpec((K, N), lambda i: (0, 0)),
            pl.BlockSpec((1, N), lambda i: (0, 0)),
        ],
        out_specs=pl.BlockSpec((TM, N), lambda i: (i, 0)),
        compiler_params=pltpu.CompilerParams(dimension_semantics=("parallel",)),
    )(xp, w, b.reshape(1, N))
    return out[:M] if Mp != M else out


# ---------------------------------------------------------------------------
# Attention core (per batch*head tile): softmax(q k^T / sqrt(dh)) v
# ---------------------------------------------------------------------------

def _attention_kernel(q_ref, k_ref, v_ref, o_ref, *, scale):
    q = q_ref[0] * scale                                   # pre-scale q: (S, dh) mul
    k = k_ref[0]
    v = v_ref[0]
    s = jnp.dot(q, k.T, preferred_element_type=jnp.float32)
    m = jnp.max(s, axis=-1, keepdims=True)
    p = jnp.exp(s - m)
    denom = jnp.sum(p, axis=-1, keepdims=True)
    p = p * pl.reciprocal(denom, approx=True)              # divide -> EUP slot
    o_ref[0] = jnp.dot(p, v, preferred_element_type=jnp.float32).astype(o_ref.dtype)


def attention(q, k, v, scale):
    """q, k, v: (B*H, S, dh) -> (B*H, S, dh)."""
    BH, S, dh = q.shape
    spec = pl.BlockSpec((1, S, dh), lambda i: (i, 0, 0))
    return pl.pallas_call(
        functools.partial(_attention_kernel, scale=scale),
        out_shape=jax.ShapeDtypeStruct((BH, S, dh), jnp.float32),
        grid=(BH,),
        in_specs=[spec, spec, spec],
        out_specs=spec,
        compiler_params=pltpu.CompilerParams(dimension_semantics=("parallel",)),
    )(q, k, v)


# ---------------------------------------------------------------------------
# Fused attention-output-projection + residual + LayerNorm
# ---------------------------------------------------------------------------

def _proj_residual_ln_kernel(x_ref, res_ref, w_ref, b_ref, g_ref, be_ref, o_ref, *, eps):
    y = jnp.dot(x_ref[...], w_ref[...], preferred_element_type=jnp.float32) + b_ref[...]
    y = y + res_ref[...]
    mu = jnp.mean(y, axis=-1, keepdims=True)
    var = jnp.mean((y - mu) ** 2, axis=-1, keepdims=True)
    y = (y - mu) * jax.lax.rsqrt(var + eps) * g_ref[...] + be_ref[...]
    o_ref[...] = y.astype(o_ref.dtype)


def proj_residual_ln(x, res, w, b, g, be, *, eps=1e-5, tm=256):
    M, K = x.shape
    N = w.shape[1]
    TM = M if M <= tm else tm
    Mp = -(-M // TM) * TM
    if Mp != M:
        x = jnp.pad(x, ((0, Mp - M), (0, 0)))
        res = jnp.pad(res, ((0, Mp - M), (0, 0)))
    out = pl.pallas_call(
        functools.partial(_proj_residual_ln_kernel, eps=eps),
        out_shape=jax.ShapeDtypeStruct((Mp, N), jnp.float32),
        grid=(Mp // TM,),
        in_specs=[
            pl.BlockSpec((TM, K), lambda i: (i, 0)),
            pl.BlockSpec((TM, N), lambda i: (i, 0)),
            pl.BlockSpec((K, N), lambda i: (0, 0)),
            pl.BlockSpec((1, N), lambda i: (0, 0)),
            pl.BlockSpec((1, N), lambda i: (0, 0)),
            pl.BlockSpec((1, N), lambda i: (0, 0)),
        ],
        out_specs=pl.BlockSpec((TM, N), lambda i: (i, 0)),
        compiler_params=pltpu.CompilerParams(dimension_semantics=("parallel",)),
    )(x, res, w, b.reshape(1, N), g.reshape(1, N), be.reshape(1, N))
    return out[:M] if Mp != M else out


# ---------------------------------------------------------------------------
# Fused feed-forward (ff1 + ReLU + ff2) + residual + LayerNorm
# (the (TM, 2048) intermediate never leaves VMEM)
# ---------------------------------------------------------------------------

def _ffn_residual_ln_kernel(x_ref, w1_ref, b1_ref, w2_ref, b2_ref, g_ref, be_ref,
                            o_ref, *, eps):
    x = x_ref[...]
    h = jnp.dot(x, w1_ref[...], preferred_element_type=jnp.float32) + b1_ref[...]
    h = jnp.maximum(h, 0.0)
    y = jnp.dot(h, w2_ref[...], preferred_element_type=jnp.float32) + b2_ref[...]
    y = y + x
    mu = jnp.mean(y, axis=-1, keepdims=True)
    var = jnp.mean((y - mu) ** 2, axis=-1, keepdims=True)
    y = (y - mu) * jax.lax.rsqrt(var + eps) * g_ref[...] + be_ref[...]
    o_ref[...] = y.astype(o_ref.dtype)


def ffn_residual_ln(x, w1, b1, w2, b2, g, be, *, eps=1e-5, tm=256):
    M, E = x.shape
    Fh = w1.shape[1]
    TM = M if M <= tm else tm
    Mp = -(-M // TM) * TM
    xp = jnp.pad(x, ((0, Mp - M), (0, 0))) if Mp != M else x
    out = pl.pallas_call(
        functools.partial(_ffn_residual_ln_kernel, eps=eps),
        out_shape=jax.ShapeDtypeStruct((Mp, E), jnp.float32),
        grid=(Mp // TM,),
        in_specs=[
            pl.BlockSpec((TM, E), lambda i: (i, 0)),
            pl.BlockSpec((E, Fh), lambda i: (0, 0)),
            pl.BlockSpec((1, Fh), lambda i: (0, 0)),
            pl.BlockSpec((Fh, E), lambda i: (0, 0)),
            pl.BlockSpec((1, E), lambda i: (0, 0)),
            pl.BlockSpec((1, E), lambda i: (0, 0)),
            pl.BlockSpec((1, E), lambda i: (0, 0)),
        ],
        out_specs=pl.BlockSpec((TM, E), lambda i: (i, 0)),
        compiler_params=pltpu.CompilerParams(dimension_semantics=("parallel",)),
    )(xp, w1, b1.reshape(1, Fh), w2, b2.reshape(1, E), g.reshape(1, E), be.reshape(1, E))
    return out[:M] if Mp != M else out


# ---------------------------------------------------------------------------
# conv1d1 + bn1 + ReLU as a single im2col matmul per batch element
# ---------------------------------------------------------------------------

def _conv1d_bn_relu_kernel(xpad_ref, w_ref, b_ref, o_ref, *, L, K, dil):
    # gather the 9 dilated taps in-register and do ONE (L, K*Cin) x (K*Cin, d) matmul
    cols = [xpad_ref[0, pl.ds(k * dil, L), :] for k in range(K)]
    xcat = jnp.concatenate(cols, axis=-1)                   # (L, K*Cin)
    y = jnp.dot(xcat, w_ref[...], preferred_element_type=jnp.float32) + b_ref[...]
    o_ref[0] = jnp.maximum(y, 0.0).astype(o_ref.dtype)


def conv1d_bn_relu(x, w_im2col, bias, *, L):
    """Conv1d(in=4, out=d, k=9, pad=8, dil=2) + folded BatchNorm1d + ReLU.

    x: (B, L, 4) channels-last; w_im2col: (9*4, d) (BN-folded, tap-major rows)."""
    B, _, Cin = x.shape
    KC, Cout = w_im2col.shape
    K, pad, dil = 9, 8, 2
    xpad = jnp.pad(x, ((0, 0), (pad, pad), (0, 0)))
    Lp = L + 2 * pad
    return pl.pallas_call(
        functools.partial(_conv1d_bn_relu_kernel, L=L, K=K, dil=dil),
        out_shape=jax.ShapeDtypeStruct((B, L, Cout), jnp.float32),
        grid=(B,),
        in_specs=[
            pl.BlockSpec((1, Lp, Cin), lambda b: (b, 0, 0)),
            pl.BlockSpec((KC, Cout), lambda b: (0, 0)),
            pl.BlockSpec((1, Cout), lambda b: (0, 0)),
        ],
        out_specs=pl.BlockSpec((1, L, Cout), lambda b: (b, 0, 0)),
        compiler_params=pltpu.CompilerParams(dimension_semantics=("parallel",)),
    )(xpad, w_im2col, bias.reshape(1, Cout))


# ---------------------------------------------------------------------------
# Contact head: pairwise [emb_min, emb_max] feature + 1x1 conv stack + symmetrize
#
# The per-position conv_test_1 projections p = emb @ Wmin, q = emb @ Wmax are
# hoisted and computed ONCE per sequence (fused weight (3d, 2d)); this kernel
# only performs the pairwise select/add + ReLU, one flattened (ti*tj, d) x (d, d)
# matmul (conv_test_2), and the d -> 1 reduce (conv_test_3).
# ---------------------------------------------------------------------------

def _contact_head_kernel(pq_r_ref, pq_c_ref, b1_ref, w2_ref, b2_ref, w3_ref, b3_ref,
                         o_ref, *, ti, tj, d):
    bi = pl.program_id(1)
    bj = pl.program_id(2)
    pq_r = pq_r_ref[0]                                      # (TI, 2d): rows i
    pq_c = pq_c_ref[0]                                      # (TJ, 2d): cols j
    p_r, q_r = pq_r[:, :d], pq_r[:, d:]
    p_c, q_c = pq_c[:, :d], pq_c[:, d:]
    gi = bi * ti + jax.lax.broadcasted_iota(jnp.int32, (ti, tj, 1), 0)
    gj = bj * tj + jax.lax.broadcasted_iota(jnp.int32, (ti, tj, 1), 1)
    row_is_min = gi <= gj
    # conv_test_1 (1x1, BN folded): pairwise combine of the hoisted projections
    h1 = jnp.where(row_is_min,
                   p_r[:, None, :] + q_c[None, :, :],
                   p_c[None, :, :] + q_r[:, None, :])
    h1 = jnp.maximum(h1 + b1_ref[...][None], 0.0)           # (TI, TJ, d)
    # conv_test_2 (1x1, BN folded) + ReLU as ONE streaming matmul (hot path)
    h1f = h1.reshape(ti * tj, d)
    h2f = jnp.dot(h1f, w2_ref[...], preferred_element_type=jnp.float32) + b2_ref[...]
    h2f = jnp.maximum(h2f, 0.0)
    h2 = h2f.reshape(ti, tj, d)
    # conv_test_3 (1x1, d -> 1)
    out = jnp.sum(h2 * w3_ref[...][None], axis=-1) + b3_ref[0, 0]
    # Already symmetric (min/max features), so the reference's (c + c^T)/2 is identity.
    o_ref[0] = out.astype(o_ref.dtype)


def contact_head(pq, head, *, L, d):
    """pq: (B, L, 2d) = [emb @ Wmin | emb @ Wmax]  ->  (B, L, L)."""
    B = pq.shape[0]
    if L <= 256:
        Lp, TI, TJ = L, L, L                               # single full-array tile
    else:
        Lp = -(-L // 128) * 128                            # pad to lane-dense multiple
        TI = TJ = 256 if Lp % 256 == 0 else 128            # VMEM-safe tiles (v5e/v7x)
    if Lp != L:
        pq = jnp.pad(pq, ((0, 0), (0, Lp - L), (0, 0)))
    out = pl.pallas_call(
        functools.partial(_contact_head_kernel, ti=TI, tj=TJ, d=d),
        out_shape=jax.ShapeDtypeStruct((B, Lp, Lp), jnp.float32),
        grid=(B, Lp // TI, Lp // TJ),
        in_specs=[
            pl.BlockSpec((1, TI, 2 * d), lambda b, i, j: (b, i, 0)),   # row projections
            pl.BlockSpec((1, TJ, 2 * d), lambda b, i, j: (b, j, 0)),   # col projections
            pl.BlockSpec((1, d), lambda b, i, j: (0, 0)),              # b1 (folded)
            pl.BlockSpec((d, d), lambda b, i, j: (0, 0)),              # W2 (folded)
            pl.BlockSpec((1, d), lambda b, i, j: (0, 0)),              # b2 (folded)
            pl.BlockSpec((1, d), lambda b, i, j: (0, 0)),              # w3
            pl.BlockSpec(memory_space=pltpu.MemorySpace.SMEM),         # b3 scalar
        ],
        out_specs=pl.BlockSpec((1, TI, TJ), lambda b, i, j: (b, i, j)),
        compiler_params=pltpu.CompilerParams(
            dimension_semantics=("parallel", "parallel", "parallel")),
    )(pq, pq, head["b1"], head["w2"], head["b2"], head["w3"], head["b3"])
    if Lp != L:
        out = out[:, :L, :L]
    return out


# ---------------------------------------------------------------------------
# Transformer encoder layer (post-norm, eval mode; dropout = identity)
# ---------------------------------------------------------------------------

def encoder_layer(x, p, *, n_heads):
    S, B, E = x.shape
    dh = E // n_heads
    x2 = x.reshape(S * B, E)
    qkv = linear(x2, p["in_w"], p["in_b"])                  # fused QKV projection
    q, k, v = jnp.split(qkv, 3, axis=-1)

    def to_heads(t):
        return t.reshape(S, B, n_heads, dh).transpose(1, 2, 0, 3).reshape(B * n_heads, S, dh)

    oh = attention(to_heads(q), to_heads(k), to_heads(v), scale=1.0 / math.sqrt(dh))
    o = oh.reshape(B, n_heads, S, dh).transpose(2, 0, 1, 3).reshape(S * B, E)
    # out-proj + residual + LayerNorm1, fused
    y = proj_residual_ln(o, x2, p["out_w"], p["out_b"], p["ln1_g"], p["ln1_b"])
    # ff1 + ReLU + ff2 + residual + LayerNorm2, fused (intermediate stays in VMEM)
    z = ffn_residual_ln(y, p["ff1_w"], p["ff1_b"], p["ff2_w"], p["ff2_b"],
                        p["ln2_g"], p["ln2_b"])
    return z.reshape(S, B, E)


# ---------------------------------------------------------------------------
# Full forward (mirrors ContactAttention_simple.forward)
# ---------------------------------------------------------------------------

def contact_attention_simple_forward(params, prior, seq, state, *, d, L):
    """prior: (B, L, L, 1), seq: (B, L, 4), state: (B, L, L).
    prior/state are accepted but unused, exactly as in the reference forward."""
    del prior, state
    B = seq.shape[0]
    # conv1d1 + bn1 + ReLU (Pallas kernel, single im2col matmul)
    x = conv1d_bn_relu(seq, params["conv1_w"], params["conv1_b"], L=L)        # (B, L, d)
    pos_cl = jnp.transpose(params["pos_emb"], (0, 2, 1))                      # (1, L, d)
    pos_b = jnp.broadcast_to(pos_cl, (B, L, d))
    x = jnp.concatenate([x, pos_b], axis=-1)                                  # (B, L, 2d)
    # transformer encoder (3 layers), sequence-first like PyTorch
    h = jnp.transpose(x, (1, 0, 2))                                           # (L, B, 2d)
    for lp in params["layers"]:
        h = encoder_layer(h, lp, n_heads=2)
    seq_feat = jnp.transpose(h, (1, 0, 2))                                    # (B, L, 2d)
    emb = jnp.concatenate([seq_feat, pos_b], axis=-1)                         # (B, L, 3d)
    # hoisted per-position conv_test_1 projections: [emb@Wmin | emb@Wmax] once per seq
    pq = linear(emb.reshape(B * L, 3 * d), params["head"]["w12"],
                jnp.zeros((2 * d,), jnp.float32)).reshape(B, L, 2 * d)
    # pairwise matrix_rep + 1x1 conv stack + symmetrization (tiled Pallas kernel)
    return contact_head(pq, params["head"], L=L, d=d)                         # (B, L, L)


# ---------------------------------------------------------------------------
# Deterministic parameter initialization (shapes from the module __init__)
# ---------------------------------------------------------------------------

def init_params(key, d, L, *, ff=2048, n_layers=3):
    E = 2 * d
    kit = iter(jax.random.split(key, 64))

    def rnd(shape, scale):
        return jax.random.normal(next(kit), shape, jnp.float32) * scale

    def fold_bn(w, b, gamma, beta, eps=1e-5):
        # eval-mode BN with running_mean=0, running_var=1, folded into the conv.
        s = gamma / jnp.sqrt(1.0 + eps)
        return w * s.reshape((-1,) + (1,) * (w.ndim - 1)), s * b + beta

    def bn_params(n):
        return 1.0 + rnd((n,), 0.1), rnd((n,), 0.1)

    params = {}

    # conv1d1 (d, 4, 9) + bn1, folded; reorganized as im2col weight (9*4, d), tap-major
    w1 = rnd((d, 4, 9), 1.0 / math.sqrt(4 * 9))
    b1 = rnd((d,), 0.05)
    g, be = bn_params(d)
    w1f, b1f = fold_bn(w1, b1, g, be)
    params["conv1_w"] = jnp.transpose(w1f, (2, 1, 0)).reshape(9 * 4, d)
    params["conv1_b"] = b1f

    # position_embedding_1d (1, d, L)  (original: (1, d, 600))
    params["pos_emb"] = rnd((1, d, L), 1.0)

    # contact head: conv_test_1 (d, 6d) + bn_conv_1, conv_test_2 (d, d) + bn_conv_2,
    #               conv_test_3 (1, d)
    wc1 = rnd((d, 6 * d), 1.0 / math.sqrt(6 * d))
    bc1 = rnd((d,), 0.05)
    g1, be1 = bn_params(d)
    wc1f, bc1f = fold_bn(wc1, bc1, g1, be1)
    wt = wc1f.T                                              # (6d, d), rows = input channels
    # input channel order of conv_test_1: [seq_min(2d), seq_max(2d), pos_min(d), pos_max(d)]
    # TODO(synk): real PyTorch checkpoints must be remapped with this exact row slicing.
    wmin = jnp.concatenate([wt[0:2 * d], wt[4 * d:5 * d]], axis=0)   # (3d, d)
    wmax = jnp.concatenate([wt[2 * d:4 * d], wt[5 * d:6 * d]], axis=0)
    w12 = jnp.concatenate([wmin, wmax], axis=1)                      # fused (3d, 2d)

    wc2 = rnd((d, d), 1.0 / math.sqrt(d))
    bc2 = rnd((d,), 0.05)
    g2, be2 = bn_params(d)
    wc2f, bc2f = fold_bn(wc2, bc2, g2, be2)

    wc3 = rnd((1, d), 1.0 / math.sqrt(d))
    bc3 = rnd((1,), 0.05)

    params["head"] = dict(
        w12=w12, b1=bc1f.reshape(1, d),
        w2=wc2f.T, b2=bc2f.reshape(1, d),
        w3=wc3, b3=bc3.reshape(1, 1),
    )

    # transformer encoder: 3 x TransformerEncoderLayer(2d, nhead=2, ff=2048, relu, post-norm)
    layers = []
    for _ in range(n_layers):
        layers.append(dict(
            in_w=rnd((E, 3 * E), 1.0 / math.sqrt(E)), in_b=rnd((3 * E,), 0.02),
            out_w=rnd((E, E), 1.0 / math.sqrt(E)), out_b=rnd((E,), 0.02),
            ln1_g=jnp.ones((E,), jnp.float32), ln1_b=jnp.zeros((E,), jnp.float32),
            ff1_w=rnd((E, ff), 1.0 / math.sqrt(E)), ff1_b=rnd((ff,), 0.02),
            ff2_w=rnd((ff, E), 1.0 / math.sqrt(ff)), ff2_b=rnd((E,), 0.02),
            ln2_g=jnp.ones((E,), jnp.float32), ln2_b=jnp.zeros((E,), jnp.float32),
        ))
    params["layers"] = layers
    return params


# ---------------------------------------------------------------------------

if __name__ == "__main__":
    D_MODEL = 8      # "d" of the reference module
    SEQ_LEN = 16     # "L" (original hard-codes 600 via position_embedding_1d)
    BATCH = 2

    key = jax.random.PRNGKey(0)
    pkey, xkey = jax.random.split(key)
    params = init_params(pkey, D_MODEL, SEQ_LEN)

    k1, _ = jax.random.split(xkey)
    seq = jax.nn.one_hot(jax.random.randint(k1, (BATCH, SEQ_LEN), 0, 4), 4,
                         dtype=jnp.float32)                              # (B, L, 4)
    prior = jnp.zeros((BATCH, SEQ_LEN, SEQ_LEN, 1), jnp.float32)         # unused by forward
    state = jnp.zeros((BATCH, SEQ_LEN, SEQ_LEN), jnp.float32)            # unused by forward

    fwd = jax.jit(functools.partial(contact_attention_simple_forward,
                                    d=D_MODEL, L=SEQ_LEN))
    contact = fwd(params, prior, seq, state)
    contact = jax.block_until_ready(contact)

    assert contact.shape == (BATCH, SEQ_LEN, SEQ_LEN)
    assert bool(jnp.all(jnp.isfinite(contact)))
    # symmetric by construction, matching the reference's (contact + contact^T) / 2
    assert bool(jnp.allclose(contact, jnp.transpose(contact, (0, 2, 1)), atol=1e-5))
    print("KERNEL_OK")
</pallas_src>

<mosaic_0001>
module attributes {stable_mosaic.version = 11 : i64} {
  func.func @_linear_kernel(%arg0: i32, %arg1: memref<32x16xf32, #tpu.memory_space<vmem>>, %arg2: memref<16x48xf32, #tpu.memory_space<vmem>>, %arg3: memref<1x48xf32, #tpu.memory_space<vmem>>, %arg4: memref<32x48xf32, #tpu.memory_space<vmem>>) attributes {dimension_semantics = [#tpu.dimension_semantics<parallel>], iteration_bounds = array<i64: 1>, scalar_prefetch = 0 : i64, scratch_operands = 0 : i64, tpu.core_type = #tpu.core_type<tc>, window_params = [{transform_indices = @transform_0, window_bounds = array<i64: 32, 16>}, {pipeline_mode = #tpu.pipeline_mode<synchronous>, transform_indices = @transform_1, window_bounds = array<i64: 16, 48>}, {pipeline_mode = #tpu.pipeline_mode<synchronous>, transform_indices = @transform_2, window_bounds = array<i64: 1, 48>}, {transform_indices = @transform_3, window_bounds = array<i64: 32, 48>}]} {
    %c0 = arith.constant 0 : index
    %c0_0 = arith.constant 0 : index
    %0 = vector.load %arg1[%c0, %c0_0] : memref<32x16xf32, #tpu.memory_space<vmem>>, vector<32x16xf32>
    %c0_1 = arith.constant 0 : index
    %c0_2 = arith.constant 0 : index
    %1 = vector.load %arg2[%c0_1, %c0_2] : memref<16x48xf32, #tpu.memory_space<vmem>>, vector<16x48xf32>
    %cst = arith.constant dense<0.000000e+00> : vector<32x48xf32>
    %2 = tpu.matmul %0, %1, %cst {dimension_numbers = #tpu.dot_dimension_numbers<[1], [0], [0], [1], [0, 0, 1, 1], [], []>} : vector<32x16xf32>, vector<16x48xf32>, vector<32x48xf32> -> vector<32x48xf32>
    %c0_3 = arith.constant 0 : index
    %c0_4 = arith.constant 0 : index
    %3 = vector.load %arg3[%c0_3, %c0_4] : memref<1x48xf32, #tpu.memory_space<vmem>>, vector<1x48xf32>
    %4 = vector.broadcast %3 : vector<1x48xf32> to vector<32x48xf32>
    %5 = arith.addf %2, %4 : vector<32x48xf32>
    %c0_5 = arith.constant 0 : index
    %c0_6 = arith.constant 0 : index
    %6 = vector.load %arg4[%c0_5, %c0_6] : memref<32x48xf32, #tpu.memory_space<vmem>>, vector<32x48xf32>
    tpu.vector_store %arg4[%c0_5, %c0_6], %5 {strides = array<i32>} : memref<32x48xf32, #tpu.memory_space<vmem>>, vector<32x48xf32>,
    return
  }
  func.func @transform_0(%arg0: i32) -> (i32, i32) {
    %c0_i32 = arith.constant 0 : i32
    %c0_i32_0 = arith.constant 0 : i32
    return %arg0, %c0_i32 : i32, i32
  }
  func.func @transform_1(%arg0: i32) -> (i32, i32) {
    %c0_i32 = arith.constant 0 : i32
    %c0_i32_0 = arith.constant 0 : i32
    %c0_i32_1 = arith.constant 0 : i32
    return %c0_i32, %c0_i32_0 : i32, i32
  }
  func.func @transform_2(%arg0: i32) -> (i32, i32) {
    %c0_i32 = arith.constant 0 : i32
    %c0_i32_0 = arith.constant 0 : i32
    %c0_i32_1 = arith.constant 0 : i32
    return %c0_i32, %c0_i32_0 : i32, i32
  }
  func.func @transform_3(%arg0: i32) -> (i32, i32) {
    %c0_i32 = arith.constant 0 : i32
    %c0_i32_0 = arith.constant 0 : i32
    return %arg0, %c0_i32 : i32, i32
  }
}

module attributes {stable_mosaic.version = 11 : i64} {
  func.func @_conv1d_bn_relu_kernel(%arg0: i32, %arg1: memref<1x32x4xf32, #tpu.memory_space<vmem>>, %arg2: memref<36x8xf32, #tpu.memory_space<vmem>>, %arg3: memref<1x8xf32, #tpu.memory_space<vmem>>, %arg4: memref<1x16x8xf32, #tpu.memory_space<vmem>>) attributes {dimension_semantics = [#tpu.dimension_semantics<parallel>], iteration_bounds = array<i64: 2>, scalar_prefetch = 0 : i64, scratch_operands = 0 : i64, tpu.core_type = #tpu.core_type<tc>, window_params = [{transform_indices = @transform_0, window_bounds = array<i64: 1, 32, 4>}, {pipeline_mode = #tpu.pipeline_mode<synchronous>, transform_indices = @transform_1, window_bounds = array<i64: 36, 8>}, {pipeline_mode = #tpu.pipeline_mode<synchronous>, transform_indices = @transform_2, window_bounds = array<i64: 1, 8>}, {transform_indices = @transform_3, window_bounds = array<i64: 1, 16, 8>}]} {
    %c0 = arith.constant 0 : index
    %c0_0 = arith.constant 0 : index
    %c0_1 = arith.constant 0 : index
    %0 = vector.load %arg1[%c0, %c0_0, %c0_1] : memref<1x32x4xf32, #tpu.memory_space<vmem>>, vector<1x16x4xf32>
    %1 = vector.shape_cast %0 : vector<1x16x4xf32> to vector<16x4xf32>
    %c0_2 = arith.constant 0 : index
    %c2 = arith.constant 2 : index
    %c0_3 = arith.constant 0 : index
    %2 = vector.load %arg1[%c0_2, %c2, %c0_3] : memref<1x32x4xf32, #tpu.memory_space<vmem>>, vector<1x16x4xf32>
    %3 = vector.shape_cast %2 : vector<1x16x4xf32> to vector<16x4xf32>
    %c0_4 = arith.constant 0 : index
    %c4 = arith.constant 4 : index
    %c0_5 = arith.constant 0 : index
    %4 = vector.load %arg1[%c0_4, %c4, %c0_5] : memref<1x32x4xf32, #tpu.memory_space<vmem>>, vector<1x16x4xf32>
    %5 = vector.shape_cast %4 : vector<1x16x4xf32> to vector<16x4xf32>
    %c0_6 = arith.constant 0 : index
    %c6 = arith.constant 6 : index
    %c0_7 = arith.constant 0 : index
    %6 = vector.load %arg1[%c0_6, %c6, %c0_7] : memref<1x32x4xf32, #tpu.memory_space<vmem>>, vector<1x16x4xf32>
    %7 = vector.shape_cast %6 : vector<1x16x4xf32> to vector<16x4xf32>
    %c0_8 = arith.constant 0 : index
    %c8 = arith.constant 8 : index
    %c0_9 = arith.constant 0 : index
    %8 = vector.load %arg1[%c0_8, %c8, %c0_9] : memref<1x32x4xf32, #tpu.memory_space<vmem>>, vector<1x16x4xf32>
    %9 = vector.shape_cast %8 : vector<1x16x4xf32> to vector<16x4xf32>
    %c0_10 = arith.constant 0 : index
    %c10 = arith.constant 10 : index
    %c0_11 = arith.constant 0 : index
    %10 = vector.load %arg1[%c0_10, %c10, %c0_11] : memref<1x32x4xf32, #tpu.memory_space<vmem>>, vector<1x16x4xf32>
    %11 = vector.shape_cast %10 : vector<1x16x4xf32> to vector<16x4xf32>
    %c0_12 = arith.constant 0 : index
    %c12 = arith.constant 12 : index
    %c0_13 = arith.constant 0 : index
    %12 = vector.load %arg1[%c0_12, %c12, %c0_13] : memref<1x32x4xf32, #tpu.memory_space<vmem>>, vector<1x16x4xf32>
    %13 = vector.shape_cast %12 : vector<1x16x4xf32> to vector<16x4xf32>
    %c0_14 = arith.constant 0 : index
    %c14 = arith.constant 14 : index
    %c0_15 = arith.constant 0 : index
    %14 = vector.load %arg1[%c0_14, %c14, %c0_15] : memref<1x32x4xf32, #tpu.memory_space<vmem>>, vector<1x16x4xf32>
    %15 = vector.shape_cast %14 : vector<1x16x4xf32> to vector<16x4xf32>
    %c0_16 = arith.constant 0 : index
    %c16 = arith.constant 16 : index
    %c0_17 = arith.constant 0 : index
    %16 = vector.load %arg1[%c0_16, %c16, %c0_17] : memref<1x32x4xf32, #tpu.memory_space<vmem>>, vector<1x16x4xf32>
    %17 = vector.shape_cast %16 : vector<1x16x4xf32> to vector<16x4xf32>
    %18 = tpu.concatenate %1, %3, %5, %7, %9, %11, %13, %15, %17 in 1 : vector<16x4xf32>, vector<16x4xf32>, vector<16x4xf32>, vector<16x4xf32>, vector<16x4xf32>, vector<16x4xf32>, vector<16x4xf32>, vector<16x4xf32>, vector<16x4xf32> -> vector<16x36xf32>
    %c0_18 = arith.constant 0 : index
    %c0_19 = arith.constant 0 : index
    %19 = vector.load %arg2[%c0_18, %c0_19] : memref<36x8xf32, #tpu.memory_space<vmem>>, vector<36x8xf32>
    %cst = arith.constant dense<0.000000e+00> : vector<16x8xf32>
    %20 = tpu.matmul %18, %19, %cst {dimension_numbers = #tpu.dot_dimension_numbers<[1], [0], [0], [1], [0, 0, 1, 1], [], []>} : vector<16x36xf32>, vector<36x8xf32>, vector<16x8xf32> -> vector<16x8xf32>
    %c0_20 = arith.constant 0 : index
    %c0_21 = arith.constant 0 : index
    %21 = vector.load %arg3[%c0_20, %c0_21] : memref<1x8xf32, #tpu.memory_space<vmem>>, vector<1x8xf32>
    %22 = vector.broadcast %21 : vector<1x8xf32> to vector<16x8xf32>
    %23 = arith.addf %20, %22 : vector<16x8xf32>
    %cst_22 = arith.constant 0.000000e+00 : f32
    %24 = vector.broadcast %cst_22 : f32 to vector<16x8xf32>
    %25 = arith.maximumf %23, %24 : vector<16x8xf32>
    %c0_23 = arith.constant 0 : index
    %c0_24 = arith.constant 0 : index
    %c0_25 = arith.constant 0 : index
    %26 = vector.load %arg4[%c0_23, %c0_24, %c0_25] : memref<1x16x8xf32, #tpu.memory_space<vmem>>, vector<1x16x8xf32>
    %27 = vector.shape_cast %26 : vector<1x16x8xf32> to vector<16x8xf32>
    %28 = vector.shape_cast %25 : vector<16x8xf32> to vector<1x16x8xf32>
    tpu.vector_store %arg4[%c0_23, %c0_24, %c0_25], %28 {strides = array<i32>} : memref<1x16x8xf32, #tpu.memory_space<vmem>>, vector<1x16x8xf32>,
    return
  }
  func.func @transform_0(%arg0: i32) -> (i32, i32, i32) {
    %c0_i32 = arith.constant 0 : i32
    %c0_i32_0 = arith.constant 0 : i32
    %c0_i32_1 = arith.constant 0 : i32
    return %arg0, %c0_i32, %c0_i32_0 : i32, i32, i32
  }
  func.func @transform_1(%arg0: i32) -> (i32, i32) {
    %c0_i32 = arith.constant 0 : i32
    %c0_i32_0 = arith.constant 0 : i32
    %c0_i32_1 = arith.constant 0 : i32
    return %c0_i32, %c0_i32_0 : i32, i32
  }
  func.func @transform_2(%arg0: i32) -> (i32, i32) {
    %c0_i32 = arith.constant 0 : i32
    %c0_i32_0 = arith.constant 0 : i32
    %c0_i32_1 = arith.constant 0 : i32
    return %c0_i32, %c0_i32_0 : i32, i32
  }
  func.func @transform_3(%arg0: i32) -> (i32, i32, i32) {
    %c0_i32 = arith.constant 0 : i32
    %c0_i32_0 = arith.constant 0 : i32
    %c0_i32_1 = arith.constant 0 : i32
    return %arg0, %c0_i32, %c0_i32_0 : i32, i32, i32
  }
}

module attributes {stable_mosaic.version = 11 : i64} {
  func.func @_attention_kernel(%arg0: i32, %arg1: memref<1x16x8xf32, #tpu.memory_space<vmem>>, %arg2: memref<1x16x8xf32, #tpu.memory_space<vmem>>, %arg3: memref<1x16x8xf32, #tpu.memory_space<vmem>>, %arg4: memref<1x16x8xf32, #tpu.memory_space<vmem>>) attributes {dimension_semantics = [#tpu.dimension_semantics<parallel>], iteration_bounds = array<i64: 4>, scalar_prefetch = 0 : i64, scratch_operands = 0 : i64, tpu.core_type = #tpu.core_type<tc>, window_params = [{transform_indices = @transform_0, window_bounds = array<i64: 1, 16, 8>}, {transform_indices = @transform_1, window_bounds = array<i64: 1, 16, 8>}, {transform_indices = @transform_2, window_bounds = array<i64: 1, 16, 8>}, {transform_indices = @transform_3, window_bounds = array<i64: 1, 16, 8>}]} {
    %c0 = arith.constant 0 : index
    %c0_0 = arith.constant 0 : index
    %c0_1 = arith.constant 0 : index
    %0 = vector.load %arg1[%c0, %c0_0, %c0_1] : memref<1x16x8xf32, #tpu.memory_space<vmem>>, vector<1x16x8xf32>
    %1 = vector.shape_cast %0 : vector<1x16x8xf32> to vector<16x8xf32>
    %cst = arith.constant 0.353553385 : f32
    %2 = vector.broadcast %cst : f32 to vector<16x8xf32>
    %3 = arith.mulf %1, %2 : vector<16x8xf32>
    %c0_2 = arith.constant 0 : index
    %c0_3 = arith.constant 0 : index
    %c0_4 = arith.constant 0 : index
    %4 = vector.load %arg2[%c0_2, %c0_3, %c0_4] : memref<1x16x8xf32, #tpu.memory_space<vmem>>, vector<1x16x8xf32>
    %5 = vector.shape_cast %4 : vector<1x16x8xf32> to vector<16x8xf32>
    %c0_5 = arith.constant 0 : index
    %c0_6 = arith.constant 0 : index
    %c0_7 = arith.constant 0 : index
    %6 = vector.load %arg3[%c0_5, %c0_6, %c0_7] : memref<1x16x8xf32, #tpu.memory_space<vmem>>, vector<1x16x8xf32>
    %7 = vector.shape_cast %6 : vector<1x16x8xf32> to vector<16x8xf32>
    %8 = tpu.transpose %5, [1, 0] : vector<16x8xf32> -> vector<8x16xf32>
    %cst_8 = arith.constant dense<0.000000e+00> : vector<16x16xf32>
    %9 = tpu.matmul %3, %8, %cst_8 {dimension_numbers = #tpu.dot_dimension_numbers<[1], [0], [0], [1], [0, 0, 1, 1], [], []>} : vector<16x8xf32>, vector<8x16xf32>, vector<16x16xf32> -> vector<16x16xf32>
    %cst_9 = arith.constant dense<0xFF800000> : vector<16xf32>
    %10 = vector.multi_reduction <maximumf>, %9, %cst_9 [1] : vector<16x16xf32> to vector<16xf32>
    %11 = vector.shape_cast %10 : vector<16xf32> to vector<16x1xf32>
    %12 = vector.broadcast %11 : vector<16x1xf32> to vector<16x16xf32>
    %13 = arith.subf %9, %12 : vector<16x16xf32>
    %14 = math.exp %13 : vector<16x16xf32>
    %cst_10 = arith.constant dense<0.000000e+00> : vector<16xf32>
    %15 = vector.multi_reduction <add>, %14, %cst_10 [1] : vector<16x16xf32> to vector<16xf32>
    %16 = vector.shape_cast %15 : vector<16xf32> to vector<16x1xf32>
    %17 = tpu.reciprocal %16 {approx = true} : vector<16x1xf32> -> vector<16x1xf32>
    %18 = vector.broadcast %17 : vector<16x1xf32> to vector<16x16xf32>
    %19 = arith.mulf %14, %18 : vector<16x16xf32>
    %cst_11 = arith.constant dense<0.000000e+00> : vector<16x8xf32>
    %20 = tpu.matmul %19, %7, %cst_11 {dimension_numbers = #tpu.dot_dimension_numbers<[1], [0], [0], [1], [0, 0, 1, 1], [], []>} : vector<16x16xf32>, vector<16x8xf32>, vector<16x8xf32> -> vector<16x8xf32>
    %c0_12 = arith.constant 0 : index
    %c0_13 = arith.constant 0 : index
    %c0_14 = arith.constant 0 : index
    %21 = vector.load %arg4[%c0_12, %c0_13, %c0_14] : memref<1x16x8xf32, #tpu.memory_space<vmem>>, vector<1x16x8xf32>
    %22 = vector.shape_cast %21 : vector<1x16x8xf32> to vector<16x8xf32>
    %23 = vector.shape_cast %20 : vector<16x8xf32> to vector<1x16x8xf32>
    tpu.vector_store %arg4[%c0_12, %c0_13, %c0_14], %23 {strides = array<i32>} : memref<1x16x8xf32, #tpu.memory_space<vmem>>, vector<1x16x8xf32>,
    return
  }
  func.func @transform_0(%arg0: i32) -> (i32, i32, i32) {
    %c0_i32 = arith.constant 0 : i32
    %c0_i32_0 = arith.constant 0 : i32
    %c0_i32_1 = arith.constant 0 : i32
    return %arg0, %c0_i32, %c0_i32_0 : i32, i32, i32
  }
  func.func @transform_1(%arg0: i32) -> (i32, i32, i32) {
    %c0_i32 = arith.constant 0 : i32
    %c0_i32_0 = arith.constant 0 : i32
    %c0_i32_1 = arith.constant 0 : i32
    return %arg0, %c0_i32, %c0_i32_0 : i32, i32, i32
  }
  func.func @transform_2(%arg0: i32) -> (i32, i32, i32) {
    %c0_i32 = arith.constant 0 : i32
    %c0_i32_0 = arith.constant 0 : i32
    %c0_i32_1 = arith.constant 0 : i32
    return %arg0, %c0_i32, %c0_i32_0 : i32, i32, i32
  }
  func.func @transform_3(%arg0: i32) -> (i32, i32, i32) {
    %c0_i32 = arith.constant 0 : i32
    %c0_i32_0 = arith.constant 0 : i32
    %c0_i32_1 = arith.constant 0 : i32
    return %arg0, %c0_i32, %c0_i32_0 : i32, i32, i32
  }
}

module attributes {stable_mosaic.version = 11 : i64} {
  func.func @_proj_residual_ln_kernel(%arg0: i32, %arg1: memref<32x16xf32, #tpu.memory_space<vmem>>, %arg2: memref<32x16xf32, #tpu.memory_space<vmem>>, %arg3: memref<16x16xf32, #tpu.memory_space<vmem>>, %arg4: memref<1x16xf32, #tpu.memory_space<vmem>>, %arg5: memref<1x16xf32, #tpu.memory_space<vmem>>, %arg6: memref<1x16xf32, #tpu.memory_space<vmem>>, %arg7: memref<32x16xf32, #tpu.memory_space<vmem>>) attributes {dimension_semantics = [#tpu.dimension_semantics<parallel>], iteration_bounds = array<i64: 1>, scalar_prefetch = 0 : i64, scratch_operands = 0 : i64, tpu.core_type = #tpu.core_type<tc>, window_params = [{transform_indices = @transform_0, window_bounds = array<i64: 32, 16>}, {transform_indices = @transform_1, window_bounds = array<i64: 32, 16>}, {pipeline_mode = #tpu.pipeline_mode<synchronous>, transform_indices = @transform_2, window_bounds = array<i64: 16, 16>}, {pipeline_mode = #tpu.pipeline_mode<synchronous>, transform_indices = @transform_3, window_bounds = array<i64: 1, 16>}, {pipeline_mode = #tpu.pipeline_mode<synchronous>, transform_indices = @transform_4, window_bounds = array<i64: 1, 16>}, {pipeline_mode = #tpu.pipeline_mode<synchronous>, transform_indices = @transform_5, window_bounds = array<i64: 1, 16>}, {transform_indices = @transform_6, window_bounds = array<i64: 32, 16>}]} {
    %c0 = arith.constant 0 : index
    %c0_0 = arith.constant 0 : index
    %0 = vector.load %arg1[%c0, %c0_0] : memref<32x16xf32, #tpu.memory_space<vmem>>, vector<32x16xf32>
    %c0_1 = arith.constant 0 : index
    %c0_2 = arith.constant 0 : index
    %1 = vector.load %arg3[%c0_1, %c0_2] : memref<16x16xf32, #tpu.memory_space<vmem>>, vector<16x16xf32>
    %cst = arith.constant dense<0.000000e+00> : vector<32x16xf32>
    %2 = tpu.matmul %0, %1, %cst {dimension_numbers = #tpu.dot_dimension_numbers<[1], [0], [0], [1], [0, 0, 1, 1], [], []>} : vector<32x16xf32>, vector<16x16xf32>, vector<32x16xf32> -> vector<32x16xf32>
    %c0_3 = arith.constant 0 : index
    %c0_4 = arith.constant 0 : index
    %3 = vector.load %arg4[%c0_3, %c0_4] : memref<1x16xf32, #tpu.memory_space<vmem>>, vector<1x16xf32>
    %4 = vector.broadcast %3 : vector<1x16xf32> to vector<32x16xf32>
    %5 = arith.addf %2, %4 : vector<32x16xf32>
    %c0_5 = arith.constant 0 : index
    %c0_6 = arith.constant 0 : index
    %6 = vector.load %arg2[%c0_5, %c0_6] : memref<32x16xf32, #tpu.memory_space<vmem>>, vector<32x16xf32>
    %7 = arith.addf %5, %6 : vector<32x16xf32>
    %cst_7 = arith.constant dense<0.000000e+00> : vector<32xf32>
    %8 = vector.multi_reduction <add>, %7, %cst_7 [1] : vector<32x16xf32> to vector<32xf32>
    %9 = vector.shape_cast %8 : vector<32xf32> to vector<32x1xf32>
    %cst_8 = arith.constant 1.600000e+01 : f32
    %10 = vector.broadcast %cst_8 : f32 to vector<32x1xf32>
    %11 = arith.divf %9, %10 : vector<32x1xf32>
    %12 = vector.broadcast %11 : vector<32x1xf32> to vector<32x16xf32>
    %13 = arith.subf %7, %12 : vector<32x16xf32>
    %14 = arith.mulf %13, %13 : vector<32x16xf32>
    %cst_9 = arith.constant dense<0.000000e+00> : vector<32xf32>
    %15 = vector.multi_reduction <add>, %14, %cst_9 [1] : vector<32x16xf32> to vector<32xf32>
    %16 = vector.shape_cast %15 : vector<32xf32> to vector<32x1xf32>
    %cst_10 = arith.constant 1.600000e+01 : f32
    %17 = vector.broadcast %cst_10 : f32 to vector<32x1xf32>
    %18 = arith.divf %16, %17 : vector<32x1xf32>
    %19 = vector.broadcast %11 : vector<32x1xf32> to vector<32x16xf32>
    %20 = arith.subf %7, %19 : vector<32x16xf32>
    %cst_11 = arith.constant 9.99999974E-6 : f32
    %21 = vector.broadcast %cst_11 : f32 to vector<32x1xf32>
    %22 = arith.addf %18, %21 : vector<32x1xf32>
    %23 = math.rsqrt %22 : vector<32x1xf32>
    %24 = vector.broadcast %23 : vector<32x1xf32> to vector<32x16xf32>
    %25 = arith.mulf %20, %24 : vector<32x16xf32>
    %c0_12 = arith.constant 0 : index
    %c0_13 = arith.constant 0 : index
    %26 = vector.load %arg5[%c0_12, %c0_13] : memref<1x16xf32, #tpu.memory_space<vmem>>, vector<1x16xf32>
    %27 = vector.broadcast %26 : vector<1x16xf32> to vector<32x16xf32>
    %28 = arith.mulf %25, %27 : vector<32x16xf32>
    %c0_14 = arith.constant 0 : index
    %c0_15 = arith.constant 0 : index
    %29 = vector.load %arg6[%c0_14, %c0_15] : memref<1x16xf32, #tpu.memory_space<vmem>>, vector<1x16xf32>
    %30 = vector.broadcast %29 : vector<1x16xf32> to vector<32x16xf32>
    %31 = arith.addf %28, %30 : vector<32x16xf32>
    %c0_16 = arith.constant 0 : index
    %c0_17 = arith.constant 0 : index
    %32 = vector.load %arg7[%c0_16, %c0_17] : memref<32x16xf32, #tpu.memory_space<vmem>>, vector<32x16xf32>
    tpu.vector_store %arg7[%c0_16, %c0_17], %31 {strides = array<i32>} : memref<32x16xf32, #tpu.memory_space<vmem>>, vector<32x16xf32>,
    return
  }
  func.func @transform_0(%arg0: i32) -> (i32, i32) {
    %c0_i32 = arith.constant 0 : i32
    %c0_i32_0 = arith.constant 0 : i32
    return %arg0, %c0_i32 : i32, i32
  }
  func.func @transform_1(%arg0: i32) -> (i32, i32) {
    %c0_i32 = arith.constant 0 : i32
    %c0_i32_0 = arith.constant 0 : i32
    return %arg0, %c0_i32 : i32, i32
  }
  func.func @transform_2(%arg0: i32) -> (i32, i32) {
    %c0_i32 = arith.constant 0 : i32
    %c0_i32_0 = arith.constant 0 : i32
    %c0_i32_1 = arith.constant 0 : i32
    return %c0_i32, %c0_i32_0 : i32, i32
  }
  func.func @transform_3(%arg0: i32) -> (i32, i32) {
    %c0_i32 = arith.constant 0 : i32
    %c0_i32_0 = arith.constant 0 : i32
    %c0_i32_1 = arith.constant 0 : i32
    return %c0_i32, %c0_i32_0 : i32, i32
  }
  func.func @transform_4(%arg0: i32) -> (i32, i32) {
    %c0_i32 = arith.constant 0 : i32
    %c0_i32_0 = arith.constant 0 : i32
    %c0_i32_1 = arith.constant 0 : i32
    return %c0_i32, %c0_i32_0 : i32, i32
  }
  func.func @transform_5(%arg0: i32) -> (i32, i32) {
    %c0_i32 = arith.constant 0 : i32
    %c0_i32_0 = arith.constant 0 : i32
    %c0_i32_1 = arith.constant 0 : i32
    return %c0_i32, %c0_i32_0 : i32, i32
  }
  func.func @transform_6(%arg0: i32) -> (i32, i32) {
    %c0_i32 = arith.constant 0 : i32
    %c0_i32_0 = arith.constant 0 : i32
    return %arg0, %c0_i32 : i32, i32
  }
}

module attributes {stable_mosaic.version = 11 : i64} {
  func.func @_ffn_residual_ln_kernel(%arg0: i32, %arg1: memref<32x16xf32, #tpu.memory_space<vmem>>, %arg2: memref<16x2048xf32, #tpu.memory_space<vmem>>, %arg3: memref<1x2048xf32, #tpu.memory_space<vmem>>, %arg4: memref<2048x16xf32, #tpu.memory_space<vmem>>, %arg5: memref<1x16xf32, #tpu.memory_space<vmem>>, %arg6: memref<1x16xf32, #tpu.memory_space<vmem>>, %arg7: memref<1x16xf32, #tpu.memory_space<vmem>>, %arg8: memref<32x16xf32, #tpu.memory_space<vmem>>) attributes {dimension_semantics = [#tpu.dimension_semantics<parallel>], iteration_bounds = array<i64: 1>, scalar_prefetch = 0 : i64, scratch_operands = 0 : i64, tpu.core_type = #tpu.core_type<tc>, window_params = [{transform_indices = @transform_0, window_bounds = array<i64: 32, 16>}, {pipeline_mode = #tpu.pipeline_mode<synchronous>, transform_indices = @transform_1, window_bounds = array<i64: 16, 2048>}, {pipeline_mode = #tpu.pipeline_mode<synchronous>, transform_indices = @transform_2, window_bounds = array<i64: 1, 2048>}, {pipeline_mode = #tpu.pipeline_mode<synchronous>, transform_indices = @transform_3, window_bounds = array<i64: 2048, 16>}, {pipeline_mode = #tpu.pipeline_mode<synchronous>, transform_indices = @transform_4, window_bounds = array<i64: 1, 16>}, {pipeline_mode = #tpu.pipeline_mode<synchronous>, transform_indices = @transform_5, window_bounds = array<i64: 1, 16>}, {pipeline_mode = #tpu.pipeline_mode<synchronous>, transform_indices = @transform_6, window_bounds = array<i64: 1, 16>}, {transform_indices = @transform_7, window_bounds = array<i64: 32, 16>}]} {
    %c0 = arith.constant 0 : index
    %c0_0 = arith.constant 0 : index
    %0 = vector.load %arg1[%c0, %c0_0] : memref<32x16xf32, #tpu.memory_space<vmem>>, vector<32x16xf32>
    %c0_1 = arith.constant 0 : index
    %c0_2 = arith.constant 0 : index
    %1 = vector.load %arg2[%c0_1, %c0_2] : memref<16x2048xf32, #tpu.memory_space<vmem>>, vector<16x2048xf32>
    %cst = arith.constant dense<0.000000e+00> : vector<32x2048xf32>
    %2 = tpu.matmul %0, %1, %cst {dimension_numbers = #tpu.dot_dimension_numbers<[1], [0], [0], [1], [0, 0, 1, 1], [], []>} : vector<32x16xf32>, vector<16x2048xf32>, vector<32x2048xf32> -> vector<32x2048xf32>
    %c0_3 = arith.constant 0 : index
    %c0_4 = arith.constant 0 : index
    %3 = vector.load %arg3[%c0_3, %c0_4] : memref<1x2048xf32, #tpu.memory_space<vmem>>, vector<1x2048xf32>
    %4 = vector.broadcast %3 : vector<1x2048xf32> to vector<32x2048xf32>
    %5 = arith.addf %2, %4 : vector<32x2048xf32>
    %cst_5 = arith.constant 0.000000e+00 : f32
    %6 = vector.broadcast %cst_5 : f32 to vector<32x2048xf32>
    %7 = arith.maximumf %5, %6 : vector<32x2048xf32>
    %c0_6 = arith.constant 0 : index
    %c0_7 = arith.constant 0 : index
    %8 = vector.load %arg4[%c0_6, %c0_7] : memref<2048x16xf32, #tpu.memory_space<vmem>>, vector<2048x16xf32>
    %cst_8 = arith.constant dense<0.000000e+00> : vector<32x16xf32>
    %9 = tpu.matmul %7, %8, %cst_8 {dimension_numbers = #tpu.dot_dimension_numbers<[1], [0], [0], [1], [0, 0, 1, 1], [], []>} : vector<32x2048xf32>, vector<2048x16xf32>, vector<32x16xf32> -> vector<32x16xf32>
    %c0_9 = arith.constant 0 : index
    %c0_10 = arith.constant 0 : index
    %10 = vector.load %arg5[%c0_9, %c0_10] : memref<1x16xf32, #tpu.memory_space<vmem>>, vector<1x16xf32>
    %11 = vector.broadcast %10 : vector<1x16xf32> to vector<32x16xf32>
    %12 = arith.addf %9, %11 : vector<32x16xf32>
    %13 = arith.addf %12, %0 : vector<32x16xf32>
    %cst_11 = arith.constant dense<0.000000e+00> : vector<32xf32>
    %14 = vector.multi_reduction <add>, %13, %cst_11 [1] : vector<32x16xf32> to vector<32xf32>
    %15 = vector.shape_cast %14 : vector<32xf32> to vector<32x1xf32>
    %cst_12 = arith.constant 1.600000e+01 : f32
    %16 = vector.broadcast %cst_12 : f32 to vector<32x1xf32>
    %17 = arith.divf %15, %16 : vector<32x1xf32>
    %18 = vector.broadcast %17 : vector<32x1xf32> to vector<32x16xf32>
    %19 = arith.subf %13, %18 : vector<32x16xf32>
    %20 = arith.mulf %19, %19 : vector<32x16xf32>
    %cst_13 = arith.constant dense<0.000000e+00> : vector<32xf32>
    %21 = vector.multi_reduction <add>, %20, %cst_13 [1] : vector<32x16xf32> to vector<32xf32>
    %22 = vector.shape_cast %21 : vector<32xf32> to vector<32x1xf32>
    %cst_14 = arith.constant 1.600000e+01 : f32
    %23 = vector.broadcast %cst_14 : f32 to vector<32x1xf32>
    %24 = arith.divf %22, %23 : vector<32x1xf32>
    %25 = vector.broadcast %17 : vector<32x1xf32> to vector<32x16xf32>
    %26 = arith.subf %13, %25 : vector<32x16xf32>
    %cst_15 = arith.constant 9.99999974E-6 : f32
    %27 = vector.broadcast %cst_15 : f32 to vector<32x1xf32>
    %28 = arith.addf %24, %27 : vector<32x1xf32>
    %29 = math.rsqrt %28 : vector<32x1xf32>
    %30 = vector.broadcast %29 : vector<32x1xf32> to vector<32x16xf32>
    %31 = arith.mulf %26, %30 : vector<32x16xf32>
    %c0_16 = arith.constant 0 : index
    %c0_17 = arith.constant 0 : index
    %32 = vector.load %arg6[%c0_16, %c0_17] : memref<1x16xf32, #tpu.memory_space<vmem>>, vector<1x16xf32>
    %33 = vector.broadcast %32 : vector<1x16xf32> to vector<32x16xf32>
    %34 = arith.mulf %31, %33 : vector<32x16xf32>
    %c0_18 = arith.constant 0 : index
    %c0_19 = arith.constant 0 : index
    %35 = vector.load %arg7[%c0_18, %c0_19] : memref<1x16xf32, #tpu.memory_space<vmem>>, vector<1x16xf32>
    %36 = vector.broadcast %35 : vector<1x16xf32> to vector<32x16xf32>
    %37 = arith.addf %34, %36 : vector<32x16xf32>
    %c0_20 = arith.constant 0 : index
    %c0_21 = arith.constant 0 : index
    %38 = vector.load %arg8[%c0_20, %c0_21] : memref<32x16xf32, #tpu.memory_space<vmem>>, vector<32x16xf32>
    tpu.vector_store %arg8[%c0_20, %c0_21], %37 {strides = array<i32>} : memref<32x16xf32, #tpu.memory_space<vmem>>, vector<32x16xf32>,
    return
  }
  func.func @transform_0(%arg0: i32) -> (i32, i32) {
    %c0_i32 = arith.constant 0 : i32
    %c0_i32_0 = arith.constant 0 : i32
    return %arg0, %c0_i32 : i32, i32
  }
  func.func @transform_1(%arg0: i32) -> (i32, i32) {
    %c0_i32 = arith.constant 0 : i32
    %c0_i32_0 = arith.constant 0 : i32
    %c0_i32_1 = arith.constant 0 : i32
    return %c0_i32, %c0_i32_0 : i32, i32
  }
  func.func @transform_2(%arg0: i32) -> (i32, i32) {
    %c0_i32 = arith.constant 0 : i32
    %c0_i32_0 = arith.constant 0 : i32
    %c0_i32_1 = arith.constant 0 : i32
    return %c0_i32, %c0_i32_0 : i32, i32
  }
  func.func @transform_3(%arg0: i32) -> (i32, i32) {
    %c0_i32 = arith.constant 0 : i32
    %c0_i32_0 = arith.constant 0 : i32
    %c0_i32_1 = arith.constant 0 : i32
    return %c0_i32, %c0_i32_0 : i32, i32
  }
  func.func @transform_4(%arg0: i32) -> (i32, i32) {
    %c0_i32 = arith.constant 0 : i32
    %c0_i32_0 = arith.constant 0 : i32
    %c0_i32_1 = arith.constant 0 : i32
    return %c0_i32, %c0_i32_0 : i32, i32
  }
  func.func @transform_5(%arg0: i32) -> (i32, i32) {
    %c0_i32 = arith.constant 0 : i32
    %c0_i32_0 = arith.constant 0 : i32
    %c0_i32_1 = arith.constant 0 : i32
    return %c0_i32, %c0_i32_0 : i32, i32
  }
  func.func @transform_6(%arg0: i32) -> (i32, i32) {
    %c0_i32 = arith.constant 0 : i32
    %c0_i32_0 = arith.constant 0 : i32
    %c0_i32_1 = arith.constant 0 : i32
    return %c0_i32, %c0_i32_0 : i32, i32
  }
  func.func @transform_7(%arg0: i32) -> (i32, i32) {
    %c0_i32 = arith.constant 0 : i32
    %c0_i32_0 = arith.constant 0 : i32
    return %arg0, %c0_i32 : i32, i32
  }
}

module attributes {stable_mosaic.version = 11 : i64} {
  func.func @_linear_kernel(%arg0: i32, %arg1: memref<32x24xf32, #tpu.memory_space<vmem>>, %arg2: memref<24x16xf32, #tpu.memory_space<vmem>>, %arg3: memref<1x16xf32, #tpu.memory_space<vmem>>, %arg4: memref<32x16xf32, #tpu.memory_space<vmem>>) attributes {dimension_semantics = [#tpu.dimension_semantics<parallel>], iteration_bounds = array<i64: 1>, scalar_prefetch = 0 : i64, scratch_operands = 0 : i64, tpu.core_type = #tpu.core_type<tc>, window_params = [{transform_indices = @transform_0, window_bounds = array<i64: 32, 24>}, {pipeline_mode = #tpu.pipeline_mode<synchronous>, transform_indices = @transform_1, window_bounds = array<i64: 24, 16>}, {pipeline_mode = #tpu.pipeline_mode<synchronous>, transform_indices = @transform_2, window_bounds = array<i64: 1, 16>}, {transform_indices = @transform_3, window_bounds = array<i64: 32, 16>}]} {
    %c0 = arith.constant 0 : index
    %c0_0 = arith.constant 0 : index
    %0 = vector.load %arg1[%c0, %c0_0] : memref<32x24xf32, #tpu.memory_space<vmem>>, vector<32x24xf32>
    %c0_1 = arith.constant 0 : index
    %c0_2 = arith.constant 0 : index
    %1 = vector.load %arg2[%c0_1, %c0_2] : memref<24x16xf32, #tpu.memory_space<vmem>>, vector<24x16xf32>
    %cst = arith.constant dense<0.000000e+00> : vector<32x16xf32>
    %2 = tpu.matmul %0, %1, %cst {dimension_numbers = #tpu.dot_dimension_numbers<[1], [0], [0], [1], [0, 0, 1, 1], [], []>} : vector<32x24xf32>, vector<24x16xf32>, vector<32x16xf32> -> vector<32x16xf32>
    %c0_3 = arith.constant 0 : index
    %c0_4 = arith.constant 0 : index
    %3 = vector.load %arg3[%c0_3, %c0_4] : memref<1x16xf32, #tpu.memory_space<vmem>>, vector<1x16xf32>
    %4 = vector.broadcast %3 : vector<1x16xf32> to vector<32x16xf32>
    %5 = arith.addf %2, %4 : vector<32x16xf32>
    %c0_5 = arith.constant 0 : index
    %c0_6 = arith.constant 0 : index
    %6 = vector.load %arg4[%c0_5, %c0_6] : memref<32x16xf32, #tpu.memory_space<vmem>>, vector<32x16xf32>
    tpu.vector_store %arg4[%c0_5, %c0_6], %5 {strides = array<i32>} : memref<32x16xf32, #tpu.memory_space<vmem>>, vector<32x16xf32>,
    return
  }
  func.func @transform_0(%arg0: i32) -> (i32, i32) {
    %c0_i32 = arith.constant 0 : i32
    %c0_i32_0 = arith.constant 0 : i32
    return %arg0, %c0_i32 : i32, i32
  }
  func.func @transform_1(%arg0: i32) -> (i32, i32) {
    %c0_i32 = arith.constant 0 : i32
    %c0_i32_0 = arith.constant 0 : i32
    %c0_i32_1 = arith.constant 0 : i32
    return %c0_i32, %c0_i32_0 : i32, i32
  }
  func.func @transform_2(%arg0: i32) -> (i32, i32) {
    %c0_i32 = arith.constant 0 : i32
    %c0_i32_0 = arith.constant 0 : i32
    %c0_i32_1 = arith.constant 0 : i32
    return %c0_i32, %c0_i32_0 : i32, i32
  }
  func.func @transform_3(%arg0: i32) -> (i32, i32) {
    %c0_i32 = arith.constant 0 : i32
    %c0_i32_0 = arith.constant 0 : i32
    return %arg0, %c0_i32 : i32, i32
  }
}

module attributes {stable_mosaic.version = 11 : i64} {
  func.func @_contact_head_kernel(%arg0: i32, %arg1: i32, %arg2: i32, %arg3: memref<1x16x16xf32, #tpu.memory_space<vmem>>, %arg4: memref<1x16x16xf32, #tpu.memory_space<vmem>>, %arg5: memref<1x8xf32, #tpu.memory_space<vmem>>, %arg6: memref<8x8xf32, #tpu.memory_space<vmem>>, %arg7: memref<1x8xf32, #tpu.memory_space<vmem>>, %arg8: memref<1x8xf32, #tpu.memory_space<vmem>>, %arg9: memref<1x1xf32, #tpu.memory_space<smem>>, %arg10: memref<1x16x16xf32, #tpu.memory_space<vmem>>) attributes {dimension_semantics = [#tpu.dimension_semantics<parallel>, #tpu.dimension_semantics<parallel>, #tpu.dimension_semantics<parallel>], iteration_bounds = array<i64: 2, 1, 1>, scalar_prefetch = 0 : i64, scratch_operands = 0 : i64, tpu.core_type = #tpu.core_type<tc>, window_params = [{transform_indices = @transform_0, window_bounds = array<i64: 1, 16, 16>}, {transform_indices = @transform_1, window_bounds = array<i64: 1, 16, 16>}, {pipeline_mode = #tpu.pipeline_mode<synchronous>, transform_indices = @transform_2, window_bounds = array<i64: 1, 8>}, {pipeline_mode = #tpu.pipeline_mode<synchronous>, transform_indices = @transform_3, window_bounds = array<i64: 8, 8>}, {pipeline_mode = #tpu.pipeline_mode<synchronous>, transform_indices = @transform_4, window_bounds = array<i64: 1, 8>}, {pipeline_mode = #tpu.pipeline_mode<synchronous>, transform_indices = @transform_5, window_bounds = array<i64: 1, 8>}, {transform_indices = @transform_6, window_bounds = array<i64: 1, 1>}, {transform_indices = @transform_7, window_bounds = array<i64: 1, 16, 16>}]} {
    %c0 = arith.constant 0 : index
    %c0_0 = arith.constant 0 : index
    %c0_1 = arith.constant 0 : index
    %0 = vector.load %arg3[%c0, %c0_0, %c0_1] : memref<1x16x16xf32, #tpu.memory_space<vmem>>, vector<1x16x16xf32>
    %1 = vector.shape_cast %0 : vector<1x16x16xf32> to vector<16x16xf32>
    %c0_2 = arith.constant 0 : index
    %c0_3 = arith.constant 0 : index
    %c0_4 = arith.constant 0 : index
    %2 = vector.load %arg4[%c0_2, %c0_3, %c0_4] : memref<1x16x16xf32, #tpu.memory_space<vmem>>, vector<1x16x16xf32>
    %3 = vector.shape_cast %2 : vector<1x16x16xf32> to vector<16x16xf32>
    %4 = vector.extract_strided_slice %1 {offsets = [0, 0], sizes = [16, 8], strides = [1, 1]} : vector<16x16xf32> to vector<16x8xf32>
    %5 = vector.extract_strided_slice %1 {offsets = [0, 8], sizes = [16, 8], strides = [1, 1]} : vector<16x16xf32> to vector<16x8xf32>
    %6 = vector.extract_strided_slice %3 {offsets = [0, 0], sizes = [16, 8], strides = [1, 1]} : vector<16x16xf32> to vector<16x8xf32>
    %7 = vector.extract_strided_slice %3 {offsets = [0, 8], sizes = [16, 8], strides = [1, 1]} : vector<16x16xf32> to vector<16x8xf32>
    %c16_i32 = arith.constant 16 : i32
    %8 = arith.muli %arg1, %c16_i32 : i32
    %9 = tpu.iota {dimensions = array<i32: 0>} : vector<16x16x1xi32>
    %10 = vector.broadcast %8 : i32 to vector<16x16x1xi32>
    %11 = arith.addi %10, %9 : vector<16x16x1xi32>
    %c16_i32_5 = arith.constant 16 : i32
    %12 = arith.muli %arg2, %c16_i32_5 : i32
    %13 = tpu.iota {dimensions = array<i32: 1>} : vector<16x16x1xi32>
    %14 = vector.broadcast %12 : i32 to vector<16x16x1xi32>
    %15 = arith.addi %14, %13 : vector<16x16x1xi32>
    %16 = arith.cmpi sle, %11, %15 : vector<16x16x1xi32>
    %17 = vector.shape_cast %4 : vector<16x8xf32> to vector<16x1x8xf32>
    %18 = vector.shape_cast %7 : vector<16x8xf32> to vector<1x16x8xf32>
    %19 = vector.broadcast %17 : vector<16x1x8xf32> to vector<16x16x8xf32>
    %20 = vector.broadcast %18 : vector<1x16x8xf32> to vector<16x16x8xf32>
    %21 = arith.addf %19, %20 : vector<16x16x8xf32>
    %22 = vector.shape_cast %6 : vector<16x8xf32> to vector<1x16x8xf32>
    %23 = vector.shape_cast %5 : vector<16x8xf32> to vector<16x1x8xf32>
    %24 = vector.broadcast %22 : vector<1x16x8xf32> to vector<16x16x8xf32>
    %25 = vector.broadcast %23 : vector<16x1x8xf32> to vector<16x16x8xf32>
    %26 = arith.addf %24, %25 : vector<16x16x8xf32>
    %27 = vector.shape_cast %16 : vector<16x16x1xi1> to vector<16x16x1xi1>
    %28 = vector.broadcast %27 : vector<16x16x1xi1> to vector<16x16x8xi1>
    %29 = arith.select %28, %21, %26 : vector<16x16x8xi1>, vector<16x16x8xf32>
    %c0_6 = arith.constant 0 : index
    %c0_7 = arith.constant 0 : index
    %30 = vector.load %arg5[%c0_6, %c0_7] : memref<1x8xf32, #tpu.memory_space<vmem>>, vector<1x8xf32>
    %31 = vector.shape_cast %30 : vector<1x8xf32> to vector<1x1x8xf32>
    %32 = vector.broadcast %31 : vector<1x1x8xf32> to vector<16x16x8xf32>
    %33 = arith.addf %29, %32 : vector<16x16x8xf32>
    %cst = arith.constant 0.000000e+00 : f32
    %34 = vector.broadcast %cst : f32 to vector<16x16x8xf32>
    %35 = arith.maximumf %33, %34 : vector<16x16x8xf32>
    %36 = vector.shape_cast %35 : vector<16x16x8xf32> to vector<256x8xf32>
    %c0_8 = arith.constant 0 : index
    %c0_9 = arith.constant 0 : index
    %37 = vector.load %arg6[%c0_8, %c0_9] : memref<8x8xf32, #tpu.memory_space<vmem>>, vector<8x8xf32>
    %cst_10 = arith.constant dense<0.000000e+00> : vector<256x8xf32>
    %38 = tpu.matmul %36, %37, %cst_10 {dimension_numbers = #tpu.dot_dimension_numbers<[1], [0], [0], [1], [0, 0, 1, 1], [], []>} : vector<256x8xf32>, vector<8x8xf32>, vector<256x8xf32> -> vector<256x8xf32>
    %c0_11 = arith.constant 0 : index
    %c0_12 = arith.constant 0 : index
    %39 = vector.load %arg7[%c0_11, %c0_12] : memref<1x8xf32, #tpu.memory_space<vmem>>, vector<1x8xf32>
    %40 = vector.broadcast %39 : vector<1x8xf32> to vector<256x8xf32>
    %41 = arith.addf %38, %40 : vector<256x8xf32>
    %cst_13 = arith.constant 0.000000e+00 : f32
    %42 = vector.broadcast %cst_13 : f32 to vector<256x8xf32>
    %43 = arith.maximumf %41, %42 : vector<256x8xf32>
    %44 = vector.shape_cast %43 : vector<256x8xf32> to vector<16x16x8xf32>
    %c0_14 = arith.constant 0 : index
    %c0_15 = arith.constant 0 : index
    %45 = vector.load %arg8[%c0_14, %c0_15] : memref<1x8xf32, #tpu.memory_space<vmem>>, vector<1x8xf32>
    %46 = vector.shape_cast %45 : vector<1x8xf32> to vector<1x1x8xf32>
    %47 = vector.broadcast %46 : vector<1x1x8xf32> to vector<16x16x8xf32>
    %48 = arith.mulf %44, %47 : vector<16x16x8xf32>
    %cst_16 = arith.constant dense<0.000000e+00> : vector<16x16xf32>
    %49 = vector.multi_reduction <add>, %48, %cst_16 [2] : vector<16x16x8xf32> to vector<16x16xf32>
    %c0_17 = arith.constant 0 : index
    %c0_18 = arith.constant 0 : index
    %50 = memref.load %arg9[%c0_17, %c0_18] : memref<1x1xf32, #tpu.memory_space<smem>>
    %51 = vector.broadcast %50 : f32 to vector<16x16xf32>
    %52 = arith.addf %49, %51 : vector<16x16xf32>
    %c0_19 = arith.constant 0 : index
    %c0_20 = arith.constant 0 : index
    %c0_21 = arith.constant 0 : index
    %53 = vector.load %arg10[%c0_19, %c0_20, %c0_21] : memref<1x16x16xf32, #tpu.memory_space<vmem>>, vector<1x16x16xf32>
    %54 = vector.shape_cast %53 : vector<1x16x16xf32> to vector<16x16xf32>
    %55 = vector.shape_cast %52 : vector<16x16xf32> to vector<1x16x16xf32>
    tpu.vector_store %arg10[%c0_19, %c0_20, %c0_21], %55 {strides = array<i32>} : memref<1x16x16xf32, #tpu.memory_space<vmem>>, vector<1x16x16xf32>,
    return
  }
  func.func @transform_0(%arg0: i32, %arg1: i32, %arg2: i32) -> (i32, i32, i32) {
    %c0_i32 = arith.constant 0 : i32
    %c0_i32_0 = arith.constant 0 : i32
    return %arg0, %arg1, %c0_i32 : i32, i32, i32
  }
  func.func @transform_1(%arg0: i32, %arg1: i32, %arg2: i32) -> (i32, i32, i32) {
    %c0_i32 = arith.constant 0 : i32
    %c0_i32_0 = arith.constant 0 : i32
    return %arg0, %arg2, %c0_i32 : i32, i32, i32
  }
  func.func @transform_2(%arg0: i32, %arg1: i32, %arg2: i32) -> (i32, i32) {
    %c0_i32 = arith.constant 0 : i32
    %c0_i32_0 = arith.constant 0 : i32
    %c0_i32_1 = arith.constant 0 : i32
    return %c0_i32, %c0_i32_0 : i32, i32
  }
  func.func @transform_3(%arg0: i32, %arg1: i32, %arg2: i32) -> (i32, i32) {
    %c0_i32 = arith.constant 0 : i32
    %c0_i32_0 = arith.constant 0 : i32
    %c0_i32_1 = arith.constant 0 : i32
    return %c0_i32, %c0_i32_0 : i32, i32
  }
  func.func @transform_4(%arg0: i32, %arg1: i32, %arg2: i32) -> (i32, i32) {
    %c0_i32 = arith.constant 0 : i32
    %c0_i32_0 = arith.constant 0 : i32
    %c0_i32_1 = arith.constant 0 : i32
    return %c0_i32, %c0_i32_0 : i32, i32
  }
  func.func @transform_5(%arg0: i32, %arg1: i32, %arg2: i32) -> (i32, i32) {
    %c0_i32 = arith.constant 0 : i32
    %c0_i32_0 = arith.constant 0 : i32
    %c0_i32_1 = arith.constant 0 : i32
    return %c0_i32, %c0_i32_0 : i32, i32
  }
  func.func @transform_6(%arg0: i32, %arg1: i32, %arg2: i32) -> (i32, i32) {
    %c0_i32 = arith.constant 0 : i32
    %c0_i32_0 = arith.constant 0 : i32
    %c0_i32_1 = arith.constant 0 : i32
    return %c0_i32, %c0_i32_0 : i32, i32
  }
  func.func @transform_7(%arg0: i32, %arg1: i32, %arg2: i32) -> (i32, i32, i32) {
    %c0_i32 = arith.constant 0 : i32
    return %arg0, %arg1, %arg2 : i32, i32, i32
  }
}

</mosaic_0001>

<llo_original>
// kernel: contact_attention_simple_forward.16
$region0: #{contact_attention_simple_forward.16}
  #allocation0 [shape = 'u32[]', space=smem, size = 0x4, offset = 0x4, fixed_abs, tag = 'smem constant byte address 0x4 - core index']
  #allocation1 [shape = 'u32[144,128]{1,0:T(1,128)}', space=vmem, size = 0x12000, scoped, tag = 'internal scratch']
  %s0 = inlined_call_operand.vmem [shape: f32[32,16], index: 0, kind: input, shape index: {}]
  %s1 = inlined_call_operand.vmem [shape: f32[16,48], index: 1, kind: input, shape index: {}]
  %s2 = inlined_call_operand.vmem [shape: f32[1,48], index: 2, kind: input, shape index: {}]
  %s3 = inlined_call_operand.vmem [shape: f32[32,48], index: 3, kind: output, shape index: {}]
  %s4 = sld [smem:[#allocation0]]
  $region22: #{contact_attention_simple_forward.16} parent=0
    _
  %s6 = ssub.s32 1, %s4
  %s7 = scalar_select 0, %s6, %s4
  // Predicated region
  $region2: #{contact_attention_simple_forward.16} parent=0 // pred_check
    _
  $region3: #{contact_attention_simple_forward.16} parent=0 // pred_check_branch
    %9 = sbr.rel (0) target = $region5
  $region4: #{contact_attention_simple_forward.16} parent=0 // pred_region
    _
  $region5: #{contact_attention_simple_forward.16} parent=0 // pred_fallthru
    _
  // Predicated region
  $region6: #{contact_attention_simple_forward.16} parent=0 // pred_check
    _
  $region7: #{contact_attention_simple_forward.16} parent=0 // pred_check_branch
    %11 = sbr.rel (0) target = $region9
  $region8: #{contact_attention_simple_forward.16} parent=0 // pred_region
    _
  $region9: #{contact_attention_simple_forward.16} parent=0 // pred_fallthru
    _
  // Predicated region
  $region10: #{contact_attention_simple_forward.16} parent=0 // pred_check
    _
  $region11: #{contact_attention_simple_forward.16} parent=0 // pred_check_branch
    %13 = sbr.rel (0) target = $region13
  $region12: #{contact_attention_simple_forward.16} parent=0 // pred_region
    _
  $region13: #{contact_attention_simple_forward.16} parent=0 // pred_fallthru
    _
  %v14 = vld [vmem:[%s0] sm:$0xff]
  %v15 = vld [vmem:[%s0 + $0x8] sm:$0xff]
  %v16 = vld [vmem:[%s0 + $0x10] sm:$0xff]
  %v17 = vld [vmem:[%s0 + $0x18] sm:$0xff]
  %v18 = vld [vmem:[%s1] sm:$0xff]
  %v19 = vld [vmem:[%s1 + $0x8] sm:$0xff]
  %v20 = vld [vmem:[%s2] sm:$0x1]
  %v22 = vlaneseq
  %v23 = vshrl.u32 %v22, 7
  %v24 = vsub.s32 0, %v23
  %v25 = vrot.slane %v20, %v24
  %vm27 = vcmask 130048
  %v29 = vsel %vm27, %v14, 0
  %v32 = vsel %vm27, %v15, 0
  %v35 = vsel %vm27, %v16, 0
  %v38 = vsel %vm27, %v17, 0
  %40 = vmatprep.subr.mxu0 0.0
  %41 = vmatpush1.msra.mxu0 0.0
  %42 = vmatprep.subr.mxu0 0.0
  %43 = vmatpush1.msra.mxu0 0.0
  %44 = vmatprep.subr.mxu0 0.0
  %45 = vmatpush1.msra.mxu0 0.0
  %46 = vmatprep.subr.mxu0 0.0
  %47 = vmatpush1.msra.mxu0 0.0
  %48 = vmatprep.subr.mxu0 0.0
  %49 = vmatpush1.msra.mxu0 0.0
  %50 = vmatprep.subr.mxu0 0.0
  %51 = vmatpush1.msra.mxu0 0.0
  %52 = vmatprep.subr.mxu0 0.0
  %53 = vmatpush1.msra.mxu0 0.0
  %54 = vmatprep.subr.mxu0 0.0
  %55 = vmatpush1.msra.mxu0 0.0
  %56 = vmatprep.subr.mxu0 0.0
  %57 = vmatpush1.msra.mxu0 0.0
  %58 = vmatprep.subr.mxu0 0.0
  %59 = vmatpush1.msra.mxu0 0.0
  %60 = vmatprep.subr.mxu0 0.0
  %61 = vmatpush1.msra.mxu0 0.0
  %62 = vmatprep.subr.mxu0 0.0
  %63 = vmatpush1.msra.mxu0 0.0
  %64 = vmatprep.subr.mxu0 0.0
  %65 = vmatpush1.msra.mxu0 0.0
  %66 = vmatprep.subr.mxu0 0.0
  %67 = vmatpush1.msra.mxu0 0.0
  %68 = vmatprep.subr.mxu0 0.0
  %69 = vmatpush1.msra.mxu0 %v19
  %70 = vmatprep.subr.mxu0 0.0
  %71 = vmatpush1.msra.mxu0 %v18
  %72 = vmatprep.subr.mxu0 0.0
  %73 = vmatpush2.msra.mxu0 0.0
  %74 = vmatprep.subr.mxu0 0.0
  %75 = vmatpush2.msra.mxu0 0.0
  %76 = vmatprep.subr.mxu0 0.0
  %77 = vmatpush2.msra.mxu0 0.0
  %78 = vmatprep.subr.mxu0 0.0
  %79 = vmatpush2.msra.mxu0 0.0
  %80 = vmatprep.subr.mxu0 0.0
  %81 = vmatpush2.msra.mxu0 0.0
  %82 = vmatprep.subr.mxu0 0.0
  %83 = vmatpush2.msra.mxu0 0.0
  %84 = vmatprep.subr.mxu0 0.0
  %85 = vmatpush2.msra.mxu0 0.0
  %86 = vmatprep.subr.mxu0 0.0
  %87 = vmatpush2.msra.mxu0 0.0
  %88 = vmatprep.subr.mxu0 0.0
  %89 = vmatpush2.msra.mxu0 0.0
  %90 = vmatprep.subr.mxu0 0.0
  %91 = vmatpush2.msra.mxu0 0.0
  %92 = vmatprep.subr.mxu0 0.0
  %93 = vmatpush2.msra.mxu0 0.0
  %94 = vmatprep.subr.mxu0 0.0
  %95 = vmatpush2.msra.mxu0 0.0
  %96 = vmatprep.subr.mxu0 0.0
  %97 = vmatpush2.msra.mxu0 0.0
  %98 = vmatprep.subr.mxu0 0.0
  %99 = vmatpush2.msra.mxu0 0.0
  %100 = vmatprep.subr.mxu0 0.0
  %101 = vmatpush2.msra.mxu0 0.0
  %102 = vmatprep.subr.mxu0 0.0
  %103 = vmatpush2.msra.mxu0 0.0
  %104 = vmatprep.mubr.f32.mxu0 0.0
  %105 = vmatmul.mubr.f32.gmra.mxu0 %v29
  %v106 = vpop.f32.mrf.mxu0
  %v107 = vadd.f32 %v25, %v106
  %v108 = vpop.f32.mrf.mxu0
  %109 = vmatprep.mubr.f32.mxu0 0.0
  %110 = vmatmul.mubr.f32.gmra.mxu0 %v32
  %v111 = vpop.f32.mrf.mxu0
  %v112 = vadd.f32 %v25, %v111
  %v113 = vpop.f32.mrf.mxu0
  %114 = vmatprep.mubr.f32.mxu0 0.0
  %115 = vmatmul.mubr.f32.gmra.mxu0 %v35
  %v116 = vpop.f32.mrf.mxu0
  %v117 = vadd.f32 %v25, %v116
  %v118 = vpop.f32.mrf.mxu0
  %119 = vmatprep.mubr.f32.mxu0 0.0
  %120 = vmatmul.mubr.f32.gmra.mxu0 %v38
  %v121 = vpop.f32.mrf.mxu0
  %v122 = vadd.f32 %v25, %v121
  %v123 = vpop.f32.mrf.mxu0
  %124 = vdwg.mxu0
  %vm125 = vcmask 392192
  %126 = vst.msk [vmem:[%s3] sm:$0xff] %vm125, %v107
  %127 = vst.msk [vmem:[%s3 + $0x8] sm:$0xff] %vm125, %v112
  %128 = vst.msk [vmem:[%s3 + $0x10] sm:$0xff] %vm125, %v117
  %129 = vst.msk [vmem:[%s3 + $0x18] sm:$0xff] %vm125, %v122
  // Predicated region
  $region14: #{contact_attention_simple_forward.16} parent=0 // pred_check
    _
  $region15: #{contact_attention_simple_forward.16} parent=0 // pred_check_branch
    %131 = sbr.rel (0) target = $region17
  $region16: #{contact_attention_simple_forward.16} parent=0 // pred_region
    _
  $region17: #{contact_attention_simple_forward.16} parent=0 // pred_fallthru
    _
  // Predicated region
  $region18: #{contact_attention_simple_forward.16} parent=0 // pred_check
    _
  $region19: #{contact_attention_simple_forward.16} parent=0 // pred_check_branch
    %133 = sbr.rel (0) target = $region21
  $region20: #{contact_attention_simple_forward.16} parent=0 // pred_region
    _
  $region21: #{contact_attention_simple_forward.16} parent=0 // pred_fallthru
    _

// kernel: contact_attention_simple_forward.15
$region0: #{contact_attention_simple_forward.15}
  #allocation0 [shape = 'u32[]', space=smem, size = 0x4, offset = 0x4, fixed_abs, tag = 'smem constant byte address 0x4 - core index']
  #allocation1 [shape = 'u32[144,128]{1,0:T(1,128)}', space=vmem, size = 0x12000, scoped, tag = 'internal scratch']
  %s0 = inlined_call_operand.vmem [shape: f32[2,32,4], index: 0, kind: input, shape index: {}]
  %s1 = inlined_call_operand.vmem [shape: f32[36,8], index: 1, kind: input, shape index: {}]
  %s2 = inlined_call_operand.vmem [shape: f32[1,8], index: 2, kind: input, shape index: {}]
  %s3 = inlined_call_operand.vmem [shape: f32[2,16,8], index: 3, kind: output, shape index: {}]
  %s4 = sld [smem:[#allocation0]]
  $region45: #{contact_attention_simple_forward.15} parent=0
    _
  %s6 = ssub.s32 1, %s4
  %s7 = scalar_select 0, %s6, %s4
  loop: start=0, step=1, limit=4
  $region2: #{contact_attention_simple_forward.15} parent=0 // loop_pre_header
    _
  $region3: #{contact_attention_simple_forward.15} parent=0 // loop_header
    %s9 = sphi 0, %s13
    %p10 = scmp.ge.s32.totalorder %s9, 4
    %s19 = sphi 0, %s21
    %s22 = sphi 0, %s19
    %s23 = sphi 0, %s22
    %s39 = sphi 0, %s23
    %s43 = sphi 0, %s43
    %s45 = sphi 0, %s43
    %s46 = sphi 0, %s45
    %s60 = sphi 0, %s46
    %s64 = sphi 0, %s64
    %s66 = sphi 0, %s64
    %s67 = sphi 0, %s66
    %s81 = sphi 0, %s67
    %s87 = sphi 0, %s89
    %s90 = sphi 0, %s87
    %s91 = sphi 0, %s90
    %s107 = sphi 0, %s91
  $region4: #{contact_attention_simple_forward.15} parent=0 // loop_header_branch
    %12 = sbr.rel (%p10) target = $region8
  $region5: #{contact_attention_simple_forward.15} parent=0 // loop_body
    %s14 = ssub.s32 %s9, 1
    %s15 = ssub.s32 %s9, 2
    %s16 = sadd.s32 %s9, 1
    %s17 = ssub.s32 %s9, %s16
    %p18 = scmp.eq.s32.totalorder %s17, 0
    %s20 = sadd.s32 %s19, 1
    %s21 = scalar_select %p18, %s19, %s20
    %p24 = pneg %p18
    %p25 = scmp.eq.s32.totalorder %s9, 1
    %p26 = por %p24, %p25
    %p27 = scmp.ne.s32.totalorder %s19, %s22
    %p28 = scmp.eq.s32.totalorder %s9, 0
    %p29 = por %p27, %p28
    %p30 = scmp.ne.s32.totalorder %s19, %s22
    %p31 = scmp.eq.s32.totalorder %s14, 1
    %p32 = por %p30, %p31
    %p33 = scmp.ne.s32.totalorder %s22, %s23
    %p34 = scmp.eq.s32.totalorder %s14, 0
    %p35 = por %p33, %p34
    %p36 = scmp.ne.s32.totalorder %s22, %s23
    %p37 = scmp.eq.s32.totalorder %s15, 1
    %p38 = por %p36, %p37
    %p40 = scmp.ne.s32.totalorder %s23, %s39
    %p41 = scmp.eq.s32.totalorder %s15, 0
    %p42 = por %p40, %p41
    %s44 = sadd.s32 %s43, 1
    %p47 = scmp.eq.s32.totalorder %s9, 1
    %p48 = scmp.ne.s32.totalorder %s43, %s45
    %p49 = scmp.eq.s32.totalorder %s9, 0
    %p50 = por %p48, %p49
    %p51 = scmp.ne.s32.totalorder %s43, %s45
    %p52 = scmp.eq.s32.totalorder %s14, 1
    %p53 = por %p51, %p52
    %p54 = scmp.ne.s32.totalorder %s45, %s46
    %p55 = scmp.eq.s32.totalorder %s14, 0
    %p56 = por %p54, %p55
    %p57 = scmp.ne.s32.totalorder %s45, %s46
    %p58 = scmp.eq.s32.totalorder %s15, 1
    %p59 = por %p57, %p58
    %p61 = scmp.ne.s32.totalorder %s46, %s60
    %p62 = scmp.eq.s32.totalorder %s15, 0
    %p63 = por %p61, %p62
    %s65 = sadd.s32 %s64, 1
    %p68 = scmp.eq.s32.totalorder %s9, 1
    %p69 = scmp.ne.s32.totalorder %s64, %s66
    %p70 = scmp.eq.s32.totalorder %s9, 0
    %p71 = por %p69, %p70
    %p72 = scmp.ne.s32.totalorder %s64, %s66
    %p73 = scmp.eq.s32.totalorder %s14, 1
    %p74 = por %p72, %p73
    %p75 = scmp.ne.s32.totalorder %s66, %s67
    %p76 = scmp.eq.s32.totalorder %s14, 0
    %p77 = por %p75, %p76
    %p78 = scmp.ne.s32.totalorder %s66, %s67
    %p79 = scmp.eq.s32.totalorder %s15, 1
    %p80 = por %p78, %p79
    %p82 = scmp.ne.s32.totalorder %s67, %s81
    %p83 = scmp.eq.s32.totalorder %s15, 0
    %p84 = por %p82, %p83
    %s85 = ssub.s32 %s9, %s16
    %p86 = scmp.eq.s32.totalorder %s85, 0
    %s88 = sadd.s32 %s87, 1
    %s89 = scalar_select %p86, %s87, %s88
    %p92 = pneg %p86
    %p93 = scmp.eq.s32.totalorder %s9, 1
    %p94 = por %p92, %p93
    %p95 = scmp.ne.s32.totalorder %s87, %s90
    %p96 = scmp.eq.s32.totalorder %s9, 0
    %p97 = por %p95, %p96
    %p98 = scmp.ne.s32.totalorder %s87, %s90
    %p99 = scmp.eq.s32.totalorder %s14, 1
    %p100 = por %p98, %p99
    %p101 = scmp.ne.s32.totalorder %s90, %s91
    %p102 = scmp.eq.s32.totalorder %s14, 0
    %p103 = por %p101, %p102
    %p104 = scmp.ne.s32.totalorder %s90, %s91
    %p105 = scmp.eq.s32.totalorder %s15, 1
    %p106 = por %p104, %p105
    %p108 = scmp.ne.s32.totalorder %s91, %s107
    %p109 = scmp.eq.s32.totalorder %s15, 0
    %p110 = por %p108, %p109
    %p111 = scmp.le.s32.totalorder 1, %s9
    %p112 = scmp.lt.s32.totalorder %s9, 3
    %p113 = pnand %p111, %p112
    %p114 = pneg %p113
    // Predicated region
    $region9: #{contact_attention_simple_forward.15} parent=5 // pred_check
      _
    $region10: #{contact_attention_simple_forward.15} parent=5 // pred_check_branch
      %116 = sbr.rel (%p113) target = $region12
    $region11: #{contact_attention_simple_forward.15} parent=5 // pred_region
      %s117 = ssub.s32 %s9, 1
      // Predicated region
      $region13: #{contact_attention_simple_forward.15} parent=11 // pred_check
        %p118 = pneg %p56
      $region14: #{contact_attention_simple_forward.15} parent=11 // pred_check_branch
        %120 = sbr.rel (%p118) target = $region16
      $region15: #{contact_attention_simple_forward.15} parent=11 // pred_region
        _
      $region16: #{contact_attention_simple_forward.15} parent=11 // pred_fallthru
        _
      // Predicated region
      $region17: #{contact_attention_simple_forward.15} parent=11 // pred_check
        %p121 = pneg %p77
      $region18: #{contact_attention_simple_forward.15} parent=11 // pred_check_branch
        %123 = sbr.rel (%p121) target = $region20
      $region19: #{contact_attention_simple_forward.15} parent=11 // pred_region
        _
      $region20: #{contact_attention_simple_forward.15} parent=11 // pred_fallthru
        _
    $region12: #{contact_attention_simple_forward.15} parent=5 // pred_fallthru
      _
    %p124 = scmp.lt.s32.totalorder %s9, 2
    // Predicated region
    $region21: #{contact_attention_simple_forward.15} parent=5 // pred_check
      %p125 = pneg %p124
    $region22: #{contact_attention_simple_forward.15} parent=5 // pred_check_branch
      %127 = sbr.rel (%p125) target = $region24
    $region23: #{contact_attention_simple_forward.15} parent=5 // pred_region
      // Predicated region
      $region25: #{contact_attention_simple_forward.15} parent=23 // pred_check
        %p128 = pneg %p29
      $region26: #{contact_attention_simple_forward.15} parent=23 // pred_check_branch
        %130 = sbr.rel (%p128) target = $region28
      $region27: #{contact_attention_simple_forward.15} parent=23 // pred_region
        %p131 = scmp.lt.s32.totalorder %s9, 1
        %s132 = scalar_select %p131, %s9, 1
        %s133 = smul.addr %s132, 4
        %s134 = smul.addr %s133, 8
        %s135 = scalar_lea.vmem %s0, %s134
      $region28: #{contact_attention_simple_forward.15} parent=23 // pred_fallthru
        _
    $region24: #{contact_attention_simple_forward.15} parent=5 // pred_fallthru
      _
    %p136 = scmp.le.s32.totalorder 1, %s9
    %p137 = scmp.lt.s32.totalorder %s9, 3
    %p138 = pnand %p136, %p137
    %p139 = pneg %p138
    // Predicated region
    $region29: #{contact_attention_simple_forward.15} parent=5 // pred_check
      _
    $region30: #{contact_attention_simple_forward.15} parent=5 // pred_check_branch
      %141 = sbr.rel (%p138) target = $region32
    $region31: #{contact_attention_simple_forward.15} parent=5 // pred_region
      %s142 = ssub.s32 %s9, 1
      %p143 = scmp.lt.s32.totalorder %s14, 1
      %s144 = scalar_select %p143, %s14, 1
      %s145 = smul.addr %s144, 4
      %s146 = smul.addr %s145, 8
      %s147 = scalar_lea.vmem %s0, %s146
      %p148 = pneg %p35
      %p149 = pneg %p32
      %p150 = pneg %p56
      %p151 = pneg %p53
      %p152 = pneg %p77
      %p153 = pneg %p74
      %p154 = pneg %p103
      %p155 = pneg %p100
      %p156 = scmp.lt.s32.totalorder %s14, 1
      %s157 = scalar_select %p156, %s14, 1
      %s158 = smul.addr %s157, 2
      %s159 = smul.addr %s158, 8
      %s160 = scalar_lea.vmem %s3, %s159
      %p161 = scmp.lt.s32.totalorder %s14, 1
      %s162 = scalar_select %p161, %s14, 1
      %s163 = smul.addr %s162, 4
      %s164 = smul.addr %s163, 8
      %s165 = scalar_lea.vmem %s0, %s164
      %p166 = scmp.lt.s32.totalorder %s14, 1
      %s167 = scalar_select %p166, %s14, 1
      %s168 = smul.addr %s167, 2
      %s169 = smul.addr %s168, 8
      %s170 = scalar_lea.vmem %s3, %s169
      %v171 = vld [vmem:[%s165] sm:$0xff]
      %v172 = vld [vmem:[%s165 + $0x8] sm:$0xff]
      %v173 = vld [vmem:[%s165 + $0x2] sm:$0xff]
      %v174 = vld [vmem:[%s165 + $0xa] sm:$0xff]
      %v175 = vld [vmem:[%s165 + $0x4] sm:$0xff]
      %v176 = vld [vmem:[%s165 + $0xc] sm:$0xff]
      %v177 = vld [vmem:[%s165 + $0x6] sm:$0xff]
      %v178 = vld [vmem:[%s165 + $0xe] sm:$0xff]
      %v179 = vld [vmem:[%s165 + $0x10] sm:$0xff]
      %v180 = vld [vmem:[%s165 + $0x12] sm:$0xff]
      %v181 = vld [vmem:[%s165 + $0x14] sm:$0xff]
      %v182 = vld [vmem:[%s165 + $0x16] sm:$0xff]
      %v183 = vld [vmem:[%s165 + $0x18] sm:$0xff]
      %186 = vrot.lane.b32.xlu0 %v173, 4
      %v187 = vpop.permute.xlu0 %186
      %188 = vrot.lane.b32.xlu0 %v174, 4
      %v189 = vpop.permute.xlu0 %188
      %194 = vrot.lane.b32.xlu0 %v175, 8
      %v195 = vpop.permute.xlu0 %194
      %196 = vrot.lane.b32.xlu0 %v176, 8
      %v197 = vpop.permute.xlu0 %196
      %202 = vrot.lane.b32.xlu0 %v177, 12
      %v203 = vpop.permute.xlu0 %202
      %204 = vrot.lane.b32.xlu0 %v178, 12
      %v205 = vpop.permute.xlu0 %204
      %210 = vrot.lane.b32.xlu0 %v172, 16
      %v211 = vpop.permute.xlu0 %210
      %212 = vrot.lane.b32.xlu0 %v179, 16
      %v213 = vpop.permute.xlu0 %212
      %217 = vrot.lane.b32.xlu0 %v174, 20
      %v218 = vpop.permute.xlu0 %217
      %219 = vrot.lane.b32.xlu0 %v180, 20
      %v220 = vpop.permute.xlu0 %219
      %224 = vrot.lane.b32.xlu0 %v176, 24
      %v225 = vpop.permute.xlu0 %224
      %226 = vrot.lane.b32.xlu0 %v181, 24
      %v227 = vpop.permute.xlu0 %226
      %231 = vrot.lane.b32.xlu0 %v178, 28
      %v232 = vpop.permute.xlu0 %231
      %233 = vrot.lane.b32.xlu0 %v182, 28
      %v234 = vpop.permute.xlu0 %233
      %238 = vrot.lane.b32.xlu0 %v179, 32
      %v239 = vpop.permute.xlu0 %238
      %240 = vrot.lane.b32.xlu0 %v183, 32
      %v241 = vpop.permute.xlu0 %240
      %vm244 = vcmask 31744
      %v245 = vsel %vm244, %v171, %v187
      %v246 = vsel %vm244, %v172, %v189
      %vm247 = vcmask 64512
      %v248 = vsel %vm247, %v245, %v195
      %v249 = vsel %vm247, %v246, %v197
      %vm250 = vcmask 97280
      %v251 = vsel %vm250, %v248, %v203
      %v252 = vsel %vm250, %v249, %v205
      %vm253 = vcmask 130048
      %v254 = vsel %vm253, %v251, %v211
      %v255 = vsel %vm253, %v252, %v213
      %vm256 = vcmask 162816
      %v257 = vsel %vm256, %v254, %v218
      %v258 = vsel %vm256, %v255, %v220
      %vm259 = vcmask 195584
      %v260 = vsel %vm259, %v257, %v225
      %v261 = vsel %vm259, %v258, %v227
      %vm262 = vcmask 228352
      %v263 = vsel %vm262, %v260, %v232
      %v264 = vsel %vm262, %v261, %v234
      %vm265 = vcmask 261120
      %v266 = vsel %vm265, %v263, %v239
      %v267 = vsel %vm265, %v264, %v241
      %v268 = vld [vmem:[%s1] sm:$0xff]
      %v269 = vld [vmem:[%s1 + $0x8] sm:$0xff]
      %v270 = vld [vmem:[%s1 + $0x10] sm:$0xff]
      %v271 = vld [vmem:[%s1 + $0x18] sm:$0xff]
      %v272 = vld [vmem:[%s1 + $0x20] sm:$0xf]
      %v273 = vld [vmem:[%s2] sm:$0x1]
      %v275 = vlaneseq
      %v276 = vshrl.u32 %v275, 7
      %v277 = vsub.s32 0, %v276
      %v278 = vrot.slane %v273, %v277
      %vm280 = vcmask 293888
      %v282 = vsel %vm280, %v266, 0
      %v285 = vsel %vm280, %v267, 0
      %vm287 = vcmask 1043456
      %v289 = vsel %vm287, %v272, 0
      %291 = vmatprep.subr.mxu0 0.0
      %292 = vmatpush1.msra.mxu0 0.0
      %293 = vmatprep.subr.mxu0 0.0
      %294 = vmatpush1.msra.mxu0 0.0
      %295 = vmatprep.subr.mxu0 0.0
      %296 = vmatpush1.msra.mxu0 0.0
      %297 = vmatprep.subr.mxu0 0.0
      %298 = vmatpush1.msra.mxu0 0.0
      %299 = vmatprep.subr.mxu0 0.0
      %300 = vmatpush1.msra.mxu0 0.0
      %301 = vmatprep.subr.mxu0 0.0
      %302 = vmatpush1.msra.mxu0 0.0
      %303 = vmatprep.subr.mxu0 0.0
      %304 = vmatpush1.msra.mxu0 0.0
      %305 = vmatprep.subr.mxu0 0.0
      %306 = vmatpush1.msra.mxu0 0.0
      %307 = vmatprep.subr.mxu0 0.0
      %308 = vmatpush1.msra.mxu0 0.0
      %309 = vmatprep.subr.mxu0 0.0
      %310 = vmatpush1.msra.mxu0 0.0
      %311 = vmatprep.subr.mxu0 0.0
      %312 = vmatpush1.msra.mxu0 0.0
      %313 = vmatprep.subr.mxu0 0.0
      %314 = vmatpush1.msra.mxu0 %v289
      %315 = vmatprep.subr.mxu0 0.0
      %316 = vmatpush1.msra.mxu0 %v271
      %317 = vmatprep.subr.mxu0 0.0
      %318 = vmatpush1.msra.mxu0 %v270
      %319 = vmatprep.subr.mxu0 0.0
      %320 = vmatpush1.msra.mxu0 %v269
      %321 = vmatprep.subr.mxu0 0.0
      %322 = vmatpush1.msra.mxu0 %v268
      %323 = vmatprep.subr.mxu0 0.0
      %324 = vmatpush2.msra.mxu0 0.0
      %325 = vmatprep.subr.mxu0 0.0
      %326 = vmatpush2.msra.mxu0 0.0
      %327 = vmatprep.subr.mxu0 0.0
      %328 = vmatpush2.msra.mxu0 0.0
      %329 = vmatprep.subr.mxu0 0.0
      %330 = vmatpush2.msra.mxu0 0.0
      %331 = vmatprep.subr.mxu0 0.0
      %332 = vmatpush2.msra.mxu0 0.0
      %333 = vmatprep.subr.mxu0 0.0
      %334 = vmatpush2.msra.mxu0 0.0
      %335 = vmatprep.subr.mxu0 0.0
      %336 = vmatpush2.msra.mxu0 0.0
      %337 = vmatprep.subr.mxu0 0.0
      %338 = vmatpush2.msra.mxu0 0.0
      %339 = vmatprep.subr.mxu0 0.0
      %340 = vmatpush2.msra.mxu0 0.0
      %341 = vmatprep.subr.mxu0 0.0
      %342 = vmatpush2.msra.mxu0 0.0
      %343 = vmatprep.subr.mxu0 0.0
      %344 = vmatpush2.msra.mxu0 0.0
      %345 = vmatprep.subr.mxu0 0.0
      %346 = vmatpush2.msra.mxu0 0.0
      %347 = vmatprep.subr.mxu0 0.0
      %348 = vmatpush2.msra.mxu0 0.0
      %349 = vmatprep.subr.mxu0 0.0
      %350 = vmatpush2.msra.mxu0 0.0
      %351 = vmatprep.subr.mxu0 0.0
      %352 = vmatpush2.msra.mxu0 0.0
      %353 = vmatprep.subr.mxu0 0.0
      %354 = vmatpush2.msra.mxu0 0.0
      %355 = vmatprep.mubr.f32.mxu0 0.0
      %356 = vmatmul.mubr.f32.gmra.mxu0 %v282
      %v357 = vpop.f32.mrf.mxu0
      %v358 = vadd.f32 %v278, %v357
      %v359 = vpop.f32.mrf.mxu0
      %360 = vmatprep.mubr.f32.mxu0 0.0
      %361 = vmatmul.mubr.f32.gmra.mxu0 %v285
      %v362 = vpop.f32.mrf.mxu0
      %v363 = vadd.f32 %v278, %v362
      %v364 = vpop.f32.mrf.mxu0
      %365 = vdwg.mxu0
      %v366 = vmax.f32 %v358, 0.0
      %v367 = vmax.f32 %v363, 0.0
      %368 = vst.msk [vmem:[%s170] sm:$0xff] %vm247, %v366
      %369 = vst.msk [vmem:[%s170 + $0x8] sm:$0xff] %vm247, %v367
      %p370 = scmp.lt.s32.totalorder %s14, 1
      %s371 = scalar_select %p370, %s14, 1
      %s372 = smul.addr %s371, 2
      %s373 = smul.addr %s372, 8
      %s374 = scalar_lea.vmem %s3, %s373
      // Predicated region
      $region33: #{contact_attention_simple_forward.15} parent=31 // pred_check
        %p375 = pneg %p100
      $region34: #{contact_attention_simple_forward.15} parent=31 // pred_check_branch
        %377 = sbr.rel (%p375) target = $region36
      $region35: #{contact_attention_simple_forward.15} parent=31 // pred_region
        _
      $region36: #{contact_attention_simple_forward.15} parent=31 // pred_fallthru
        _
    $region32: #{contact_attention_simple_forward.15} parent=5 // pred_fallthru
      _
    %p378 = scmp.le.s32.totalorder 2, %s9
    // Predicated region
    $region37: #{contact_attention_simple_forward.15} parent=5 // pred_check
      %p379 = pneg %p378
    $region38: #{contact_attention_simple_forward.15} parent=5 // pred_check_branch
      %381 = sbr.rel (%p379) target = $region40
    $region39: #{contact_attention_simple_forward.15} parent=5 // pred_region
      %s382 = ssub.s32 %s9, 2
      // Predicated region
      $region41: #{contact_attention_simple_forward.15} parent=39 // pred_check
        %p383 = pneg %p106
      $region42: #{contact_attention_simple_forward.15} parent=39 // pred_check_branch
        %385 = sbr.rel (%p383) target = $region44
      $region43: #{contact_attention_simple_forward.15} parent=39 // pred_region
        %p386 = scmp.lt.s32.totalorder %s15, 1
        %s387 = scalar_select %p386, %s15, 1
        %s388 = smul.addr %s387, 2
        %s389 = smul.addr %s388, 8
        %s390 = scalar_lea.vmem %s3, %s389
      $region44: #{contact_attention_simple_forward.15} parent=39 // pred_fallthru
        _
    $region40: #{contact_attention_simple_forward.15} parent=5 // pred_fallthru
      _
  $region6: #{contact_attention_simple_forward.15} parent=0 // loop_footer
    %s13 = sadd.s32 1, %s9
  $region7: #{contact_attention_simple_forward.15} parent=0 // loop_footer_branch
    %8 = sbr.rel target = $region3
  $region8: #{contact_attention_simple_forward.15} parent=0 // loop_exit
    _

// kernel: contact_attention_simple_forward.17
$region0: #{contact_attention_simple_forward.17}
  #allocation0 [shape = 'u32[]', space=smem, size = 0x4, offset = 0x4, fixed_abs, tag = 'smem constant byte address 0x4 - core index']
  #allocation1 [shape = 'u32[144,128]{1,0:T(1,128)}', space=vmem, size = 0x12000, scoped, tag = 'internal scratch']
  %s0 = inlined_call_operand.vmem [shape: f32[4,16,8], index: 0, kind: input, shape index: {}]
  %s1 = inlined_call_operand.vmem [shape: f32[4,16,8], index: 1, kind: input, shape index: {}]
  %s2 = inlined_call_operand.vmem [shape: f32[4,16,8], index: 2, kind: input, shape index: {}]
  %s3 = inlined_call_operand.vmem [shape: f32[4,16,8], index: 3, kind: output, shape index: {}]
  %s4 = sld [smem:[#allocation0]]
  $region45: #{contact_attention_simple_forward.17} parent=0
    _
  %s6 = ssub.s32 1, %s4
  %s7 = scalar_select 0, %s6, %s4
  loop: start=0, step=1, limit=6
  $region2: #{contact_attention_simple_forward.17} parent=0 // loop_pre_header
    _
  $region3: #{contact_attention_simple_forward.17} parent=0 // loop_header
    %s9 = sphi 0, %s13
    %p10 = scmp.ge.s32.totalorder %s9, 6
    %s19 = sphi 0, %s21
    %s22 = sphi 0, %s19
    %s23 = sphi 0, %s22
    %s39 = sphi 0, %s23
    %s45 = sphi 0, %s47
    %s48 = sphi 0, %s45
    %s49 = sphi 0, %s48
    %s65 = sphi 0, %s49
    %s71 = sphi 0, %s73
    %s74 = sphi 0, %s71
    %s75 = sphi 0, %s74
    %s91 = sphi 0, %s75
    %s97 = sphi 0, %s99
    %s100 = sphi 0, %s97
    %s101 = sphi 0, %s100
    %s117 = sphi 0, %s101
  $region4: #{contact_attention_simple_forward.17} parent=0 // loop_header_branch
    %12 = sbr.rel (%p10) target = $region8
  $region5: #{contact_attention_simple_forward.17} parent=0 // loop_body
    %s14 = ssub.s32 %s9, 1
    %s15 = ssub.s32 %s9, 2
    %s16 = sadd.s32 %s9, 1
    %s17 = ssub.s32 %s9, %s16
    %p18 = scmp.eq.s32.totalorder %s17, 0
    %s20 = sadd.s32 %s19, 1
    %s21 = scalar_select %p18, %s19, %s20
    %p24 = pneg %p18
    %p25 = scmp.eq.s32.totalorder %s9, 3
    %p26 = por %p24, %p25
    %p27 = scmp.ne.s32.totalorder %s19, %s22
    %p28 = scmp.eq.s32.totalorder %s9, 0
    %p29 = por %p27, %p28
    %p30 = scmp.ne.s32.totalorder %s19, %s22
    %p31 = scmp.eq.s32.totalorder %s14, 3
    %p32 = por %p30, %p31
    %p33 = scmp.ne.s32.totalorder %s22, %s23
    %p34 = scmp.eq.s32.totalorder %s14, 0
    %p35 = por %p33, %p34
    %p36 = scmp.ne.s32.totalorder %s22, %s23
    %p37 = scmp.eq.s32.totalorder %s15, 3
    %p38 = por %p36, %p37
    %p40 = scmp.ne.s32.totalorder %s23, %s39
    %p41 = scmp.eq.s32.totalorder %s15, 0
    %p42 = por %p40, %p41
    %s43 = ssub.s32 %s9, %s16
    %p44 = scmp.eq.s32.totalorder %s43, 0
    %s46 = sadd.s32 %s45, 1
    %s47 = scalar_select %p44, %s45, %s46
    %p50 = pneg %p44
    %p51 = scmp.eq.s32.totalorder %s9, 3
    %p52 = por %p50, %p51
    %p53 = scmp.ne.s32.totalorder %s45, %s48
    %p54 = scmp.eq.s32.totalorder %s9, 0
    %p55 = por %p53, %p54
    %p56 = scmp.ne.s32.totalorder %s45, %s48
    %p57 = scmp.eq.s32.totalorder %s14, 3
    %p58 = por %p56, %p57
    %p59 = scmp.ne.s32.totalorder %s48, %s49
    %p60 = scmp.eq.s32.totalorder %s14, 0
    %p61 = por %p59, %p60
    %p62 = scmp.ne.s32.totalorder %s48, %s49
    %p63 = scmp.eq.s32.totalorder %s15, 3
    %p64 = por %p62, %p63
    %p66 = scmp.ne.s32.totalorder %s49, %s65
    %p67 = scmp.eq.s32.totalorder %s15, 0
    %p68 = por %p66, %p67
    %s69 = ssub.s32 %s9, %s16
    %p70 = scmp.eq.s32.totalorder %s69, 0
    %s72 = sadd.s32 %s71, 1
    %s73 = scalar_select %p70, %s71, %s72
    %p76 = pneg %p70
    %p77 = scmp.eq.s32.totalorder %s9, 3
    %p78 = por %p76, %p77
    %p79 = scmp.ne.s32.totalorder %s71, %s74
    %p80 = scmp.eq.s32.totalorder %s9, 0
    %p81 = por %p79, %p80
    %p82 = scmp.ne.s32.totalorder %s71, %s74
    %p83 = scmp.eq.s32.totalorder %s14, 3
    %p84 = por %p82, %p83
    %p85 = scmp.ne.s32.totalorder %s74, %s75
    %p86 = scmp.eq.s32.totalorder %s14, 0
    %p87 = por %p85, %p86
    %p88 = scmp.ne.s32.totalorder %s74, %s75
    %p89 = scmp.eq.s32.totalorder %s15, 3
    %p90 = por %p88, %p89
    %p92 = scmp.ne.s32.totalorder %s75, %s91
    %p93 = scmp.eq.s32.totalorder %s15, 0
    %p94 = por %p92, %p93
    %s95 = ssub.s32 %s9, %s16
    %p96 = scmp.eq.s32.totalorder %s95, 0
    %s98 = sadd.s32 %s97, 1
    %s99 = scalar_select %p96, %s97, %s98
    %p102 = pneg %p96
    %p103 = scmp.eq.s32.totalorder %s9, 3
    %p104 = por %p102, %p103
    %p105 = scmp.ne.s32.totalorder %s97, %s100
    %p106 = scmp.eq.s32.totalorder %s9, 0
    %p107 = por %p105, %p106
    %p108 = scmp.ne.s32.totalorder %s97, %s100
    %p109 = scmp.eq.s32.totalorder %s14, 3
    %p110 = por %p108, %p109
    %p111 = scmp.ne.s32.totalorder %s100, %s101
    %p112 = scmp.eq.s32.totalorder %s14, 0
    %p113 = por %p111, %p112
    %p114 = scmp.ne.s32.totalorder %s100, %s101
    %p115 = scmp.eq.s32.totalorder %s15, 3
    %p116 = por %p114, %p115
    %p118 = scmp.ne.s32.totalorder %s101, %s117
    %p119 = scmp.eq.s32.totalorder %s15, 0
    %p120 = por %p118, %p119
    %p121 = scmp.le.s32.totalorder 1, %s9
    %p122 = scmp.lt.s32.totalorder %s9, 5
    %p123 = pnand %p121, %p122
    %p124 = pneg %p123
    // Predicated region
    $region9: #{contact_attention_simple_forward.17} parent=5 // pred_check
      _
    $region10: #{contact_attention_simple_forward.17} parent=5 // pred_check_branch
      %126 = sbr.rel (%p123) target = $region12
    $region11: #{contact_attention_simple_forward.17} parent=5 // pred_region
      %s127 = ssub.s32 %s9, 1
    $region12: #{contact_attention_simple_forward.17} parent=5 // pred_fallthru
      _
    %p128 = scmp.lt.s32.totalorder %s9, 4
    // Predicated region
    $region13: #{contact_attention_simple_forward.17} parent=5 // pred_check
      %p129 = pneg %p128
    $region14: #{contact_attention_simple_forward.17} parent=5 // pred_check_branch
      %131 = sbr.rel (%p129) target = $region16
    $region15: #{contact_attention_simple_forward.17} parent=5 // pred_region
      // Predicated region
      $region17: #{contact_attention_simple_forward.17} parent=15 // pred_check
        %p132 = pneg %p29
      $region18: #{contact_attention_simple_forward.17} parent=15 // pred_check_branch
        %134 = sbr.rel (%p132) target = $region20
      $region19: #{contact_attention_simple_forward.17} parent=15 // pred_region
        %p135 = scmp.lt.s32.totalorder %s9, 3
        %s136 = scalar_select %p135, %s9, 3
        %s137 = smul.addr %s136, 2
        %s138 = smul.addr %s137, 8
        %s139 = scalar_lea.vmem %s0, %s138
      $region20: #{contact_attention_simple_forward.17} parent=15 // pred_fallthru
        _
      // Predicated region
      $region21: #{contact_attention_simple_forward.17} parent=15 // pred_check
        %p140 = pneg %p55
      $region22: #{contact_attention_simple_forward.17} parent=15 // pred_check_branch
        %142 = sbr.rel (%p140) target = $region24
      $region23: #{contact_attention_simple_forward.17} parent=15 // pred_region
        %p143 = scmp.lt.s32.totalorder %s9, 3
        %s144 = scalar_select %p143, %s9, 3
        %s145 = smul.addr %s144, 2
        %s146 = smul.addr %s145, 8
        %s147 = scalar_lea.vmem %s1, %s146
      $region24: #{contact_attention_simple_forward.17} parent=15 // pred_fallthru
        _
      // Predicated region
      $region25: #{contact_attention_simple_forward.17} parent=15 // pred_check
        %p148 = pneg %p81
      $region26: #{contact_attention_simple_forward.17} parent=15 // pred_check_branch
        %150 = sbr.rel (%p148) target = $region28
      $region27: #{contact_attention_simple_forward.17} parent=15 // pred_region
        %p151 = scmp.lt.s32.totalorder %s9, 3
        %s152 = scalar_select %p151, %s9, 3
        %s153 = smul.addr %s152, 2
        %s154 = smul.addr %s153, 8
        %s155 = scalar_lea.vmem %s2, %s154
      $region28: #{contact_attention_simple_forward.17} parent=15 // pred_fallthru
        _
    $region16: #{contact_attention_simple_forward.17} parent=5 // pred_fallthru
      _
    %p156 = scmp.le.s32.totalorder 1, %s9
    %p157 = scmp.lt.s32.totalorder %s9, 5
    %p158 = pnand %p156, %p157
    %p159 = pneg %p158
    // Predicated region
    $region29: #{contact_attention_simple_forward.17} parent=5 // pred_check
      _
    $region30: #{contact_attention_simple_forward.17} parent=5 // pred_check_branch
      %161 = sbr.rel (%p158) target = $region32
    $region31: #{contact_attention_simple_forward.17} parent=5 // pred_region
      %s162 = ssub.s32 %s9, 1
      %p163 = scmp.lt.s32.totalorder %s14, 3
      %s164 = scalar_select %p163, %s14, 3
      %s165 = smul.addr %s164, 2
      %s166 = smul.addr %s165, 8
      %s167 = scalar_lea.vmem %s0, %s166
      %p168 = pneg %p35
      %p169 = pneg %p32
      %p170 = scmp.lt.s32.totalorder %s14, 3
      %s171 = scalar_select %p170, %s14, 3
      %s172 = smul.addr %s171, 2
      %s173 = smul.addr %s172, 8
      %s174 = scalar_lea.vmem %s1, %s173
      %p175 = pneg %p61
      %p176 = pneg %p58
      %p177 = scmp.lt.s32.totalorder %s14, 3
      %s178 = scalar_select %p177, %s14, 3
      %s179 = smul.addr %s178, 2
      %s180 = smul.addr %s179, 8
      %s181 = scalar_lea.vmem %s2, %s180
      %p182 = pneg %p87
      %p183 = pneg %p84
      %p184 = pneg %p113
      %p185 = pneg %p110
      %p186 = scmp.lt.s32.totalorder %s14, 3
      %s187 = scalar_select %p186, %s14, 3
      %s188 = smul.addr %s187, 2
      %s189 = smul.addr %s188, 8
      %s190 = scalar_lea.vmem %s3, %s189
      %p191 = scmp.lt.s32.totalorder %s14, 3
      %s192 = scalar_select %p191, %s14, 3
      %s193 = smul.addr %s192, 2
      %s194 = smul.addr %s193, 8
      %s195 = scalar_lea.vmem %s0, %s194
      %p196 = scmp.lt.s32.totalorder %s14, 3
      %s197 = scalar_select %p196, %s14, 3
      %s198 = smul.addr %s197, 2
      %s199 = smul.addr %s198, 8
      %s200 = scalar_lea.vmem %s1, %s199
      %p201 = scmp.lt.s32.totalorder %s14, 3
      %s202 = scalar_select %p201, %s14, 3
      %s203 = smul.addr %s202, 2
      %s204 = smul.addr %s203, 8
      %s205 = scalar_lea.vmem %s2, %s204
      %p206 = scmp.lt.s32.totalorder %s14, 3
      %s207 = scalar_select %p206, %s14, 3
      %s208 = smul.addr %s207, 2
      %s209 = smul.addr %s208, 8
      %s210 = scalar_lea.vmem %s3, %s209
      %v211 = vld [vmem:[%s195] sm:$0xff]
      %v212 = vld [vmem:[%s195 + $0x8] sm:$0xff]
      %v213 = vmul.f32 %v211, 0.35355338
      %v214 = vmul.f32 %v212, 0.35355338
      %v215 = vld [vmem:[%s200] sm:$0xff]
      %v216 = vld [vmem:[%s200 + $0x8] sm:$0xff]
      %v217 = vld [vmem:[%s205] sm:$0xff]
      %v218 = vld [vmem:[%s205 + $0x8] sm:$0xff]
      %vm219 = vcmask 64512
      %v221 = vsel %vm219, %v213, 0
      %v224 = vsel %vm219, %v214, 0
      %v227 = vsel %vm219, %v215, 0
      %v230 = vsel %vm219, %v216, 0
      %232 = vmatprep.subr.mxu0 0.0
      %233 = vmatpush1.xpose.msra.mxu0 0.0
      %234 = vmatprep.subr.mxu0 0.0
      %235 = vmatpush1.xpose.msra.mxu0 0.0
      %236 = vmatprep.subr.mxu0 0.0
      %237 = vmatpush1.xpose.msra.mxu0 0.0
      %238 = vmatprep.subr.mxu0 0.0
      %239 = vmatpush1.xpose.msra.mxu0 0.0
      %240 = vmatprep.subr.mxu0 0.0
      %241 = vmatpush1.xpose.msra.mxu0 0.0
      %242 = vmatprep.subr.mxu0 0.0
      %243 = vmatpush1.xpose.msra.mxu0 0.0
      %244 = vmatprep.subr.mxu0 0.0
      %245 = vmatpush1.xpose.msra.mxu0 0.0
      %246 = vmatprep.subr.mxu0 0.0
      %247 = vmatpush1.xpose.msra.mxu0 0.0
      %248 = vmatprep.subr.mxu0 0.0
      %249 = vmatpush1.xpose.msra.mxu0 0.0
      %250 = vmatprep.subr.mxu0 0.0
      %251 = vmatpush1.xpose.msra.mxu0 0.0
      %252 = vmatprep.subr.mxu0 0.0
      %253 = vmatpush1.xpose.msra.mxu0 0.0
      %254 = vmatprep.subr.mxu0 0.0
      %255 = vmatpush1.xpose.msra.mxu0 0.0
      %256 = vmatprep.subr.mxu0 0.0
      %257 = vmatpush1.xpose.msra.mxu0 0.0
      %258 = vmatprep.subr.mxu0 0.0
      %259 = vmatpush1.xpose.msra.mxu0 0.0
      %260 = vmatprep.subr.mxu0 0.0
      %261 = vmatpush1.xpose.msra.mxu0 %v230
      %262 = vmatprep.subr.mxu0 0.0
      %263 = vmatpush1.xpose.msra.mxu0 %v227
      %264 = vmatprep.subr.mxu0 0.0
      %265 = vmatpush2.xpose.msra.mxu0 0.0
      %266 = vmatprep.subr.mxu0 0.0
      %267 = vmatpush2.xpose.msra.mxu0 0.0
      %268 = vmatprep.subr.mxu0 0.0
      %269 = vmatpush2.xpose.msra.mxu0 0.0
      %270 = vmatprep.subr.mxu0 0.0
      %271 = vmatpush2.xpose.msra.mxu0 0.0
      %272 = vmatprep.subr.mxu0 0.0
      %273 = vmatpush2.xpose.msra.mxu0 0.0
      %274 = vmatprep.subr.mxu0 0.0
      %275 = vmatpush2.xpose.msra.mxu0 0.0
      %276 = vmatprep.subr.mxu0 0.0
      %277 = vmatpush2.xpose.msra.mxu0 0.0
      %278 = vmatprep.subr.mxu0 0.0
      %279 = vmatpush2.xpose.msra.mxu0 0.0
      %280 = vmatprep.subr.mxu0 0.0
      %281 = vmatpush2.xpose.msra.mxu0 0.0
      %282 = vmatprep.subr.mxu0 0.0
      %283 = vmatpush2.xpose.msra.mxu0 0.0
      %284 = vmatprep.subr.mxu0 0.0
      %285 = vmatpush2.xpose.msra.mxu0 0.0
      %286 = vmatprep.subr.mxu0 0.0
      %287 = vmatpush2.xpose.msra.mxu0 0.0
      %288 = vmatprep.subr.mxu0 0.0
      %289 = vmatpush2.xpose.msra.mxu0 0.0
      %290 = vmatprep.subr.mxu0 0.0
      %291 = vmatpush2.xpose.msra.mxu0 0.0
      %292 = vmatprep.subr.mxu0 0.0
      %293 = vmatpush2.xpose.msra.mxu0 0.0
      %294 = vmatprep.subr.mxu0 0.0
      %295 = vmatpush2.xpose.msra.mxu0 0.0
      %296 = vmatprep.mubr.f32.mxu0 0.0
      %297 = vmatmul.mubr.f32.gmra.mxu0 %v221
      %v298 = vpop.f32.mrf.mxu0
      %v299 = vadd.f32 0.0, %v298
      %v300 = vpop.f32.mrf.mxu0
      %301 = vmatprep.mubr.f32.mxu0 0.0
      %302 = vmatmul.mubr.f32.gmra.mxu0 %v224
      %v303 = vpop.f32.mrf.mxu0
      %v304 = vadd.f32 0.0, %v303
      %v305 = vpop.f32.mrf.mxu0
      %306 = vdwg.mxu0
      %vm307 = vcmask 130048
      %v308 = vsel %vm307, %v299, -inf
      %309 = vmax.xlane.f32.xlu0 %v308
      %v310 = vpop.xlane.xlu0 %309
      %v311 = vsel %vm307, %v304, -inf
      %312 = vmax.xlane.f32.xlu0 %v311
      %v313 = vpop.xlane.xlu0 %312
      %v314 = vsub.f32 %v299, %v310
      %v315 = vsub.f32 %v304, %v313
      %v316 = vmul.f32 %v314, 1.442695
      %v317 = vpow.pop %v316
      %v318 = vmul.f32 %v315, 1.442695
      %v319 = vpow.pop %v318
      %v320 = vsel %vm307, %v317, 0.0
      %321 = vadd.xlane.f32.xlu0 %v320
      %v322 = vpop.xlane.xlu0 %321
      %v323 = vsel %vm307, %v319, 0.0
      %324 = vadd.xlane.f32.xlu0 %v323
      %v325 = vpop.xlane.xlu0 %324
      %v326 = vrcp.pop %v322
      %v327 = vrcp.pop %v325
      %v328 = vmul.f32 %v317, %v326
      %v329 = vmul.f32 %v319, %v327
      %v331 = vsel %vm307, %v328, 0
      %v334 = vsel %vm307, %v329, 0
      %336 = vmatprep.subr.mxu0 0.0
      %337 = vmatpush1.msra.mxu0 0.0
      %338 = vmatprep.subr.mxu0 0.0
      %339 = vmatpush1.msra.mxu0 0.0
      %340 = vmatprep.subr.mxu0 0.0
      %341 = vmatpush1.msra.mxu0 0.0
      %342 = vmatprep.subr.mxu0 0.0
      %343 = vmatpush1.msra.mxu0 0.0
      %344 = vmatprep.subr.mxu0 0.0
      %345 = vmatpush1.msra.mxu0 0.0
      %346 = vmatprep.subr.mxu0 0.0
      %347 = vmatpush1.msra.mxu0 0.0
      %348 = vmatprep.subr.mxu0 0.0
      %349 = vmatpush1.msra.mxu0 0.0
      %350 = vmatprep.subr.mxu0 0.0
      %351 = vmatpush1.msra.mxu0 0.0
      %352 = vmatprep.subr.mxu0 0.0
      %353 = vmatpush1.msra.mxu0 0.0
      %354 = vmatprep.subr.mxu0 0.0
      %355 = vmatpush1.msra.mxu0 0.0
      %356 = vmatprep.subr.mxu0 0.0
      %357 = vmatpush1.msra.mxu0 0.0
      %358 = vmatprep.subr.mxu0 0.0
      %359 = vmatpush1.msra.mxu0 0.0
      %360 = vmatprep.subr.mxu0 0.0
      %361 = vmatpush1.msra.mxu0 0.0
      %362 = vmatprep.subr.mxu0 0.0
      %363 = vmatpush1.msra.mxu0 0.0
      %364 = vmatprep.subr.mxu0 0.0
      %365 = vmatpush1.msra.mxu0 %v218
      %366 = vmatprep.subr.mxu0 0.0
      %367 = vmatpush1.msra.mxu0 %v217
      %368 = vmatprep.subr.mxu0 0.0
      %369 = vmatpush2.msra.mxu0 0.0
      %370 = vmatprep.subr.mxu0 0.0
      %371 = vmatpush2.msra.mxu0 0.0
      %372 = vmatprep.subr.mxu0 0.0
      %373 = vmatpush2.msra.mxu0 0.0
      %374 = vmatprep.subr.mxu0 0.0
      %375 = vmatpush2.msra.mxu0 0.0
      %376 = vmatprep.subr.mxu0 0.0
      %377 = vmatpush2.msra.mxu0 0.0
      %378 = vmatprep.subr.mxu0 0.0
      %379 = vmatpush2.msra.mxu0 0.0
      %380 = vmatprep.subr.mxu0 0.0
      %381 = vmatpush2.msra.mxu0 0.0
      %382 = vmatprep.subr.mxu0 0.0
      %383 = vmatpush2.msra.mxu0 0.0
      %384 = vmatprep.subr.mxu0 0.0
      %385 = vmatpush2.msra.mxu0 0.0
      %386 = vmatprep.subr.mxu0 0.0
      %387 = vmatpush2.msra.mxu0 0.0
      %388 = vmatprep.subr.mxu0 0.0
      %389 = vmatpush2.msra.mxu0 0.0
      %390 = vmatprep.subr.mxu0 0.0
      %391 = vmatpush2.msra.mxu0 0.0
      %392 = vmatprep.subr.mxu0 0.0
      %393 = vmatpush2.msra.mxu0 0.0
      %394 = vmatprep.subr.mxu0 0.0
      %395 = vmatpush2.msra.mxu0 0.0
      %396 = vmatprep.subr.mxu0 0.0
      %397 = vmatpush2.msra.mxu0 0.0
      %398 = vmatprep.subr.mxu0 0.0
      %399 = vmatpush2.msra.mxu0 0.0
      %400 = vmatprep.mubr.f32.mxu0 0.0
      %401 = vmatmul.mubr.f32.gmra.mxu0 %v331
      %v402 = vpop.f32.mrf.mxu0
      %v403 = vadd.f32 0.0, %v402
      %v404 = vpop.f32.mrf.mxu0
      %405 = vmatprep.mubr.f32.mxu0 0.0
      %406 = vmatmul.mubr.f32.gmra.mxu0 %v334
      %v407 = vpop.f32.mrf.mxu0
      %v408 = vadd.f32 0.0, %v407
      %v409 = vpop.f32.mrf.mxu0
      %410 = vdwg.mxu0
      %411 = vst.msk [vmem:[%s210] sm:$0xff] %vm219, %v403
      %412 = vst.msk [vmem:[%s210 + $0x8] sm:$0xff] %vm219, %v408
      %p413 = scmp.lt.s32.totalorder %s14, 3
      %s414 = scalar_select %p413, %s14, 3
      %s415 = smul.addr %s414, 2
      %s416 = smul.addr %s415, 8
      %s417 = scalar_lea.vmem %s3, %s416
      // Predicated region
      $region33: #{contact_attention_simple_forward.17} parent=31 // pred_check
        %p418 = pneg %p110
      $region34: #{contact_attention_simple_forward.17} parent=31 // pred_check_branch
        %420 = sbr.rel (%p418) target = $region36
      $region35: #{contact_attention_simple_forward.17} parent=31 // pred_region
        _
      $region36: #{contact_attention_simple_forward.17} parent=31 // pred_fallthru
        _
    $region32: #{contact_attention_simple_forward.17} parent=5 // pred_fallthru
      _
    %p421 = scmp.le.s32.totalorder 2, %s9
    // Predicated region
    $region37: #{contact_attention_simple_forward.17} parent=5 // pred_check
      %p422 = pneg %p421
    $region38: #{contact_attention_simple_forward.17} parent=5 // pred_check_branch
      %424 = sbr.rel (%p422) target = $region40
    $region39: #{contact_attention_simple_forward.17} parent=5 // pred_region
      %s425 = ssub.s32 %s9, 2
      // Predicated region
      $region41: #{contact_attention_simple_forward.17} parent=39 // pred_check
        %p426 = pneg %p116
      $region42: #{contact_attention_simple_forward.17} parent=39 // pred_check_branch
        %428 = sbr.rel (%p426) target = $region44
      $region43: #{contact_attention_simple_forward.17} parent=39 // pred_region
        %p429 = scmp.lt.s32.totalorder %s15, 3
        %s430 = scalar_select %p429, %s15, 3
        %s431 = smul.addr %s430, 2
        %s432 = smul.addr %s431, 8
        %s433 = scalar_lea.vmem %s3, %s432
      $region44: #{contact_attention_simple_forward.17} parent=39 // pred_fallthru
        _
    $region40: #{contact_attention_simple_forward.17} parent=5 // pred_fallthru
      _
  $region6: #{contact_attention_simple_forward.17} parent=0 // loop_footer
    %s13 = sadd.s32 1, %s9
  $region7: #{contact_attention_simple_forward.17} parent=0 // loop_footer_branch
    %8 = sbr.rel target = $region3
  $region8: #{contact_attention_simple_forward.17} parent=0 // loop_exit
    _

// kernel: contact_attention_simple_forward.18
$region0: #{contact_attention_simple_forward.18}
  #allocation0 [shape = 'u32[]', space=smem, size = 0x4, offset = 0x4, fixed_abs, tag = 'smem constant byte address 0x4 - core index']
  #allocation1 [shape = 'u32[144,128]{1,0:T(1,128)}', space=vmem, size = 0x12000, scoped, tag = 'internal scratch']
  %s0 = inlined_call_operand.vmem [shape: f32[32,16], index: 0, kind: input, shape index: {}]
  %s1 = inlined_call_operand.vmem [shape: f32[32,16], index: 1, kind: input, shape index: {}]
  %s2 = inlined_call_operand.vmem [shape: f32[16,16], index: 2, kind: input, shape index: {}]
  %s3 = inlined_call_operand.vmem [shape: f32[1,16], index: 3, kind: input, shape index: {}]
  %s4 = inlined_call_operand.vmem [shape: f32[1,16], index: 4, kind: input, shape index: {}]
  %s5 = inlined_call_operand.vmem [shape: f32[1,16], index: 5, kind: input, shape index: {}]
  %s6 = inlined_call_operand.vmem [shape: f32[32,16], index: 6, kind: output, shape index: {}]
  %s7 = sld [smem:[#allocation0]]
  $region34: #{contact_attention_simple_forward.18} parent=0
    _
  %s9 = ssub.s32 1, %s7
  %s10 = scalar_select 0, %s9, %s7
  // Predicated region
  $region2: #{contact_attention_simple_forward.18} parent=0 // pred_check
    _
  $region3: #{contact_attention_simple_forward.18} parent=0 // pred_check_branch
    %12 = sbr.rel (0) target = $region5
  $region4: #{contact_attention_simple_forward.18} parent=0 // pred_region
    _
  $region5: #{contact_attention_simple_forward.18} parent=0 // pred_fallthru
    _
  // Predicated region
  $region6: #{contact_attention_simple_forward.18} parent=0 // pred_check
    _
  $region7: #{contact_attention_simple_forward.18} parent=0 // pred_check_branch
    %14 = sbr.rel (0) target = $region9
  $region8: #{contact_attention_simple_forward.18} parent=0 // pred_region
    _
  $region9: #{contact_attention_simple_forward.18} parent=0 // pred_fallthru
    _
  // Predicated region
  $region10: #{contact_attention_simple_forward.18} parent=0 // pred_check
    _
  $region11: #{contact_attention_simple_forward.18} parent=0 // pred_check_branch
    %16 = sbr.rel (0) target = $region13
  $region12: #{contact_attention_simple_forward.18} parent=0 // pred_region
    _
  $region13: #{contact_attention_simple_forward.18} parent=0 // pred_fallthru
    _
  // Predicated region
  $region14: #{contact_attention_simple_forward.18} parent=0 // pred_check
    _
  $region15: #{contact_attention_simple_forward.18} parent=0 // pred_check_branch
    %18 = sbr.rel (0) target = $region17
  $region16: #{contact_attention_simple_forward.18} parent=0 // pred_region
    _
  $region17: #{contact_attention_simple_forward.18} parent=0 // pred_fallthru
    _
  // Predicated region
  $region18: #{contact_attention_simple_forward.18} parent=0 // pred_check
    _
  $region19: #{contact_attention_simple_forward.18} parent=0 // pred_check_branch
    %20 = sbr.rel (0) target = $region21
  $region20: #{contact_attention_simple_forward.18} parent=0 // pred_region
    _
  $region21: #{contact_attention_simple_forward.18} parent=0 // pred_fallthru
    _
  // Predicated region
  $region22: #{contact_attention_simple_forward.18} parent=0 // pred_check
    _
  $region23: #{contact_attention_simple_forward.18} parent=0 // pred_check_branch
    %22 = sbr.rel (0) target = $region25
  $region24: #{contact_attention_simple_forward.18} parent=0 // pred_region
    _
  $region25: #{contact_attention_simple_forward.18} parent=0 // pred_fallthru
    _
  %v23 = vld [vmem:[%s0] sm:$0xff]
  %v24 = vld [vmem:[%s0 + $0x8] sm:$0xff]
  %v25 = vld [vmem:[%s0 + $0x10] sm:$0xff]
  %v26 = vld [vmem:[%s0 + $0x18] sm:$0xff]
  %v27 = vld [vmem:[%s2] sm:$0xff]
  %v28 = vld [vmem:[%s2 + $0x8] sm:$0xff]
  %v29 = vld [vmem:[%s3] sm:$0x1]
  %v31 = vlaneseq
  %v32 = vshrl.u32 %v31, 7
  %v33 = vsub.s32 0, %v32
  %v34 = vrot.slane %v29, %v33
  %vm36 = vcmask 130048
  %v38 = vsel %vm36, %v23, 0
  %v41 = vsel %vm36, %v24, 0
  %v44 = vsel %vm36, %v25, 0
  %v47 = vsel %vm36, %v26, 0
  %49 = vmatprep.subr.mxu0 0.0
  %50 = vmatpush1.msra.mxu0 0.0
  %51 = vmatprep.subr.mxu0 0.0
  %52 = vmatpush1.msra.mxu0 0.0
  %53 = vmatprep.subr.mxu0 0.0
  %54 = vmatpush1.msra.mxu0 0.0
  %55 = vmatprep.subr.mxu0 0.0
  %56 = vmatpush1.msra.mxu0 0.0
  %57 = vmatprep.subr.mxu0 0.0
  %58 = vmatpush1.msra.mxu0 0.0
  %59 = vmatprep.subr.mxu0 0.0
  %60 = vmatpush1.msra.mxu0 0.0
  %61 = vmatprep.subr.mxu0 0.0
  %62 = vmatpush1.msra.mxu0 0.0
  %63 = vmatprep.subr.mxu0 0.0
  %64 = vmatpush1.msra.mxu0 0.0
  %65 = vmatprep.subr.mxu0 0.0
  %66 = vmatpush1.msra.mxu0 0.0
  %67 = vmatprep.subr.mxu0 0.0
  %68 = vmatpush1.msra.mxu0 0.0
  %69 = vmatprep.subr.mxu0 0.0
  %70 = vmatpush1.msra.mxu0 0.0
  %71 = vmatprep.subr.mxu0 0.0
  %72 = vmatpush1.msra.mxu0 0.0
  %73 = vmatprep.subr.mxu0 0.0
  %74 = vmatpush1.msra.mxu0 0.0
  %75 = vmatprep.subr.mxu0 0.0
  %76 = vmatpush1.msra.mxu0 0.0
  %77 = vmatprep.subr.mxu0 0.0
  %78 = vmatpush1.msra.mxu0 %v28
  %79 = vmatprep.subr.mxu0 0.0
  %80 = vmatpush1.msra.mxu0 %v27
  %81 = vmatprep.subr.mxu0 0.0
  %82 = vmatpush2.msra.mxu0 0.0
  %83 = vmatprep.subr.mxu0 0.0
  %84 = vmatpush2.msra.mxu0 0.0
  %85 = vmatprep.subr.mxu0 0.0
  %86 = vmatpush2.msra.mxu0 0.0
  %87 = vmatprep.subr.mxu0 0.0
  %88 = vmatpush2.msra.mxu0 0.0
  %89 = vmatprep.subr.mxu0 0.0
  %90 = vmatpush2.msra.mxu0 0.0
  %91 = vmatprep.subr.mxu0 0.0
  %92 = vmatpush2.msra.mxu0 0.0
  %93 = vmatprep.subr.mxu0 0.0
  %94 = vmatpush2.msra.mxu0 0.0
  %95 = vmatprep.subr.mxu0 0.0
  %96 = vmatpush2.msra.mxu0 0.0
  %97 = vmatprep.subr.mxu0 0.0
  %98 = vmatpush2.msra.mxu0 0.0
  %99 = vmatprep.subr.mxu0 0.0
  %100 = vmatpush2.msra.mxu0 0.0
  %101 = vmatprep.subr.mxu0 0.0
  %102 = vmatpush2.msra.mxu0 0.0
  %103 = vmatprep.subr.mxu0 0.0
  %104 = vmatpush2.msra.mxu0 0.0
  %105 = vmatprep.subr.mxu0 0.0
  %106 = vmatpush2.msra.mxu0 0.0
  %107 = vmatprep.subr.mxu0 0.0
  %108 = vmatpush2.msra.mxu0 0.0
  %109 = vmatprep.subr.mxu0 0.0
  %110 = vmatpush2.msra.mxu0 0.0
  %111 = vmatprep.subr.mxu0 0.0
  %112 = vmatpush2.msra.mxu0 0.0
  %113 = vmatprep.mubr.f32.mxu0 0.0
  %114 = vmatmul.mubr.f32.gmra.mxu0 %v38
  %v115 = vpop.f32.mrf.mxu0
  %v116 = vadd.f32 %v34, %v115
  %v117 = vpop.f32.mrf.mxu0
  %118 = vmatprep.mubr.f32.mxu0 0.0
  %119 = vmatmul.mubr.f32.gmra.mxu0 %v41
  %v120 = vpop.f32.mrf.mxu0
  %v121 = vadd.f32 %v34, %v120
  %v122 = vpop.f32.mrf.mxu0
  %123 = vmatprep.mubr.f32.mxu0 0.0
  %124 = vmatmul.mubr.f32.gmra.mxu0 %v44
  %v125 = vpop.f32.mrf.mxu0
  %v126 = vadd.f32 %v34, %v125
  %v127 = vpop.f32.mrf.mxu0
  %128 = vmatprep.mubr.f32.mxu0 0.0
  %129 = vmatmul.mubr.f32.gmra.mxu0 %v47
  %v130 = vpop.f32.mrf.mxu0
  %v131 = vadd.f32 %v34, %v130
  %v132 = vpop.f32.mrf.mxu0
  %133 = vdwg.mxu0
  %v134 = vld [vmem:[%s1] sm:$0xff]
  %v135 = vld [vmem:[%s1 + $0x8] sm:$0xff]
  %v136 = vld [vmem:[%s1 + $0x10] sm:$0xff]
  %v137 = vld [vmem:[%s1 + $0x18] sm:$0xff]
  %v138 = vadd.f32 %v116, %v134
  %v139 = vadd.f32 %v121, %v135
  %v140 = vadd.f32 %v126, %v136
  %v141 = vadd.f32 %v131, %v137
  %v142 = vsel %vm36, %v138, 0.0
  %143 = vadd.xlane.f32.xlu0 %v142
  %v144 = vpop.xlane.xlu0 %143
  %v145 = vsel %vm36, %v139, 0.0
  %146 = vadd.xlane.f32.xlu0 %v145
  %v147 = vpop.xlane.xlu0 %146
  %v148 = vsel %vm36, %v140, 0.0
  %149 = vadd.xlane.f32.xlu0 %v148
  %v150 = vpop.xlane.xlu0 %149
  %v151 = vsel %vm36, %v141, 0.0
  %152 = vadd.xlane.f32.xlu0 %v151
  %v153 = vpop.xlane.xlu0 %152
  %v154 = vrcp.pop 16.0
  %v155 = vmul.f32 %v144, %v154
  %v156 = vmul.f32 %v147, %v154
  %v157 = vmul.f32 %v150, %v154
  %v158 = vmul.f32 %v153, %v154
  %v159 = vsub.f32 %v138, %v155
  %v160 = vsub.f32 %v139, %v156
  %v161 = vsub.f32 %v140, %v157
  %v162 = vsub.f32 %v141, %v158
  %v163 = vmul.f32 %v159, %v159
  %v164 = vmul.f32 %v160, %v160
  %v165 = vmul.f32 %v161, %v161
  %v166 = vmul.f32 %v162, %v162
  %v167 = vsel %vm36, %v163, 0.0
  %168 = vadd.xlane.f32.xlu0 %v167
  %v169 = vpop.xlane.xlu0 %168
  %v170 = vsel %vm36, %v164, 0.0
  %171 = vadd.xlane.f32.xlu0 %v170
  %v172 = vpop.xlane.xlu0 %171
  %v173 = vsel %vm36, %v165, 0.0
  %174 = vadd.xlane.f32.xlu0 %v173
  %v175 = vpop.xlane.xlu0 %174
  %v176 = vsel %vm36, %v166, 0.0
  %177 = vadd.xlane.f32.xlu0 %v176
  %v178 = vpop.xlane.xlu0 %177
  %v179 = vmul.f32 %v169, %v154
  %v180 = vmul.f32 %v172, %v154
  %v181 = vmul.f32 %v175, %v154
  %v182 = vmul.f32 %v178, %v154
  %v183 = vadd.f32 %v179, 1e-05
  %v184 = vadd.f32 %v180, 1e-05
  %v185 = vadd.f32 %v181, 1e-05
  %v186 = vadd.f32 %v182, 1e-05
  %v187 = vrsqrt.pop %v183
  %v188 = vrsqrt.pop %v184
  %v189 = vrsqrt.pop %v185
  %v190 = vrsqrt.pop %v186
  %v191 = vmul.f32 %v159, %v187
  %v192 = vmul.f32 %v160, %v188
  %v193 = vmul.f32 %v161, %v189
  %v194 = vmul.f32 %v162, %v190
  %v195 = vld [vmem:[%s4] sm:$0x1]
  %v197 = vlaneseq
  %v198 = vshrl.u32 %v197, 7
  %v199 = vsub.s32 0, %v198
  %v200 = vrot.slane %v195, %v199
  %v202 = vmul.f32 %v191, %v200
  %v203 = vmul.f32 %v192, %v200
  %v204 = vmul.f32 %v193, %v200
  %v205 = vmul.f32 %v194, %v200
  %v206 = vld [vmem:[%s5] sm:$0x1]
  %v208 = vlaneseq
  %v209 = vshrl.u32 %v208, 7
  %v210 = vsub.s32 0, %v209
  %v211 = vrot.slane %v206, %v210
  %v213 = vadd.f32 %v202, %v211
  %v214 = vadd.f32 %v203, %v211
  %v215 = vadd.f32 %v204, %v211
  %v216 = vadd.f32 %v205, %v211
  %217 = vst.msk [vmem:[%s6] sm:$0xff] %vm36, %v213
  %218 = vst.msk [vmem:[%s6 + $0x8] sm:$0xff] %vm36, %v214
  %219 = vst.msk [vmem:[%s6 + $0x10] sm:$0xff] %vm36, %v215
  %220 = vst.msk [vmem:[%s6 + $0x18] sm:$0xff] %vm36, %v216
  // Predicated region
  $region26: #{contact_attention_simple_forward.18} parent=0 // pred_check
    _
  $region27: #{contact_attention_simple_forward.18} parent=0 // pred_check_branch
    %222 = sbr.rel (0) target = $region29
  $region28: #{contact_attention_simple_forward.18} parent=0 // pred_region
    _
  $region29: #{contact_attention_simple_forward.18} parent=0 // pred_fallthru
    _
  // Predicated region
  $region30: #{contact_attention_simple_forward.18} parent=0 // pred_check
    _
  $region31: #{contact_attention_simple_forward.18} parent=0 // pred_check_branch
    %224 = sbr.rel (0) target = $region33
  $region32: #{contact_attention_simple_forward.18} parent=0 // pred_region
    _
  $region33: #{contact_attention_simple_forward.18} parent=0 // pred_fallthru
    _

// kernel: contact_attention_simple_forward.28
$region0: #{contact_attention_simple_forward.28}
  #allocation0 [shape = 'u32[]', space=smem, size = 0x4, offset = 0x4, fixed_abs, tag = 'smem constant byte address 0x4 - core index']
  #allocation1 [shape = 'u32[144,128]{1,0:T(1,128)}', space=vmem, size = 0x12000, scoped, tag = 'internal scratch']
  %s0 = inlined_call_operand.vmem [shape: f32[32,24], index: 0, kind: input, shape index: {}]
  %s1 = inlined_call_operand.vmem [shape: f32[24,16], index: 1, kind: input, shape index: {}]
  %s2 = inlined_call_operand.vmem [shape: f32[1,16], index: 2, kind: input, shape index: {}]
  %s3 = inlined_call_operand.vmem [shape: f32[32,16], index: 3, kind: output, shape index: {}]
  %s4 = sld [smem:[#allocation0]]
  $region22: #{contact_attention_simple_forward.28} parent=0
    _
  %s6 = ssub.s32 1, %s4
  %s7 = scalar_select 0, %s6, %s4
  // Predicated region
  $region2: #{contact_attention_simple_forward.28} parent=0 // pred_check
    _
  $region3: #{contact_attention_simple_forward.28} parent=0 // pred_check_branch
    %9 = sbr.rel (0) target = $region5
  $region4: #{contact_attention_simple_forward.28} parent=0 // pred_region
    _
  $region5: #{contact_attention_simple_forward.28} parent=0 // pred_fallthru
    _
  // Predicated region
  $region6: #{contact_attention_simple_forward.28} parent=0 // pred_check
    _
  $region7: #{contact_attention_simple_forward.28} parent=0 // pred_check_branch
    %11 = sbr.rel (0) target = $region9
  $region8: #{contact_attention_simple_forward.28} parent=0 // pred_region
    _
  $region9: #{contact_attention_simple_forward.28} parent=0 // pred_fallthru
    _
  // Predicated region
  $region10: #{contact_attention_simple_forward.28} parent=0 // pred_check
    _
  $region11: #{contact_attention_simple_forward.28} parent=0 // pred_check_branch
    %13 = sbr.rel (0) target = $region13
  $region12: #{contact_attention_simple_forward.28} parent=0 // pred_region
    _
  $region13: #{contact_attention_simple_forward.28} parent=0 // pred_fallthru
    _
  %v14 = vld [vmem:[%s0] sm:$0xff]
  %v15 = vld [vmem:[%s0 + $0x8] sm:$0xff]
  %v16 = vld [vmem:[%s0 + $0x10] sm:$0xff]
  %v17 = vld [vmem:[%s0 + $0x18] sm:$0xff]
  %v18 = vld [vmem:[%s1] sm:$0xff]
  %v19 = vld [vmem:[%s1 + $0x8] sm:$0xff]
  %v20 = vld [vmem:[%s1 + $0x10] sm:$0xff]
  %v21 = vld [vmem:[%s2] sm:$0x1]
  %v23 = vlaneseq
  %v24 = vshrl.u32 %v23, 7
  %v25 = vsub.s32 0, %v24
  %v26 = vrot.slane %v21, %v25
  %vm28 = vcmask 195584
  %v30 = vsel %vm28, %v14, 0
  %v33 = vsel %vm28, %v15, 0
  %v36 = vsel %vm28, %v16, 0
  %v39 = vsel %vm28, %v17, 0
  %41 = vmatprep.subr.mxu0 0.0
  %42 = vmatpush1.msra.mxu0 0.0
  %43 = vmatprep.subr.mxu0 0.0
  %44 = vmatpush1.msra.mxu0 0.0
  %45 = vmatprep.subr.mxu0 0.0
  %46 = vmatpush1.msra.mxu0 0.0
  %47 = vmatprep.subr.mxu0 0.0
  %48 = vmatpush1.msra.mxu0 0.0
  %49 = vmatprep.subr.mxu0 0.0
  %50 = vmatpush1.msra.mxu0 0.0
  %51 = vmatprep.subr.mxu0 0.0
  %52 = vmatpush1.msra.mxu0 0.0
  %53 = vmatprep.subr.mxu0 0.0
  %54 = vmatpush1.msra.mxu0 0.0
  %55 = vmatprep.subr.mxu0 0.0
  %56 = vmatpush1.msra.mxu0 0.0
  %57 = vmatprep.subr.mxu0 0.0
  %58 = vmatpush1.msra.mxu0 0.0
  %59 = vmatprep.subr.mxu0 0.0
  %60 = vmatpush1.msra.mxu0 0.0
  %61 = vmatprep.subr.mxu0 0.0
  %62 = vmatpush1.msra.mxu0 0.0
  %63 = vmatprep.subr.mxu0 0.0
  %64 = vmatpush1.msra.mxu0 0.0
  %65 = vmatprep.subr.mxu0 0.0
  %66 = vmatpush1.msra.mxu0 0.0
  %67 = vmatprep.subr.mxu0 0.0
  %68 = vmatpush1.msra.mxu0 %v20
  %69 = vmatprep.subr.mxu0 0.0
  %70 = vmatpush1.msra.mxu0 %v19
  %71 = vmatprep.subr.mxu0 0.0
  %72 = vmatpush1.msra.mxu0 %v18
  %73 = vmatprep.subr.mxu0 0.0
  %74 = vmatpush2.msra.mxu0 0.0
  %75 = vmatprep.subr.mxu0 0.0
  %76 = vmatpush2.msra.mxu0 0.0
  %77 = vmatprep.subr.mxu0 0.0
  %78 = vmatpush2.msra.mxu0 0.0
  %79 = vmatprep.subr.mxu0 0.0
  %80 = vmatpush2.msra.mxu0 0.0
  %81 = vmatprep.subr.mxu0 0.0
  %82 = vmatpush2.msra.mxu0 0.0
  %83 = vmatprep.subr.mxu0 0.0
  %84 = vmatpush2.msra.mxu0 0.0
  %85 = vmatprep.subr.mxu0 0.0
  %86 = vmatpush2.msra.mxu0 0.0
  %87 = vmatprep.subr.mxu0 0.0
  %88 = vmatpush2.msra.mxu0 0.0
  %89 = vmatprep.subr.mxu0 0.0
  %90 = vmatpush2.msra.mxu0 0.0
  %91 = vmatprep.subr.mxu0 0.0
  %92 = vmatpush2.msra.mxu0 0.0
  %93 = vmatprep.subr.mxu0 0.0
  %94 = vmatpush2.msra.mxu0 0.0
  %95 = vmatprep.subr.mxu0 0.0
  %96 = vmatpush2.msra.mxu0 0.0
  %97 = vmatprep.subr.mxu0 0.0
  %98 = vmatpush2.msra.mxu0 0.0
  %99 = vmatprep.subr.mxu0 0.0
  %100 = vmatpush2.msra.mxu0 0.0
  %101 = vmatprep.subr.mxu0 0.0
  %102 = vmatpush2.msra.mxu0 0.0
  %103 = vmatprep.subr.mxu0 0.0
  %104 = vmatpush2.msra.mxu0 0.0
  %105 = vmatprep.mubr.f32.mxu0 0.0
  %106 = vmatmul.mubr.f32.gmra.mxu0 %v30
  %v107 = vpop.f32.mrf.mxu0
  %v108 = vadd.f32 %v26, %v107
  %v109 = vpop.f32.mrf.mxu0
  %110 = vmatprep.mubr.f32.mxu0 0.0
  %111 = vmatmul.mubr.f32.gmra.mxu0 %v33
  %v112 = vpop.f32.mrf.mxu0
  %v113 = vadd.f32 %v26, %v112
  %v114 = vpop.f32.mrf.mxu0
  %115 = vmatprep.mubr.f32.mxu0 0.0
  %116 = vmatmul.mubr.f32.gmra.mxu0 %v36
  %v117 = vpop.f32.mrf.mxu0
  %v118 = vadd.f32 %v26, %v117
  %v119 = vpop.f32.mrf.mxu0
  %120 = vmatprep.mubr.f32.mxu0 0.0
  %121 = vmatmul.mubr.f32.gmra.mxu0 %v39
  %v122 = vpop.f32.mrf.mxu0
  %v123 = vadd.f32 %v26, %v122
  %v124 = vpop.f32.mrf.mxu0
  %125 = vdwg.mxu0
  %vm126 = vcmask 130048
  %127 = vst.msk [vmem:[%s3] sm:$0xff] %vm126, %v108
  %128 = vst.msk [vmem:[%s3 + $0x8] sm:$0xff] %vm126, %v113
  %129 = vst.msk [vmem:[%s3 + $0x10] sm:$0xff] %vm126, %v118
  %130 = vst.msk [vmem:[%s3 + $0x18] sm:$0xff] %vm126, %v123
  // Predicated region
  $region14: #{contact_attention_simple_forward.28} parent=0 // pred_check
    _
  $region15: #{contact_attention_simple_forward.28} parent=0 // pred_check_branch
    %132 = sbr.rel (0) target = $region17
  $region16: #{contact_attention_simple_forward.28} parent=0 // pred_region
    _
  $region17: #{contact_attention_simple_forward.28} parent=0 // pred_fallthru
    _
  // Predicated region
  $region18: #{contact_attention_simple_forward.28} parent=0 // pred_check
    _
  $region19: #{contact_attention_simple_forward.28} parent=0 // pred_check_branch
    %134 = sbr.rel (0) target = $region21
  $region20: #{contact_attention_simple_forward.28} parent=0 // pred_region
    _
  $region21: #{contact_attention_simple_forward.28} parent=0 // pred_fallthru
    _

// kernel: contact_attention_simple_forward.19
$region0: #{contact_attention_simple_forward.19}
  #allocation0 [shape = 'u32[]', space=smem, size = 0x4, offset = 0x4, fixed_abs, tag = 'smem constant byte address 0x4 - core index']
  #allocation1 [shape = 'u32[144,128]{1,0:T(1,128)}', space=vmem, size = 0x12000, scoped, tag = 'internal scratch']
  %s0 = inlined_call_operand.vmem [shape: f32[32,16], index: 0, kind: input, shape index: {}]
  %s1 = inlined_call_operand.vmem [shape: f32[16,2048], index: 1, kind: input, shape index: {}]
  %s2 = inlined_call_operand.vmem [shape: f32[1,2048], index: 2, kind: input, shape index: {}]
  %s3 = inlined_call_operand.vmem [shape: f32[2048,16], index: 3, kind: input, shape index: {}]
  %s4 = inlined_call_operand.vmem [shape: f32[1,16], index: 4, kind: input, shape index: {}]
  %s5 = inlined_call_operand.vmem [shape: f32[1,16], index: 5, kind: input, shape index: {}]
  %s6 = inlined_call_operand.vmem [shape: f32[1,16], index: 6, kind: input, shape index: {}]
  %s7 = inlined_call_operand.vmem [shape: f32[32,16], index: 7, kind: output, shape index: {}]
  %s8 = sld [smem:[#allocation0]]
  $region38: #{contact_attention_simple_forward.19} parent=0
    _
  %s10 = ssub.s32 1, %s8
  %s11 = scalar_select 0, %s10, %s8
  // Predicated region
  $region2: #{contact_attention_simple_forward.19} parent=0 // pred_check
    _
  $region3: #{contact_attention_simple_forward.19} parent=0 // pred_check_branch
    %13 = sbr.rel (0) target = $region5
  $region4: #{contact_attention_simple_forward.19} parent=0 // pred_region
    _
  $region5: #{contact_attention_simple_forward.19} parent=0 // pred_fallthru
    _
  // Predicated region
  $region6: #{contact_attention_simple_forward.19} parent=0 // pred_check
    _
  $region7: #{contact_attention_simple_forward.19} parent=0 // pred_check_branch
    %15 = sbr.rel (0) target = $region9
  $region8: #{contact_attention_simple_forward.19} parent=0 // pred_region
    _
  $region9: #{contact_attention_simple_forward.19} parent=0 // pred_fallthru
    _
  // Predicated region
  $region10: #{contact_attention_simple_forward.19} parent=0 // pred_check
    _
  $region11: #{contact_attention_simple_forward.19} parent=0 // pred_check_branch
    %17 = sbr.rel (0) target = $region13
  $region12: #{contact_attention_simple_forward.19} parent=0 // pred_region
    _
  $region13: #{contact_attention_simple_forward.19} parent=0 // pred_fallthru
    _
  // Predicated region
  $region14: #{contact_attention_simple_forward.19} parent=0 // pred_check
    _
  $region15: #{contact_attention_simple_forward.19} parent=0 // pred_check_branch
    %19 = sbr.rel (0) target = $region17
  $region16: #{contact_attention_simple_forward.19} parent=0 // pred_region
    _
  $region17: #{contact_attention_simple_forward.19} parent=0 // pred_fallthru
    _
  // Predicated region
  $region18: #{contact_attention_simple_forward.19} parent=0 // pred_check
    _
  $region19: #{contact_attention_simple_forward.19} parent=0 // pred_check_branch
    %21 = sbr.rel (0) target = $region21
  $region20: #{contact_attention_simple_forward.19} parent=0 // pred_region
    _
  $region21: #{contact_attention_simple_forward.19} parent=0 // pred_fallthru
    _
  // Predicated region
  $region22: #{contact_attention_simple_forward.19} parent=0 // pred_check
    _
  $region23: #{contact_attention_simple_forward.19} parent=0 // pred_check_branch
    %23 = sbr.rel (0) target = $region25
  $region24: #{contact_attention_simple_forward.19} parent=0 // pred_region
    _
  $region25: #{contact_attention_simple_forward.19} parent=0 // pred_fallthru
    _
  // Predicated region
  $region26: #{contact_attention_simple_forward.19} parent=0 // pred_check
    _
  $region27: #{contact_attention_simple_forward.19} parent=0 // pred_check_branch
    %25 = sbr.rel (0) target = $region29
  $region28: #{contact_attention_simple_forward.19} parent=0 // pred_region
    _
  $region29: #{contact_attention_simple_forward.19} parent=0 // pred_fallthru
    _
  %v26 = vld [vmem:[%s0] sm:$0xff]
  %v27 = vld [vmem:[%s0 + $0x8] sm:$0xff]
  %v28 = vld [vmem:[%s0 + $0x10] sm:$0xff]
  %v29 = vld [vmem:[%s0 + $0x18] sm:$0xff]
  %v30 = vld [vmem:[%s1] sm:$0xff]
  %v31 = vld [vmem:[%s1 + $0x8] sm:$0xff]
  %v32 = vld [vmem:[%s1 + $0x10] sm:$0xff]
  %v33 = vld [vmem:[%s1 + $0x18] sm:$0xff]
  %v34 = vld [vmem:[%s1 + $0x20] sm:$0xff]
  %v35 = vld [vmem:[%s1 + $0x28] sm:$0xff]
  %v36 = vld [vmem:[%s1 + $0x30] sm:$0xff]
  %v37 = vld [vmem:[%s1 + $0x38] sm:$0xff]
  %v38 = vld [vmem:[%s1 + $0x40] sm:$0xff]
  %v39 = vld [vmem:[%s1 + $0x48] sm:$0xff]
  %v40 = vld [vmem:[%s1 + $0x50] sm:$0xff]
  %v41 = vld [vmem:[%s1 + $0x58] sm:$0xff]
  %v42 = vld [vmem:[%s1 + $0x60] sm:$0xff]
  %v43 = vld [vmem:[%s1 + $0x68] sm:$0xff]
  %v44 = vld [vmem:[%s1 + $0x70] sm:$0xff]
  %v45 = vld [vmem:[%s1 + $0x78] sm:$0xff]
  %v46 = vld [vmem:[%s1 + $0x80] sm:$0xff]
  %v47 = vld [vmem:[%s1 + $0x88] sm:$0xff]
  %v48 = vld [vmem:[%s1 + $0x90] sm:$0xff]
  %v49 = vld [vmem:[%s1 + $0x98] sm:$0xff]
  %v50 = vld [vmem:[%s1 + $0xa0] sm:$0xff]
  %v51 = vld [vmem:[%s1 + $0xa8] sm:$0xff]
  %v52 = vld [vmem:[%s1 + $0xb0] sm:$0xff]
  %v53 = vld [vmem:[%s1 + $0xb8] sm:$0xff]
  %v54 = vld [vmem:[%s1 + $0xc0] sm:$0xff]
  %v55 = vld [vmem:[%s1 + $0xc8] sm:$0xff]
  %v56 = vld [vmem:[%s1 + $0xd0] sm:$0xff]
  %v57 = vld [vmem:[%s1 + $0xd8] sm:$0xff]
  %v58 = vld [vmem:[%s1 + $0xe0] sm:$0xff]
  %v59 = vld [vmem:[%s1 + $0xe8] sm:$0xff]
  %v60 = vld [vmem:[%s1 + $0xf0] sm:$0xff]
  %v61 = vld [vmem:[%s1 + $0xf8] sm:$0xff]
  %v62 = vld [vmem:[%s2] sm:$0xff]
  %v63 = vld [vmem:[%s2 + $0x8] sm:$0xff]
  %v66 = vlaneseq
  %v67 = vshrl.u32 %v66, 7
  %v68 = vsub.s32 0, %v67
  %v69 = vrot.slane %v62, %v68
  %v70 = vlaneseq
  %v71 = vshrl.u32 %v70, 7
  %v72 = vsub.s32 1, %v71
  %v73 = vrot.slane %v62, %v72
  %v74 = vlaneseq
  %v75 = vshrl.u32 %v74, 7
  %v76 = vsub.s32 2, %v75
  %v77 = vrot.slane %v62, %v76
  %v78 = vlaneseq
  %v79 = vshrl.u32 %v78, 7
  %v80 = vsub.s32 3, %v79
  %v81 = vrot.slane %v62, %v80
  %v82 = vlaneseq
  %v83 = vshrl.u32 %v82, 7
  %v84 = vsub.s32 4, %v83
  %v85 = vrot.slane %v62, %v84
  %v86 = vlaneseq
  %v87 = vshrl.u32 %v86, 7
  %v88 = vsub.s32 5, %v87
  %v89 = vrot.slane %v62, %v88
  %v90 = vlaneseq
  %v91 = vshrl.u32 %v90, 7
  %v92 = vsub.s32 6, %v91
  %v93 = vrot.slane %v62, %v92
  %v94 = vlaneseq
  %v95 = vshrl.u32 %v94, 7
  %v96 = vsub.s32 7, %v95
  %v97 = vrot.slane %v62, %v96
  %v98 = vlaneseq
  %v99 = vshrl.u32 %v98, 7
  %v100 = vsub.s32 0, %v99
  %v101 = vrot.slane %v63, %v100
  %v102 = vlaneseq
  %v103 = vshrl.u32 %v102, 7
  %v104 = vsub.s32 1, %v103
  %v105 = vrot.slane %v63, %v104
  %v106 = vlaneseq
  %v107 = vshrl.u32 %v106, 7
  %v108 = vsub.s32 2, %v107
  %v109 = vrot.slane %v63, %v108
  %v110 = vlaneseq
  %v111 = vshrl.u32 %v110, 7
  %v112 = vsub.s32 3, %v111
  %v113 = vrot.slane %v63, %v112
  %v114 = vlaneseq
  %v115 = vshrl.u32 %v114, 7
  %v116 = vsub.s32 4, %v115
  %v117 = vrot.slane %v63, %v116
  %v118 = vlaneseq
  %v119 = vshrl.u32 %v118, 7
  %v120 = vsub.s32 5, %v119
  %v121 = vrot.slane %v63, %v120
  %v122 = vlaneseq
  %v123 = vshrl.u32 %v122, 7
  %v124 = vsub.s32 6, %v123
  %v125 = vrot.slane %v63, %v124
  %v126 = vlaneseq
  %v127 = vshrl.u32 %v126, 7
  %v128 = vsub.s32 7, %v127
  %v129 = vrot.slane %v63, %v128
  %vm146 = vcmask 130048
  %v148 = vsel %vm146, %v26, 0
  %v151 = vsel %vm146, %v27, 0
  %v154 = vsel %vm146, %v28, 0
  %v157 = vsel %vm146, %v29, 0
  %159 = vmatprep.subr.mxu0 0.0
  %160 = vmatpush1.msra.mxu0 0.0
  %161 = vmatprep.subr.mxu0 0.0
  %162 = vmatpush1.msra.mxu0 0.0
  %163 = vmatprep.subr.mxu0 0.0
  %164 = vmatpush1.msra.mxu0 0.0
  %165 = vmatprep.subr.mxu0 0.0
  %166 = vmatpush1.msra.mxu0 0.0
  %167 = vmatprep.subr.mxu0 0.0
  %168 = vmatpush1.msra.mxu0 0.0
  %169 = vmatprep.subr.mxu0 0.0
  %170 = vmatpush1.msra.mxu0 0.0
  %171 = vmatprep.subr.mxu0 0.0
  %172 = vmatpush1.msra.mxu0 0.0
  %173 = vmatprep.subr.mxu0 0.0
  %174 = vmatpush1.msra.mxu0 0.0
  %175 = vmatprep.subr.mxu0 0.0
  %176 = vmatpush1.msra.mxu0 0.0
  %177 = vmatprep.subr.mxu0 0.0
  %178 = vmatpush1.msra.mxu0 0.0
  %179 = vmatprep.subr.mxu0 0.0
  %180 = vmatpush1.msra.mxu0 0.0
  %181 = vmatprep.subr.mxu0 0.0
  %182 = vmatpush1.msra.mxu0 0.0
  %183 = vmatprep.subr.mxu0 0.0
  %184 = vmatpush1.msra.mxu0 0.0
  %185 = vmatprep.subr.mxu0 0.0
  %186 = vmatpush1.msra.mxu0 0.0
  %187 = vmatprep.subr.mxu0 %v47
  %188 = vmatpush1.msra.mxu0 %v46
  %189 = vmatprep.subr.mxu0 %v31
  %190 = vmatpush1.msra.mxu0 %v30
  %191 = vmatprep.subr.mxu0 0.0
  %192 = vmatpush2.msra.mxu0 0.0
  %193 = vmatprep.subr.mxu0 0.0
  %194 = vmatpush2.msra.mxu0 0.0
  %195 = vmatprep.subr.mxu0 0.0
  %196 = vmatpush2.msra.mxu0 0.0
  %197 = vmatprep.subr.mxu0 0.0
  %198 = vmatpush2.msra.mxu0 0.0
  %199 = vmatprep.subr.mxu0 0.0
  %200 = vmatpush2.msra.mxu0 0.0
  %201 = vmatprep.subr.mxu0 0.0
  %202 = vmatpush2.msra.mxu0 0.0
  %203 = vmatprep.subr.mxu0 0.0
  %204 = vmatpush2.msra.mxu0 0.0
  %205 = vmatprep.subr.mxu0 0.0
  %206 = vmatpush2.msra.mxu0 0.0
  %207 = vmatprep.subr.mxu0 0.0
  %208 = vmatpush2.msra.mxu0 0.0
  %209 = vmatprep.subr.mxu0 0.0
  %210 = vmatpush2.msra.mxu0 0.0
  %211 = vmatprep.subr.mxu0 0.0
  %212 = vmatpush2.msra.mxu0 0.0
  %213 = vmatprep.subr.mxu0 0.0
  %214 = vmatpush2.msra.mxu0 0.0
  %215 = vmatprep.subr.mxu0 0.0
  %216 = vmatpush2.msra.mxu0 0.0
  %217 = vmatprep.subr.mxu0 0.0
  %218 = vmatpush2.msra.mxu0 0.0
  %219 = vmatprep.subr.mxu0 0.0
  %220 = vmatpush2.msra.mxu0 0.0
  %221 = vmatprep.subr.mxu0 0.0
  %222 = vmatpush2.msra.mxu0 0.0
  %223 = vmatprep.mubr.f32.mxu0 0.0
  %224 = vmatmul.mubr.f32.gmra.mxu0 %v148
  %v225 = vpop.f32.mrf.mxu0
  %v226 = vadd.f32 %v69, %v225
  %v227 = vpop.f32.mrf.mxu0
  %v228 = vadd.f32 %v73, %v227
  %229 = vmatprep.mubr.f32.mxu0 0.0
  %230 = vmatmul.mubr.f32.gmra.mxu0 %v151
  %v231 = vpop.f32.mrf.mxu0
  %v232 = vadd.f32 %v69, %v231
  %v233 = vpop.f32.mrf.mxu0
  %v234 = vadd.f32 %v73, %v233
  %235 = vmatprep.mubr.f32.mxu0 0.0
  %236 = vmatmul.mubr.f32.gmra.mxu0 %v154
  %v237 = vpop.f32.mrf.mxu0
  %v238 = vadd.f32 %v69, %v237
  %v239 = vpop.f32.mrf.mxu0
  %v240 = vadd.f32 %v73, %v239
  %241 = vmatprep.mubr.f32.mxu0 0.0
  %242 = vmatmul.mubr.f32.gmra.mxu0 %v157
  %v243 = vpop.f32.mrf.mxu0
  %v244 = vadd.f32 %v69, %v243
  %v245 = vpop.f32.mrf.mxu0
  %v246 = vadd.f32 %v73, %v245
  %247 = vdwg.mxu0
  %248 = vmatprep.subr.mxu0 0.0
  %249 = vmatpush1.msra.mxu0 0.0
  %250 = vmatprep.subr.mxu0 0.0
  %251 = vmatpush1.msra.mxu0 0.0
  %252 = vmatprep.subr.mxu0 0.0
  %253 = vmatpush1.msra.mxu0 0.0
  %254 = vmatprep.subr.mxu0 0.0
  %255 = vmatpush1.msra.mxu0 0.0
  %256 = vmatprep.subr.mxu0 0.0
  %257 = vmatpush1.msra.mxu0 0.0
  %258 = vmatprep.subr.mxu0 0.0
  %259 = vmatpush1.msra.mxu0 0.0
  %260 = vmatprep.subr.mxu0 0.0
  %261 = vmatpush1.msra.mxu0 0.0
  %262 = vmatprep.subr.mxu0 0.0
  %263 = vmatpush1.msra.mxu0 0.0
  %264 = vmatprep.subr.mxu0 0.0
  %265 = vmatpush1.msra.mxu0 0.0
  %266 = vmatprep.subr.mxu0 0.0
  %267 = vmatpush1.msra.mxu0 0.0
  %268 = vmatprep.subr.mxu0 0.0
  %269 = vmatpush1.msra.mxu0 0.0
  %270 = vmatprep.subr.mxu0 0.0
  %271 = vmatpush1.msra.mxu0 0.0
  %272 = vmatprep.subr.mxu0 0.0
  %273 = vmatpush1.msra.mxu0 0.0
  %274 = vmatprep.subr.mxu0 0.0
  %275 = vmatpush1.msra.mxu0 0.0
  %276 = vmatprep.subr.mxu0 %v49
  %277 = vmatpush1.msra.mxu0 %v48
  %278 = vmatprep.subr.mxu0 %v33
  %279 = vmatpush1.msra.mxu0 %v32
  %280 = vmatprep.subr.mxu0 0.0
  %281 = vmatpush2.msra.mxu0 0.0
  %282 = vmatprep.subr.mxu0 0.0
  %283 = vmatpush2.msra.mxu0 0.0
  %284 = vmatprep.subr.mxu0 0.0
  %285 = vmatpush2.msra.mxu0 0.0
  %286 = vmatprep.subr.mxu0 0.0
  %287 = vmatpush2.msra.mxu0 0.0
  %288 = vmatprep.subr.mxu0 0.0
  %289 = vmatpush2.msra.mxu0 0.0
  %290 = vmatprep.subr.mxu0 0.0
  %291 = vmatpush2.msra.mxu0 0.0
  %292 = vmatprep.subr.mxu0 0.0
  %293 = vmatpush2.msra.mxu0 0.0
  %294 = vmatprep.subr.mxu0 0.0
  %295 = vmatpush2.msra.mxu0 0.0
  %296 = vmatprep.subr.mxu0 0.0
  %297 = vmatpush2.msra.mxu0 0.0
  %298 = vmatprep.subr.mxu0 0.0
  %299 = vmatpush2.msra.mxu0 0.0
  %300 = vmatprep.subr.mxu0 0.0
  %301 = vmatpush2.msra.mxu0 0.0
  %302 = vmatprep.subr.mxu0 0.0
  %303 = vmatpush2.msra.mxu0 0.0
  %304 = vmatprep.subr.mxu0 0.0
  %305 = vmatpush2.msra.mxu0 0.0
  %306 = vmatprep.subr.mxu0 0.0
  %307 = vmatpush2.msra.mxu0 0.0
  %308 = vmatprep.subr.mxu0 0.0
  %309 = vmatpush2.msra.mxu0 0.0
  %310 = vmatprep.subr.mxu0 0.0
  %311 = vmatpush2.msra.mxu0 0.0
  %312 = vmatprep.mubr.f32.mxu0 0.0
  %313 = vmatmul.mubr.f32.gmra.mxu0 %v148
  %v314 = vpop.f32.mrf.mxu0
  %v315 = vadd.f32 %v77, %v314
  %v316 = vpop.f32.mrf.mxu0
  %v317 = vadd.f32 %v81, %v316
  %318 = vmatprep.mubr.f32.mxu0 0.0
  %319 = vmatmul.mubr.f32.gmra.mxu0 %v151
  %v320 = vpop.f32.mrf.mxu0
  %v321 = vadd.f32 %v77, %v320
  %v322 = vpop.f32.mrf.mxu0
  %v323 = vadd.f32 %v81, %v322
  %324 = vmatprep.mubr.f32.mxu0 0.0
  %325 = vmatmul.mubr.f32.gmra.mxu0 %v154
  %v326 = vpop.f32.mrf.mxu0
  %v327 = vadd.f32 %v77, %v326
  %v328 = vpop.f32.mrf.mxu0
  %v329 = vadd.f32 %v81, %v328
  %330 = vmatprep.mubr.f32.mxu0 0.0
  %331 = vmatmul.mubr.f32.gmra.mxu0 %v157
  %v332 = vpop.f32.mrf.mxu0
  %v333 = vadd.f32 %v77, %v332
  %v334 = vpop.f32.mrf.mxu0
  %v335 = vadd.f32 %v81, %v334
  %336 = vdwg.mxu0
  %337 = vmatprep.subr.mxu0 0.0
  %338 = vmatpush1.msra.mxu0 0.0
  %339 = vmatprep.subr.mxu0 0.0
  %340 = vmatpush1.msra.mxu0 0.0
  %341 = vmatprep.subr.mxu0 0.0
  %342 = vmatpush1.msra.mxu0 0.0
  %343 = vmatprep.subr.mxu0 0.0
  %344 = vmatpush1.msra.mxu0 0.0
  %345 = vmatprep.subr.mxu0 0.0
  %346 = vmatpush1.msra.mxu0 0.0
  %347 = vmatprep.subr.mxu0 0.0
  %348 = vmatpush1.msra.mxu0 0.0
  %349 = vmatprep.subr.mxu0 0.0
  %350 = vmatpush1.msra.mxu0 0.0
  %351 = vmatprep.subr.mxu0 0.0
  %352 = vmatpush1.msra.mxu0 0.0
  %353 = vmatprep.subr.mxu0 0.0
  %354 = vmatpush1.msra.mxu0 0.0
  %355 = vmatprep.subr.mxu0 0.0
  %356 = vmatpush1.msra.mxu0 0.0
  %357 = vmatprep.subr.mxu0 0.0
  %358 = vmatpush1.msra.mxu0 0.0
  %359 = vmatprep.subr.mxu0 0.0
  %360 = vmatpush1.msra.mxu0 0.0
  %361 = vmatprep.subr.mxu0 0.0
  %362 = vmatpush1.msra.mxu0 0.0
  %363 = vmatprep.subr.mxu0 0.0
  %364 = vmatpush1.msra.mxu0 0.0
  %365 = vmatprep.subr.mxu0 %v51
  %366 = vmatpush1.msra.mxu0 %v50
  %367 = vmatprep.subr.mxu0 %v35
  %368 = vmatpush1.msra.mxu0 %v34
  %369 = vmatprep.subr.mxu0 0.0
  %370 = vmatpush2.msra.mxu0 0.0
  %371 = vmatprep.subr.mxu0 0.0
  %372 = vmatpush2.msra.mxu0 0.0
  %373 = vmatprep.subr.mxu0 0.0
  %374 = vmatpush2.msra.mxu0 0.0
  %375 = vmatprep.subr.mxu0 0.0
  %376 = vmatpush2.msra.mxu0 0.0
  %377 = vmatprep.subr.mxu0 0.0
  %378 = vmatpush2.msra.mxu0 0.0
  %379 = vmatprep.subr.mxu0 0.0
  %380 = vmatpush2.msra.mxu0 0.0
  %381 = vmatprep.subr.mxu0 0.0
  %382 = vmatpush2.msra.mxu0 0.0
  %383 = vmatprep.subr.mxu0 0.0
  %384 = vmatpush2.msra.mxu0 0.0
  %385 = vmatprep.subr.mxu0 0.0
  %386 = vmatpush2.msra.mxu0 0.0
  %387 = vmatprep.subr.mxu0 0.0
  %388 = vmatpush2.msra.mxu0 0.0
  %389 = vmatprep.subr.mxu0 0.0
  %390 = vmatpush2.msra.mxu0 0.0
  %391 = vmatprep.subr.mxu0 0.0
  %392 = vmatpush2.msra.mxu0 0.0
  %393 = vmatprep.subr.mxu0 0.0
  %394 = vmatpush2.msra.mxu0 0.0
  %395 = vmatprep.subr.mxu0 0.0
  %396 = vmatpush2.msra.mxu0 0.0
  %397 = vmatprep.subr.mxu0 0.0
  %398 = vmatpush2.msra.mxu0 0.0
  %399 = vmatprep.subr.mxu0 0.0
  %400 = vmatpush2.msra.mxu0 0.0
  %401 = vmatprep.mubr.f32.mxu0 0.0
  %402 = vmatmul.mubr.f32.gmra.mxu0 %v148
  %v403 = vpop.f32.mrf.mxu0
  %v404 = vadd.f32 %v85, %v403
  %v405 = vpop.f32.mrf.mxu0
  %v406 = vadd.f32 %v89, %v405
  %407 = vmatprep.mubr.f32.mxu0 0.0
  %408 = vmatmul.mubr.f32.gmra.mxu0 %v151
  %v409 = vpop.f32.mrf.mxu0
  %v410 = vadd.f32 %v85, %v409
  %v411 = vpop.f32.mrf.mxu0
  %v412 = vadd.f32 %v89, %v411
  %413 = vmatprep.mubr.f32.mxu0 0.0
  %414 = vmatmul.mubr.f32.gmra.mxu0 %v154
  %v415 = vpop.f32.mrf.mxu0
  %v416 = vadd.f32 %v85, %v415
  %v417 = vpop.f32.mrf.mxu0
  %v418 = vadd.f32 %v89, %v417
  %419 = vmatprep.mubr.f32.mxu0 0.0
  %420 = vmatmul.mubr.f32.gmra.mxu0 %v157
  %v421 = vpop.f32.mrf.mxu0
  %v422 = vadd.f32 %v85, %v421
  %v423 = vpop.f32.mrf.mxu0
  %v424 = vadd.f32 %v89, %v423
  %425 = vdwg.mxu0
  %426 = vmatprep.subr.mxu0 0.0
  %427 = vmatpush1.msra.mxu0 0.0
  %428 = vmatprep.subr.mxu0 0.0
  %429 = vmatpush1.msra.mxu0 0.0
  %430 = vmatprep.subr.mxu0 0.0
  %431 = vmatpush1.msra.mxu0 0.0
  %432 = vmatprep.subr.mxu0 0.0
  %433 = vmatpush1.msra.mxu0 0.0
  %434 = vmatprep.subr.mxu0 0.0
  %435 = vmatpush1.msra.mxu0 0.0
  %436 = vmatprep.subr.mxu0 0.0
  %437 = vmatpush1.msra.mxu0 0.0
  %438 = vmatprep.subr.mxu0 0.0
  %439 = vmatpush1.msra.mxu0 0.0
  %440 = vmatprep.subr.mxu0 0.0
  %441 = vmatpush1.msra.mxu0 0.0
  %442 = vmatprep.subr.mxu0 0.0
  %443 = vmatpush1.msra.mxu0 0.0
  %444 = vmatprep.subr.mxu0 0.0
  %445 = vmatpush1.msra.mxu0 0.0
  %446 = vmatprep.subr.mxu0 0.0
  %447 = vmatpush1.msra.mxu0 0.0
  %448 = vmatprep.subr.mxu0 0.0
  %449 = vmatpush1.msra.mxu0 0.0
  %450 = vmatprep.subr.mxu0 0.0
  %451 = vmatpush1.msra.mxu0 0.0
  %452 = vmatprep.subr.mxu0 0.0
  %453 = vmatpush1.msra.mxu0 0.0
  %454 = vmatprep.subr.mxu0 %v53
  %455 = vmatpush1.msra.mxu0 %v52
  %456 = vmatprep.subr.mxu0 %v37
  %457 = vmatpush1.msra.mxu0 %v36
  %458 = vmatprep.subr.mxu0 0.0
  %459 = vmatpush2.msra.mxu0 0.0
  %460 = vmatprep.subr.mxu0 0.0
  %461 = vmatpush2.msra.mxu0 0.0
  %462 = vmatprep.subr.mxu0 0.0
  %463 = vmatpush2.msra.mxu0 0.0
  %464 = vmatprep.subr.mxu0 0.0
  %465 = vmatpush2.msra.mxu0 0.0
  %466 = vmatprep.subr.mxu0 0.0
  %467 = vmatpush2.msra.mxu0 0.0
  %468 = vmatprep.subr.mxu0 0.0
  %469 = vmatpush2.msra.mxu0 0.0
  %470 = vmatprep.subr.mxu0 0.0
  %471 = vmatpush2.msra.mxu0 0.0
  %472 = vmatprep.subr.mxu0 0.0
  %473 = vmatpush2.msra.mxu0 0.0
  %474 = vmatprep.subr.mxu0 0.0
  %475 = vmatpush2.msra.mxu0 0.0
  %476 = vmatprep.subr.mxu0 0.0
  %477 = vmatpush2.msra.mxu0 0.0
  %478 = vmatprep.subr.mxu0 0.0
  %479 = vmatpush2.msra.mxu0 0.0
  %480 = vmatprep.subr.mxu0 0.0
  %481 = vmatpush2.msra.mxu0 0.0
  %482 = vmatprep.subr.mxu0 0.0
  %483 = vmatpush2.msra.mxu0 0.0
  %484 = vmatprep.subr.mxu0 0.0
  %485 = vmatpush2.msra.mxu0 0.0
  %486 = vmatprep.subr.mxu0 0.0
  %487 = vmatpush2.msra.mxu0 0.0
  %488 = vmatprep.subr.mxu0 0.0
  %489 = vmatpush2.msra.mxu0 0.0
  %490 = vmatprep.mubr.f32.mxu0 0.0
  %491 = vmatmul.mubr.f32.gmra.mxu0 %v148
  %v492 = vpop.f32.mrf.mxu0
  %v493 = vadd.f32 %v93, %v492
  %v494 = vpop.f32.mrf.mxu0
  %v495 = vadd.f32 %v97, %v494
  %496 = vmatprep.mubr.f32.mxu0 0.0
  %497 = vmatmul.mubr.f32.gmra.mxu0 %v151
  %v498 = vpop.f32.mrf.mxu0
  %v499 = vadd.f32 %v93, %v498
  %v500 = vpop.f32.mrf.mxu0
  %v501 = vadd.f32 %v97, %v500
  %502 = vmatprep.mubr.f32.mxu0 0.0
  %503 = vmatmul.mubr.f32.gmra.mxu0 %v154
  %v504 = vpop.f32.mrf.mxu0
  %v505 = vadd.f32 %v93, %v504
  %v506 = vpop.f32.mrf.mxu0
  %v507 = vadd.f32 %v97, %v506
  %508 = vmatprep.mubr.f32.mxu0 0.0
  %509 = vmatmul.mubr.f32.gmra.mxu0 %v157
  %v510 = vpop.f32.mrf.mxu0
  %v511 = vadd.f32 %v93, %v510
  %v512 = vpop.f32.mrf.mxu0
  %v513 = vadd.f32 %v97, %v512
  %514 = vdwg.mxu0
  %515 = vmatprep.subr.mxu0 0.0
  %516 = vmatpush1.msra.mxu0 0.0
  %517 = vmatprep.subr.mxu0 0.0
  %518 = vmatpush1.msra.mxu0 0.0
  %519 = vmatprep.subr.mxu0 0.0
  %520 = vmatpush1.msra.mxu0 0.0
  %521 = vmatprep.subr.mxu0 0.0
  %522 = vmatpush1.msra.mxu0 0.0
  %523 = vmatprep.subr.mxu0 0.0
  %524 = vmatpush1.msra.mxu0 0.0
  %525 = vmatprep.subr.mxu0 0.0
  %526 = vmatpush1.msra.mxu0 0.0
  %527 = vmatprep.subr.mxu0 0.0
  %528 = vmatpush1.msra.mxu0 0.0
  %529 = vmatprep.subr.mxu0 0.0
  %530 = vmatpush1.msra.mxu0 0.0
  %531 = vmatprep.subr.mxu0 0.0
  %532 = vmatpush1.msra.mxu0 0.0
  %533 = vmatprep.subr.mxu0 0.0
  %534 = vmatpush1.msra.mxu0 0.0
  %535 = vmatprep.subr.mxu0 0.0
  %536 = vmatpush1.msra.mxu0 0.0
  %537 = vmatprep.subr.mxu0 0.0
  %538 = vmatpush1.msra.mxu0 0.0
  %539 = vmatprep.subr.mxu0 0.0
  %540 = vmatpush1.msra.mxu0 0.0
  %541 = vmatprep.subr.mxu0 0.0
  %542 = vmatpush1.msra.mxu0 0.0
  %543 = vmatprep.subr.mxu0 %v55
  %544 = vmatpush1.msra.mxu0 %v54
  %545 = vmatprep.subr.mxu0 %v39
  %546 = vmatpush1.msra.mxu0 %v38
  %547 = vmatprep.subr.mxu0 0.0
  %548 = vmatpush2.msra.mxu0 0.0
  %549 = vmatprep.subr.mxu0 0.0
  %550 = vmatpush2.msra.mxu0 0.0
  %551 = vmatprep.subr.mxu0 0.0
  %552 = vmatpush2.msra.mxu0 0.0
  %553 = vmatprep.subr.mxu0 0.0
  %554 = vmatpush2.msra.mxu0 0.0
  %555 = vmatprep.subr.mxu0 0.0
  %556 = vmatpush2.msra.mxu0 0.0
  %557 = vmatprep.subr.mxu0 0.0
  %558 = vmatpush2.msra.mxu0 0.0
  %559 = vmatprep.subr.mxu0 0.0
  %560 = vmatpush2.msra.mxu0 0.0
  %561 = vmatprep.subr.mxu0 0.0
  %562 = vmatpush2.msra.mxu0 0.0
  %563 = vmatprep.subr.mxu0 0.0
  %564 = vmatpush2.msra.mxu0 0.0
  %565 = vmatprep.subr.mxu0 0.0
  %566 = vmatpush2.msra.mxu0 0.0
  %567 = vmatprep.subr.mxu0 0.0
  %568 = vmatpush2.msra.mxu0 0.0
  %569 = vmatprep.subr.mxu0 0.0
  %570 = vmatpush2.msra.mxu0 0.0
  %571 = vmatprep.subr.mxu0 0.0
  %572 = vmatpush2.msra.mxu0 0.0
  %573 = vmatprep.subr.mxu0 0.0
  %574 = vmatpush2.msra.mxu0 0.0
  %575 = vmatprep.subr.mxu0 0.0
  %576 = vmatpush2.msra.mxu0 0.0
  %577 = vmatprep.subr.mxu0 0.0
  %578 = vmatpush2.msra.mxu0 0.0
  %579 = vmatprep.mubr.f32.mxu0 0.0
  %580 = vmatmul.mubr.f32.gmra.mxu0 %v148
  %v581 = vpop.f32.mrf.mxu0
  %v582 = vadd.f32 %v101, %v581
  %v583 = vpop.f32.mrf.mxu0
  %v584 = vadd.f32 %v105, %v583
  %585 = vmatprep.mubr.f32.mxu0 0.0
  %586 = vmatmul.mubr.f32.gmra.mxu0 %v151
  %v587 = vpop.f32.mrf.mxu0
  %v588 = vadd.f32 %v101, %v587
  %v589 = vpop.f32.mrf.mxu0
  %v590 = vadd.f32 %v105, %v589
  %591 = vmatprep.mubr.f32.mxu0 0.0
  %592 = vmatmul.mubr.f32.gmra.mxu0 %v154
  %v593 = vpop.f32.mrf.mxu0
  %v594 = vadd.f32 %v101, %v593
  %v595 = vpop.f32.mrf.mxu0
  %v596 = vadd.f32 %v105, %v595
  %597 = vmatprep.mubr.f32.mxu0 0.0
  %598 = vmatmul.mubr.f32.gmra.mxu0 %v157
  %v599 = vpop.f32.mrf.mxu0
  %v600 = vadd.f32 %v101, %v599
  %v601 = vpop.f32.mrf.mxu0
  %v602 = vadd.f32 %v105, %v601
  %603 = vdwg.mxu0
  %604 = vmatprep.subr.mxu0 0.0
  %605 = vmatpush1.msra.mxu0 0.0
  %606 = vmatprep.subr.mxu0 0.0
  %607 = vmatpush1.msra.mxu0 0.0
  %608 = vmatprep.subr.mxu0 0.0
  %609 = vmatpush1.msra.mxu0 0.0
  %610 = vmatprep.subr.mxu0 0.0
  %611 = vmatpush1.msra.mxu0 0.0
  %612 = vmatprep.subr.mxu0 0.0
  %613 = vmatpush1.msra.mxu0 0.0
  %614 = vmatprep.subr.mxu0 0.0
  %615 = vmatpush1.msra.mxu0 0.0
  %616 = vmatprep.subr.mxu0 0.0
  %617 = vmatpush1.msra.mxu0 0.0
  %618 = vmatprep.subr.mxu0 0.0
  %619 = vmatpush1.msra.mxu0 0.0
  %620 = vmatprep.subr.mxu0 0.0
  %621 = vmatpush1.msra.mxu0 0.0
  %622 = vmatprep.subr.mxu0 0.0
  %623 = vmatpush1.msra.mxu0 0.0
  %624 = vmatprep.subr.mxu0 0.0
  %625 = vmatpush1.msra.mxu0 0.0
  %626 = vmatprep.subr.mxu0 0.0
  %627 = vmatpush1.msra.mxu0 0.0
  %628 = vmatprep.subr.mxu0 0.0
  %629 = vmatpush1.msra.mxu0 0.0
  %630 = vmatprep.subr.mxu0 0.0
  %631 = vmatpush1.msra.mxu0 0.0
  %632 = vmatprep.subr.mxu0 %v57
  %633 = vmatpush1.msra.mxu0 %v56
  %634 = vmatprep.subr.mxu0 %v41
  %635 = vmatpush1.msra.mxu0 %v40
  %636 = vmatprep.subr.mxu0 0.0
  %637 = vmatpush2.msra.mxu0 0.0
  %638 = vmatprep.subr.mxu0 0.0
  %639 = vmatpush2.msra.mxu0 0.0
  %640 = vmatprep.subr.mxu0 0.0
  %641 = vmatpush2.msra.mxu0 0.0
  %642 = vmatprep.subr.mxu0 0.0
  %643 = vmatpush2.msra.mxu0 0.0
  %644 = vmatprep.subr.mxu0 0.0
  %645 = vmatpush2.msra.mxu0 0.0
  %646 = vmatprep.subr.mxu0 0.0
  %647 = vmatpush2.msra.mxu0 0.0
  %648 = vmatprep.subr.mxu0 0.0
  %649 = vmatpush2.msra.mxu0 0.0
  %650 = vmatprep.subr.mxu0 0.0
  %651 = vmatpush2.msra.mxu0 0.0
  %652 = vmatprep.subr.mxu0 0.0
  %653 = vmatpush2.msra.mxu0 0.0
  %654 = vmatprep.subr.mxu0 0.0
  %655 = vmatpush2.msra.mxu0 0.0
  %656 = vmatprep.subr.mxu0 0.0
  %657 = vmatpush2.msra.mxu0 0.0
  %658 = vmatprep.subr.mxu0 0.0
  %659 = vmatpush2.msra.mxu0 0.0
  %660 = vmatprep.subr.mxu0 0.0
  %661 = vmatpush2.msra.mxu0 0.0
  %662 = vmatprep.subr.mxu0 0.0
  %663 = vmatpush2.msra.mxu0 0.0
  %664 = vmatprep.subr.mxu0 0.0
  %665 = vmatpush2.msra.mxu0 0.0
  %666 = vmatprep.subr.mxu0 0.0
  %667 = vmatpush2.msra.mxu0 0.0
  %668 = vmatprep.mubr.f32.mxu0 0.0
  %669 = vmatmul.mubr.f32.gmra.mxu0 %v148
  %v670 = vpop.f32.mrf.mxu0
  %v671 = vadd.f32 %v109, %v670
  %v672 = vpop.f32.mrf.mxu0
  %v673 = vadd.f32 %v113, %v672
  %674 = vmatprep.mubr.f32.mxu0 0.0
  %675 = vmatmul.mubr.f32.gmra.mxu0 %v151
  %v676 = vpop.f32.mrf.mxu0
  %v677 = vadd.f32 %v109, %v676
  %v678 = vpop.f32.mrf.mxu0
  %v679 = vadd.f32 %v113, %v678
  %680 = vmatprep.mubr.f32.mxu0 0.0
  %681 = vmatmul.mubr.f32.gmra.mxu0 %v154
  %v682 = vpop.f32.mrf.mxu0
  %v683 = vadd.f32 %v109, %v682
  %v684 = vpop.f32.mrf.mxu0
  %v685 = vadd.f32 %v113, %v684
  %686 = vmatprep.mubr.f32.mxu0 0.0
  %687 = vmatmul.mubr.f32.gmra.mxu0 %v157
  %v688 = vpop.f32.mrf.mxu0
  %v689 = vadd.f32 %v109, %v688
  %v690 = vpop.f32.mrf.mxu0
  %v691 = vadd.f32 %v113, %v690
  %692 = vdwg.mxu0
  %693 = vmatprep.subr.mxu0 0.0
  %694 = vmatpush1.msra.mxu0 0.0
  %695 = vmatprep.subr.mxu0 0.0
  %696 = vmatpush1.msra.mxu0 0.0
  %697 = vmatprep.subr.mxu0 0.0
  %698 = vmatpush1.msra.mxu0 0.0
  %699 = vmatprep.subr.mxu0 0.0
  %700 = vmatpush1.msra.mxu0 0.0
  %701 = vmatprep.subr.mxu0 0.0
  %702 = vmatpush1.msra.mxu0 0.0
  %703 = vmatprep.subr.mxu0 0.0
  %704 = vmatpush1.msra.mxu0 0.0
  %705 = vmatprep.subr.mxu0 0.0
  %706 = vmatpush1.msra.mxu0 0.0
  %707 = vmatprep.subr.mxu0 0.0
  %708 = vmatpush1.msra.mxu0 0.0
  %709 = vmatprep.subr.mxu0 0.0
  %710 = vmatpush1.msra.mxu0 0.0
  %711 = vmatprep.subr.mxu0 0.0
  %712 = vmatpush1.msra.mxu0 0.0
  %713 = vmatprep.subr.mxu0 0.0
  %714 = vmatpush1.msra.mxu0 0.0
  %715 = vmatprep.subr.mxu0 0.0
  %716 = vmatpush1.msra.mxu0 0.0
  %717 = vmatprep.subr.mxu0 0.0
  %718 = vmatpush1.msra.mxu0 0.0
  %719 = vmatprep.subr.mxu0 0.0
  %720 = vmatpush1.msra.mxu0 0.0
  %721 = vmatprep.subr.mxu0 %v59
  %722 = vmatpush1.msra.mxu0 %v58
  %723 = vmatprep.subr.mxu0 %v43
  %724 = vmatpush1.msra.mxu0 %v42
  %725 = vmatprep.subr.mxu0 0.0
  %726 = vmatpush2.msra.mxu0 0.0
  %727 = vmatprep.subr.mxu0 0.0
  %728 = vmatpush2.msra.mxu0 0.0
  %729 = vmatprep.subr.mxu0 0.0
  %730 = vmatpush2.msra.mxu0 0.0
  %731 = vmatprep.subr.mxu0 0.0
  %732 = vmatpush2.msra.mxu0 0.0
  %733 = vmatprep.subr.mxu0 0.0
  %734 = vmatpush2.msra.mxu0 0.0
  %735 = vmatprep.subr.mxu0 0.0
  %736 = vmatpush2.msra.mxu0 0.0
  %737 = vmatprep.subr.mxu0 0.0
  %738 = vmatpush2.msra.mxu0 0.0
  %739 = vmatprep.subr.mxu0 0.0
  %740 = vmatpush2.msra.mxu0 0.0
  %741 = vmatprep.subr.mxu0 0.0
  %742 = vmatpush2.msra.mxu0 0.0
  %743 = vmatprep.subr.mxu0 0.0
  %744 = vmatpush2.msra.mxu0 0.0
  %745 = vmatprep.subr.mxu0 0.0
  %746 = vmatpush2.msra.mxu0 0.0
  %747 = vmatprep.subr.mxu0 0.0
  %748 = vmatpush2.msra.mxu0 0.0
  %749 = vmatprep.subr.mxu0 0.0
  %750 = vmatpush2.msra.mxu0 0.0
  %751 = vmatprep.subr.mxu0 0.0
  %752 = vmatpush2.msra.mxu0 0.0
  %753 = vmatprep.subr.mxu0 0.0
  %754 = vmatpush2.msra.mxu0 0.0
  %755 = vmatprep.subr.mxu0 0.0
  %756 = vmatpush2.msra.mxu0 0.0
  %757 = vmatprep.mubr.f32.mxu0 0.0
  %758 = vmatmul.mubr.f32.gmra.mxu0 %v148
  %v759 = vpop.f32.mrf.mxu0
  %v760 = vadd.f32 %v117, %v759
  %v761 = vpop.f32.mrf.mxu0
  %v762 = vadd.f32 %v121, %v761
  %763 = vmatprep.mubr.f32.mxu0 0.0
  %764 = vmatmul.mubr.f32.gmra.mxu0 %v151
  %v765 = vpop.f32.mrf.mxu0
  %v766 = vadd.f32 %v117, %v765
  %v767 = vpop.f32.mrf.mxu0
  %v768 = vadd.f32 %v121, %v767
  %769 = vmatprep.mubr.f32.mxu0 0.0
  %770 = vmatmul.mubr.f32.gmra.mxu0 %v154
  %v771 = vpop.f32.mrf.mxu0
  %v772 = vadd.f32 %v117, %v771
  %v773 = vpop.f32.mrf.mxu0
  %v774 = vadd.f32 %v121, %v773
  %775 = vmatprep.mubr.f32.mxu0 0.0
  %776 = vmatmul.mubr.f32.gmra.mxu0 %v157
  %v777 = vpop.f32.mrf.mxu0
  %v778 = vadd.f32 %v117, %v777
  %v779 = vpop.f32.mrf.mxu0
  %v780 = vadd.f32 %v121, %v779
  %781 = vdwg.mxu0
  %782 = vmatprep.subr.mxu0 0.0
  %783 = vmatpush1.msra.mxu0 0.0
  %784 = vmatprep.subr.mxu0 0.0
  %785 = vmatpush1.msra.mxu0 0.0
  %786 = vmatprep.subr.mxu0 0.0
  %787 = vmatpush1.msra.mxu0 0.0
  %788 = vmatprep.subr.mxu0 0.0
  %789 = vmatpush1.msra.mxu0 0.0
  %790 = vmatprep.subr.mxu0 0.0
  %791 = vmatpush1.msra.mxu0 0.0
  %792 = vmatprep.subr.mxu0 0.0
  %793 = vmatpush1.msra.mxu0 0.0
  %794 = vmatprep.subr.mxu0 0.0
  %795 = vmatpush1.msra.mxu0 0.0
  %796 = vmatprep.subr.mxu0 0.0
  %797 = vmatpush1.msra.mxu0 0.0
  %798 = vmatprep.subr.mxu0 0.0
  %799 = vmatpush1.msra.mxu0 0.0
  %800 = vmatprep.subr.mxu0 0.0
  %801 = vmatpush1.msra.mxu0 0.0
  %802 = vmatprep.subr.mxu0 0.0
  %803 = vmatpush1.msra.mxu0 0.0
  %804 = vmatprep.subr.mxu0 0.0
  %805 = vmatpush1.msra.mxu0 0.0
  %806 = vmatprep.subr.mxu0 0.0
  %807 = vmatpush1.msra.mxu0 0.0
  %808 = vmatprep.subr.mxu0 0.0
  %809 = vmatpush1.msra.mxu0 0.0
  %810 = vmatprep.subr.mxu0 %v61
  %811 = vmatpush1.msra.mxu0 %v60
  %812 = vmatprep.subr.mxu0 %v45
  %813 = vmatpush1.msra.mxu0 %v44
  %814 = vmatprep.subr.mxu0 0.0
  %815 = vmatpush2.msra.mxu0 0.0
  %816 = vmatprep.subr.mxu0 0.0
  %817 = vmatpush2.msra.mxu0 0.0
  %818 = vmatprep.subr.mxu0 0.0
  %819 = vmatpush2.msra.mxu0 0.0
  %820 = vmatprep.subr.mxu0 0.0
  %821 = vmatpush2.msra.mxu0 0.0
  %822 = vmatprep.subr.mxu0 0.0
  %823 = vmatpush2.msra.mxu0 0.0
  %824 = vmatprep.subr.mxu0 0.0
  %825 = vmatpush2.msra.mxu0 0.0
  %826 = vmatprep.subr.mxu0 0.0
  %827 = vmatpush2.msra.mxu0 0.0
  %828 = vmatprep.subr.mxu0 0.0
  %829 = vmatpush2.msra.mxu0 0.0
  %830 = vmatprep.subr.mxu0 0.0
  %831 = vmatpush2.msra.mxu0 0.0
  %832 = vmatprep.subr.mxu0 0.0
  %833 = vmatpush2.msra.mxu0 0.0
  %834 = vmatprep.subr.mxu0 0.0
  %835 = vmatpush2.msra.mxu0 0.0
  %836 = vmatprep.subr.mxu0 0.0
  %837 = vmatpush2.msra.mxu0 0.0
  %838 = vmatprep.subr.mxu0 0.0
  %839 = vmatpush2.msra.mxu0 0.0
  %840 = vmatprep.subr.mxu0 0.0
  %841 = vmatpush2.msra.mxu0 0.0
  %842 = vmatprep.subr.mxu0 0.0
  %843 = vmatpush2.msra.mxu0 0.0
  %844 = vmatprep.subr.mxu0 0.0
  %845 = vmatpush2.msra.mxu0 0.0
  %846 = vmatprep.mubr.f32.mxu0 0.0
  %847 = vmatmul.mubr.f32.gmra.mxu0 %v148
  %v848 = vpop.f32.mrf.mxu0
  %v849 = vadd.f32 %v125, %v848
  %v850 = vpop.f32.mrf.mxu0
  %v851 = vadd.f32 %v129, %v850
  %852 = vmatprep.mubr.f32.mxu0 0.0
  %853 = vmatmul.mubr.f32.gmra.mxu0 %v151
  %v854 = vpop.f32.mrf.mxu0
  %v855 = vadd.f32 %v125, %v854
  %v856 = vpop.f32.mrf.mxu0
  %v857 = vadd.f32 %v129, %v856
  %858 = vmatprep.mubr.f32.mxu0 0.0
  %859 = vmatmul.mubr.f32.gmra.mxu0 %v154
  %v860 = vpop.f32.mrf.mxu0
  %v861 = vadd.f32 %v125, %v860
  %v862 = vpop.f32.mrf.mxu0
  %v863 = vadd.f32 %v129, %v862
  %864 = vmatprep.mubr.f32.mxu0 0.0
  %865 = vmatmul.mubr.f32.gmra.mxu0 %v157
  %v866 = vpop.f32.mrf.mxu0
  %v867 = vadd.f32 %v125, %v866
  %v868 = vpop.f32.mrf.mxu0
  %v869 = vadd.f32 %v129, %v868
  %870 = vdwg.mxu0
  %v871 = vmax.f32 %v226, 0.0
  %v872 = vmax.f32 %v228, 0.0
  %v873 = vmax.f32 %v315, 0.0
  %v874 = vmax.f32 %v317, 0.0
  %v875 = vmax.f32 %v404, 0.0
  %v876 = vmax.f32 %v406, 0.0
  %v877 = vmax.f32 %v493, 0.0
  %v878 = vmax.f32 %v495, 0.0
  %v879 = vmax.f32 %v582, 0.0
  %v880 = vmax.f32 %v584, 0.0
  %v881 = vmax.f32 %v671, 0.0
  %v882 = vmax.f32 %v673, 0.0
  %v883 = vmax.f32 %v760, 0.0
  %v884 = vmax.f32 %v762, 0.0
  %v885 = vmax.f32 %v849, 0.0
  %v886 = vmax.f32 %v851, 0.0
  %v887 = vmax.f32 %v232, 0.0
  %v888 = vmax.f32 %v234, 0.0
  %v889 = vmax.f32 %v321, 0.0
  %v890 = vmax.f32 %v323, 0.0
  %v891 = vmax.f32 %v410, 0.0
  %v892 = vmax.f32 %v412, 0.0
  %v893 = vmax.f32 %v499, 0.0
  %v894 = vmax.f32 %v501, 0.0
  %v895 = vmax.f32 %v588, 0.0
  %v896 = vmax.f32 %v590, 0.0
  %v897 = vmax.f32 %v677, 0.0
  %v898 = vmax.f32 %v679, 0.0
  %v899 = vmax.f32 %v766, 0.0
  %v900 = vmax.f32 %v768, 0.0
  %v901 = vmax.f32 %v855, 0.0
  %v902 = vmax.f32 %v857, 0.0
  %v903 = vmax.f32 %v238, 0.0
  %v904 = vmax.f32 %v240, 0.0
  %v905 = vmax.f32 %v327, 0.0
  %v906 = vmax.f32 %v329, 0.0
  %v907 = vmax.f32 %v416, 0.0
  %v908 = vmax.f32 %v418, 0.0
  %v909 = vmax.f32 %v505, 0.0
  %v910 = vmax.f32 %v507, 0.0
  %v911 = vmax.f32 %v594, 0.0
  %v912 = vmax.f32 %v596, 0.0
  %v913 = vmax.f32 %v683, 0.0
  %v914 = vmax.f32 %v685, 0.0
  %v915 = vmax.f32 %v772, 0.0
  %v916 = vmax.f32 %v774, 0.0
  %v917 = vmax.f32 %v861, 0.0
  %v918 = vmax.f32 %v863, 0.0
  %v919 = vmax.f32 %v244, 0.0
  %v920 = vmax.f32 %v246, 0.0
  %v921 = vmax.f32 %v333, 0.0
  %v922 = vmax.f32 %v335, 0.0
  %v923 = vmax.f32 %v422, 0.0
  %v924 = vmax.f32 %v424, 0.0
  %v925 = vmax.f32 %v511, 0.0
  %v926 = vmax.f32 %v513, 0.0
  %v927 = vmax.f32 %v600, 0.0
  %v928 = vmax.f32 %v602, 0.0
  %v929 = vmax.f32 %v689, 0.0
  %v930 = vmax.f32 %v691, 0.0
  %v931 = vmax.f32 %v778, 0.0
  %v932 = vmax.f32 %v780, 0.0
  %v933 = vmax.f32 %v867, 0.0
  %v934 = vmax.f32 %v869, 0.0
  %v935 = vld [vmem:[%s3] sm:$0xff]
  %v936 = vld [vmem:[%s3 + $0x8] sm:$0xff]
  %v937 = vld [vmem:[%s3 + $0x10] sm:$0xff]
  %v938 = vld [vmem:[%s3 + $0x18] sm:$0xff]
  %v939 = vld [vmem:[%s3 + $0x20] sm:$0xff]
  %v940 = vld [vmem:[%s3 + $0x28] sm:$0xff]
  %v941 = vld [vmem:[%s3 + $0x30] sm:$0xff]
  %v942 = vld [vmem:[%s3 + $0x38] sm:$0xff]
  %v943 = vld [vmem:[%s3 + $0x40] sm:$0xff]
  %v944 = vld [vmem:[%s3 + $0x48] sm:$0xff]
  %v945 = vld [vmem:[%s3 + $0x50] sm:$0xff]
  %v946 = vld [vmem:[%s3 + $0x58] sm:$0xff]
  %v947 = vld [vmem:[%s3 + $0x60] sm:$0xff]
  %v948 = vld [vmem:[%s3 + $0x68] sm:$0xff]
  %v949 = vld [vmem:[%s3 + $0x70] sm:$0xff]
  %v950 = vld [vmem:[%s3 + $0x78] sm:$0xff]
  %v951 = vld [vmem:[%s3 + $0x80] sm:$0xff]
  %v952 = vld [vmem:[%s3 + $0x88] sm:$0xff]
  %v953 = vld [vmem:[%s3 + $0x90] sm:$0xff]
  %v954 = vld [vmem:[%s3 + $0x98] sm:$0xff]
  %v955 = vld [vmem:[%s3 + $0xa0] sm:$0xff]
  %v956 = vld [vmem:[%s3 + $0xa8] sm:$0xff]
  %v957 = vld [vmem:[%s3 + $0xb0] sm:$0xff]
  %v958 = vld [vmem:[%s3 + $0xb8] sm:$0xff]
  %v959 = vld [vmem:[%s3 + $0xc0] sm:$0xff]
  %v960 = vld [vmem:[%s3 + $0xc8] sm:$0xff]
  %v961 = vld [vmem:[%s3 + $0xd0] sm:$0xff]
  %v962 = vld [vmem:[%s3 + $0xd8] sm:$0xff]
  %v963 = vld [vmem:[%s3 + $0xe0] sm:$0xff]
  %v964 = vld [vmem:[%s3 + $0xe8] sm:$0xff]
  %v965 = vld [vmem:[%s3 + $0xf0] sm:$0xff]
  %v966 = vld [vmem:[%s3 + $0xf8] sm:$0xff]
  %v967 = vld [vmem:[%s3 + $0x100] sm:$0xff]
  %v968 = vld [vmem:[%s3 + $0x108] sm:$0xff]
  %v969 = vld [vmem:[%s3 + $0x110] sm:$0xff]
  %v970 = vld [vmem:[%s3 + $0x118] sm:$0xff]
  %v971 = vld [vmem:[%s3 + $0x120] sm:$0xff]
  %v972 = vld [vmem:[%s3 + $0x128] sm:$0xff]
  %v973 = vld [vmem:[%s3 + $0x130] sm:$0xff]
  %v974 = vld [vmem:[%s3 + $0x138] sm:$0xff]
  %v975 = vld [vmem:[%s3 + $0x140] sm:$0xff]
  %v976 = vld [vmem:[%s3 + $0x148] sm:$0xff]
  %v977 = vld [vmem:[%s3 + $0x150] sm:$0xff]
  %v978 = vld [vmem:[%s3 + $0x158] sm:$0xff]
  %v979 = vld [vmem:[%s3 + $0x160] sm:$0xff]
  %v980 = vld [vmem:[%s3 + $0x168] sm:$0xff]
  %v981 = vld [vmem:[%s3 + $0x170] sm:$0xff]
  %v982 = vld [vmem:[%s3 + $0x178] sm:$0xff]
  %v983 = vld [vmem:[%s3 + $0x180] sm:$0xff]
  %v984 = vld [vmem:[%s3 + $0x188] sm:$0xff]
  %v985 = vld [vmem:[%s3 + $0x190] sm:$0xff]
  %v986 = vld [vmem:[%s3 + $0x198] sm:$0xff]
  %v987 = vld [vmem:[%s3 + $0x1a0] sm:$0xff]
  %v988 = vld [vmem:[%s3 + $0x1a8] sm:$0xff]
  %v989 = vld [vmem:[%s3 + $0x1b0] sm:$0xff]
  %v990 = vld [vmem:[%s3 + $0x1b8] sm:$0xff]
  %v991 = vld [vmem:[%s3 + $0x1c0] sm:$0xff]
  %v992 = vld [vmem:[%s3 + $0x1c8] sm:$0xff]
  %v993 = vld [vmem:[%s3 + $0x1d0] sm:$0xff]
  %v994 = vld [vmem:[%s3 + $0x1d8] sm:$0xff]
  %v995 = vld [vmem:[%s3 + $0x1e0] sm:$0xff]
  %v996 = vld [vmem:[%s3 + $0x1e8] sm:$0xff]
  %v997 = vld [vmem:[%s3 + $0x1f0] sm:$0xff]
  %v998 = vld [vmem:[%s3 + $0x1f8] sm:$0xff]
  %v999 = vld [vmem:[%s3 + $0x200] sm:$0xff]
  %v1000 = vld [vmem:[%s3 + $0x208] sm:$0xff]
  %v1001 = vld [vmem:[%s3 + $0x210] sm:$0xff]
  %v1002 = vld [vmem:[%s3 + $0x218] sm:$0xff]
  %v1003 = vld [vmem:[%s3 + $0x220] sm:$0xff]
  %v1004 = vld [vmem:[%s3 + $0x228] sm:$0xff]
  %v1005 = vld [vmem:[%s3 + $0x230] sm:$0xff]
  %v1006 = vld [vmem:[%s3 + $0x238] sm:$0xff]
  %v1007 = vld [vmem:[%s3 + $0x240] sm:$0xff]
  %v1008 = vld [vmem:[%s3 + $0x248] sm:$0xff]
  %v1009 = vld [vmem:[%s3 + $0x250] sm:$0xff]
  %v1010 = vld [vmem:[%s3 + $0x258] sm:$0xff]
  %v1011 = vld [vmem:[%s3 + $0x260] sm:$0xff]
  %v1012 = vld [vmem:[%s3 + $0x268] sm:$0xff]
  %v1013 = vld [vmem:[%s3 + $0x270] sm:$0xff]
  %v1014 = vld [vmem:[%s3 + $0x278] sm:$0xff]
  %v1015 = vld [vmem:[%s3 + $0x280] sm:$0xff]
  %v1016 = vld [vmem:[%s3 + $0x288] sm:$0xff]
  %v1017 = vld [vmem:[%s3 + $0x290] sm:$0xff]
  %v1018 = vld [vmem:[%s3 + $0x298] sm:$0xff]
  %v1019 = vld [vmem:[%s3 + $0x2a0] sm:$0xff]
  %v1020 = vld [vmem:[%s3 + $0x2a8] sm:$0xff]
  %v1021 = vld [vmem:[%s3 + $0x2b0] sm:$0xff]
  %v1022 = vld [vmem:[%s3 + $0x2b8] sm:$0xff]
  %v1023 = vld [vmem:[%s3 + $0x2c0] sm:$0xff]
  %v1024 = vld [vmem:[%s3 + $0x2c8] sm:$0xff]
  %v1025 = vld [vmem:[%s3 + $0x2d0] sm:$0xff]
  %v1026 = vld [vmem:[%s3 + $0x2d8] sm:$0xff]
  %v1027 = vld [vmem:[%s3 + $0x2e0] sm:$0xff]
  %v1028 = vld [vmem:[%s3 + $0x2e8] sm:$0xff]
  %v1029 = vld [vmem:[%s3 + $0x2f0] sm:$0xff]
  %v1030 = vld [vmem:[%s3 + $0x2f8] sm:$0xff]
  %v1031 = vld [vmem:[%s3 + $0x300] sm:$0xff]
  %v1032 = vld [vmem:[%s3 + $0x308] sm:$0xff]
  %v1033 = vld [vmem:[%s3 + $0x310] sm:$0xff]
  %v1034 = vld [vmem:[%s3 + $0x318] sm:$0xff]
  %v1035 = vld [vmem:[%s3 + $0x320] sm:$0xff]
  %v1036 = vld [vmem:[%s3 + $0x328] sm:$0xff]
  %v1037 = vld [vmem:[%s3 + $0x330] sm:$0xff]
  %v1038 = vld [vmem:[%s3 + $0x338] sm:$0xff]
  %v1039 = vld [vmem:[%s3 + $0x340] sm:$0xff]
  %v1040 = vld [vmem:[%s3 + $0x348] sm:$0xff]
  %v1041 = vld [vmem:[%s3 + $0x350] sm:$0xff]
  %v1042 = vld [vmem:[%s3 + $0x358] sm:$0xff]
  %v1043 = vld [vmem:[%s3 + $0x360] sm:$0xff]
  %v1044 = vld [vmem:[%s3 + $0x368] sm:$0xff]
  %v1045 = vld [vmem:[%s3 + $0x370] sm:$0xff]
  %v1046 = vld [vmem:[%s3 + $0x378] sm:$0xff]
  %v1047 = vld [vmem:[%s3 + $0x380] sm:$0xff]
  %v1048 = vld [vmem:[%s3 + $0x388] sm:$0xff]
  %v1049 = vld [vmem:[%s3 + $0x390] sm:$0xff]
  %v1050 = vld [vmem:[%s3 + $0x398] sm:$0xff]
  %v1051 = vld [vmem:[%s3 + $0x3a0] sm:$0xff]
  %v1052 = vld [vmem:[%s3 + $0x3a8] sm:$0xff]
  %v1053 = vld [vmem:[%s3 + $0x3b0] sm:$0xff]
  %v1054 = vld [vmem:[%s3 + $0x3b8] sm:$0xff]
  %v1055 = vld [vmem:[%s3 + $0x3c0] sm:$0xff]
  %v1056 = vld [vmem:[%s3 + $0x3c8] sm:$0xff]
  %v1057 = vld [vmem:[%s3 + $0x3d0] sm:$0xff]
  %v1058 = vld [vmem:[%s3 + $0x3d8] sm:$0xff]
  %v1059 = vld [vmem:[%s3 + $0x3e0] sm:$0xff]
  %v1060 = vld [vmem:[%s3 + $0x3e8] sm:$0xff]
  %v1061 = vld [vmem:[%s3 + $0x3f0] sm:$0xff]
  %v1062 = vld [vmem:[%s3 + $0x3f8] sm:$0xff]
  %v1063 = vld [vmem:[%s3 + $0x400] sm:$0xff]
  %v1064 = vld [vmem:[%s3 + $0x408] sm:$0xff]
  %v1065 = vld [vmem:[%s3 + $0x410] sm:$0xff]
  %v1066 = vld [vmem:[%s3 + $0x418] sm:$0xff]
  %v1067 = vld [vmem:[%s3 + $0x420] sm:$0xff]
  %v1068 = vld [vmem:[%s3 + $0x428] sm:$0xff]
  %v1069 = vld [vmem:[%s3 + $0x430] sm:$0xff]
  %v1070 = vld [vmem:[%s3 + $0x438] sm:$0xff]
  %v1071 = vld [vmem:[%s3 + $0x440] sm:$0xff]
  %v1072 = vld [vmem:[%s3 + $0x448] sm:$0xff]
  %v1073 = vld [vmem:[%s3 + $0x450] sm:$0xff]
  %v1074 = vld [vmem:[%s3 + $0x458] sm:$0xff]
  %v1075 = vld [vmem:[%s3 + $0x460] sm:$0xff]
  %v1076 = vld [vmem:[%s3 + $0x468] sm:$0xff]
  %v1077 = vld [vmem:[%s3 + $0x470] sm:$0xff]
  %v1078 = vld [vmem:[%s3 + $0x478] sm:$0xff]
  %v1079 = vld [vmem:[%s3 + $0x480] sm:$0xff]
  %v1080 = vld [vmem:[%s3 + $0x488] sm:$0xff]
  %v1081 = vld [vmem:[%s3 + $0x490] sm:$0xff]
  %v1082 = vld [vmem:[%s3 + $0x498] sm:$0xff]
  %v1083 = vld [vmem:[%s3 + $0x4a0] sm:$0xff]
  %v1084 = vld [vmem:[%s3 + $0x4a8] sm:$0xff]
  %v1085 = vld [vmem:[%s3 + $0x4b0] sm:$0xff]
  %v1086 = vld [vmem:[%s3 + $0x4b8] sm:$0xff]
  %v1087 = vld [vmem:[%s3 + $0x4c0] sm:$0xff]
  %v1088 = vld [vmem:[%s3 + $0x4c8] sm:$0xff]
  %v1089 = vld [vmem:[%s3 + $0x4d0] sm:$0xff]
  %v1090 = vld [vmem:[%s3 + $0x4d8] sm:$0xff]
  %v1091 = vld [vmem:[%s3 + $0x4e0] sm:$0xff]
  %v1092 = vld [vmem:[%s3 + $0x4e8] sm:$0xff]
  %v1093 = vld [vmem:[%s3 + $0x4f0] sm:$0xff]
  %v1094 = vld [vmem:[%s3 + $0x4f8] sm:$0xff]
  %v1095 = vld [vmem:[%s3 + $0x500] sm:$0xff]
  %v1096 = vld [vmem:[%s3 + $0x508] sm:$0xff]
  %v1097 = vld [vmem:[%s3 + $0x510] sm:$0xff]
  %v1098 = vld [vmem:[%s3 + $0x518] sm:$0xff]
  %v1099 = vld [vmem:[%s3 + $0x520] sm:$0xff]
  %v1100 = vld [vmem:[%s3 + $0x528] sm:$0xff]
  %v1101 = vld [vmem:[%s3 + $0x530] sm:$0xff]
  %v1102 = vld [vmem:[%s3 + $0x538] sm:$0xff]
  %v1103 = vld [vmem:[%s3 + $0x540] sm:$0xff]
  %v1104 = vld [vmem:[%s3 + $0x548] sm:$0xff]
  %v1105 = vld [vmem:[%s3 + $0x550] sm:$0xff]
  %v1106 = vld [vmem:[%s3 + $0x558] sm:$0xff]
  %v1107 = vld [vmem:[%s3 + $0x560] sm:$0xff]
  %v1108 = vld [vmem:[%s3 + $0x568] sm:$0xff]
  %v1109 = vld [vmem:[%s3 + $0x570] sm:$0xff]
  %v1110 = vld [vmem:[%s3 + $0x578] sm:$0xff]
  %v1111 = vld [vmem:[%s3 + $0x580] sm:$0xff]
  %v1112 = vld [vmem:[%s3 + $0x588] sm:$0xff]
  %v1113 = vld [vmem:[%s3 + $0x590] sm:$0xff]
  %v1114 = vld [vmem:[%s3 + $0x598] sm:$0xff]
  %v1115 = vld [vmem:[%s3 + $0x5a0] sm:$0xff]
  %v1116 = vld [vmem:[%s3 + $0x5a8] sm:$0xff]
  %v1117 = vld [vmem:[%s3 + $0x5b0] sm:$0xff]
  %v1118 = vld [vmem:[%s3 + $0x5b8] sm:$0xff]
  %v1119 = vld [vmem:[%s3 + $0x5c0] sm:$0xff]
  %v1120 = vld [vmem:[%s3 + $0x5c8] sm:$0xff]
  %v1121 = vld [vmem:[%s3 + $0x5d0] sm:$0xff]
  %v1122 = vld [vmem:[%s3 + $0x5d8] sm:$0xff]
  %v1123 = vld [vmem:[%s3 + $0x5e0] sm:$0xff]
  %v1124 = vld [vmem:[%s3 + $0x5e8] sm:$0xff]
  %v1125 = vld [vmem:[%s3 + $0x5f0] sm:$0xff]
  %v1126 = vld [vmem:[%s3 + $0x5f8] sm:$0xff]
  %v1127 = vld [vmem:[%s3 + $0x600] sm:$0xff]
  %v1128 = vld [vmem:[%s3 + $0x608] sm:$0xff]
  %v1129 = vld [vmem:[%s3 + $0x610] sm:$0xff]
  %v1130 = vld [vmem:[%s3 + $0x618] sm:$0xff]
  %v1131 = vld [vmem:[%s3 + $0x620] sm:$0xff]
  %v1132 = vld [vmem:[%s3 + $0x628] sm:$0xff]
  %v1133 = vld [vmem:[%s3 + $0x630] sm:$0xff]
  %v1134 = vld [vmem:[%s3 + $0x638] sm:$0xff]
  %v1135 = vld [vmem:[%s3 + $0x640] sm:$0xff]
  %v1136 = vld [vmem:[%s3 + $0x648] sm:$0xff]
  %v1137 = vld [vmem:[%s3 + $0x650] sm:$0xff]
  %v1138 = vld [vmem:[%s3 + $0x658] sm:$0xff]
  %v1139 = vld [vmem:[%s3 + $0x660] sm:$0xff]
  %v1140 = vld [vmem:[%s3 + $0x668] sm:$0xff]
  %v1141 = vld [vmem:[%s3 + $0x670] sm:$0xff]
  %v1142 = vld [vmem:[%s3 + $0x678] sm:$0xff]
  %v1143 = vld [vmem:[%s3 + $0x680] sm:$0xff]
  %v1144 = vld [vmem:[%s3 + $0x688] sm:$0xff]
  %v1145 = vld [vmem:[%s3 + $0x690] sm:$0xff]
  %v1146 = vld [vmem:[%s3 + $0x698] sm:$0xff]
  %v1147 = vld [vmem:[%s3 + $0x6a0] sm:$0xff]
  %v1148 = vld [vmem:[%s3 + $0x6a8] sm:$0xff]
  %v1149 = vld [vmem:[%s3 + $0x6b0] sm:$0xff]
  %v1150 = vld [vmem:[%s3 + $0x6b8] sm:$0xff]
  %v1151 = vld [vmem:[%s3 + $0x6c0] sm:$0xff]
  %v1152 = vld [vmem:[%s3 + $0x6c8] sm:$0xff]
  %v1153 = vld [vmem:[%s3 + $0x6d0] sm:$0xff]
  %v1154 = vld [vmem:[%s3 + $0x6d8] sm:$0xff]
  %v1155 = vld [vmem:[%s3 + $0x6e0] sm:$0xff]
  %v1156 = vld [vmem:[%s3 + $0x6e8] sm:$0xff]
  %v1157 = vld [vmem:[%s3 + $0x6f0] sm:$0xff]
  %v1158 = vld [vmem:[%s3 + $0x6f8] sm:$0xff]
  %v1159 = vld [vmem:[%s3 + $0x700] sm:$0xff]
  %v1160 = vld [vmem:[%s3 + $0x708] sm:$0xff]
  %v1161 = vld [vmem:[%s3 + $0x710] sm:$0xff]
  %v1162 = vld [vmem:[%s3 + $0x718] sm:$0xff]
  %v1163 = vld [vmem:[%s3 + $0x720] sm:$0xff]
  %v1164 = vld [vmem:[%s3 + $0x728] sm:$0xff]
  %v1165 = vld [vmem:[%s3 + $0x730] sm:$0xff]
  %v1166 = vld [vmem:[%s3 + $0x738] sm:$0xff]
  %v1167 = vld [vmem:[%s3 + $0x740] sm:$0xff]
  %v1168 = vld [vmem:[%s3 + $0x748] sm:$0xff]
  %v1169 = vld [vmem:[%s3 + $0x750] sm:$0xff]
  %v1170 = vld [vmem:[%s3 + $0x758] sm:$0xff]
  %v1171 = vld [vmem:[%s3 + $0x760] sm:$0xff]
  %v1172 = vld [vmem:[%s3 + $0x768] sm:$0xff]
  %v1173 = vld [vmem:[%s3 + $0x770] sm:$0xff]
  %v1174 = vld [vmem:[%s3 + $0x778] sm:$0xff]
  %v1175 = vld [vmem:[%s3 + $0x780] sm:$0xff]
  %v1176 = vld [vmem:[%s3 + $0x788] sm:$0xff]
  %v1177 = vld [vmem:[%s3 + $0x790] sm:$0xff]
  %v1178 = vld [vmem:[%s3 + $0x798] sm:$0xff]
  %v1179 = vld [vmem:[%s3 + $0x7a0] sm:$0xff]
  %v1180 = vld [vmem:[%s3 + $0x7a8] sm:$0xff]
  %v1181 = vld [vmem:[%s3 + $0x7b0] sm:$0xff]
  %v1182 = vld [vmem:[%s3 + $0x7b8] sm:$0xff]
  %v1183 = vld [vmem:[%s3 + $0x7c0] sm:$0xff]
  %v1184 = vld [vmem:[%s3 + $0x7c8] sm:$0xff]
  %v1185 = vld [vmem:[%s3 + $0x7d0] sm:$0xff]
  %v1186 = vld [vmem:[%s3 + $0x7d8] sm:$0xff]
  %v1187 = vld [vmem:[%s3 + $0x7e0] sm:$0xff]
  %v1188 = vld [vmem:[%s3 + $0x7e8] sm:$0xff]
  %v1189 = vld [vmem:[%s3 + $0x7f0] sm:$0xff]
  %v1190 = vld [vmem:[%s3 + $0x7f8] sm:$0xff]
  %v1191 = vld [vmem:[%s4] sm:$0x1]
  %v1193 = vlaneseq
  %v1194 = vshrl.u32 %v1193, 7
  %v1195 = vsub.s32 0, %v1194
  %v1196 = vrot.slane %v1191, %v1195
  %1198 = vmatprep.subr.mxu0 0.0
  %1199 = vmatpush1.msra.mxu0 %v950
  %1200 = vmatprep.subr.mxu0 0.0
  %1201 = vmatpush1.msra.mxu0 %v949
  %1202 = vmatprep.subr.mxu0 0.0
  %1203 = vmatpush1.msra.mxu0 %v948
  %1204 = vmatprep.subr.mxu0 0.0
  %1205 = vmatpush1.msra.mxu0 %v947
  %1206 = vmatprep.subr.mxu0 0.0
  %1207 = vmatpush1.msra.mxu0 %v946
  %1208 = vmatprep.subr.mxu0 0.0
  %1209 = vmatpush1.msra.mxu0 %v945
  %1210 = vmatprep.subr.mxu0 0.0
  %1211 = vmatpush1.msra.mxu0 %v944
  %1212 = vmatprep.subr.mxu0 0.0
  %1213 = vmatpush1.msra.mxu0 %v943
  %1214 = vmatprep.subr.mxu0 0.0
  %1215 = vmatpush1.msra.mxu0 %v942
  %1216 = vmatprep.subr.mxu0 0.0
  %1217 = vmatpush1.msra.mxu0 %v941
  %1218 = vmatprep.subr.mxu0 0.0
  %1219 = vmatpush1.msra.mxu0 %v940
  %1220 = vmatprep.subr.mxu0 0.0
  %1221 = vmatpush1.msra.mxu0 %v939
  %1222 = vmatprep.subr.mxu0 0.0
  %1223 = vmatpush1.msra.mxu0 %v938
  %1224 = vmatprep.subr.mxu0 0.0
  %1225 = vmatpush1.msra.mxu0 %v937
  %1226 = vmatprep.subr.mxu0 0.0
  %1227 = vmatpush1.msra.mxu0 %v936
  %1228 = vmatprep.subr.mxu0 0.0
  %1229 = vmatpush1.msra.mxu0 %v935
  %1230 = vmatprep.subr.mxu0 0.0
  %1231 = vmatpush2.msra.mxu0 %v966
  %1232 = vmatprep.subr.mxu0 0.0
  %1233 = vmatpush2.msra.mxu0 %v965
  %1234 = vmatprep.subr.mxu0 0.0
  %1235 = vmatpush2.msra.mxu0 %v964
  %1236 = vmatprep.subr.mxu0 0.0
  %1237 = vmatpush2.msra.mxu0 %v963
  %1238 = vmatprep.subr.mxu0 0.0
  %1239 = vmatpush2.msra.mxu0 %v962
  %1240 = vmatprep.subr.mxu0 0.0
  %1241 = vmatpush2.msra.mxu0 %v961
  %1242 = vmatprep.subr.mxu0 0.0
  %1243 = vmatpush2.msra.mxu0 %v960
  %1244 = vmatprep.subr.mxu0 0.0
  %1245 = vmatpush2.msra.mxu0 %v959
  %1246 = vmatprep.subr.mxu0 0.0
  %1247 = vmatpush2.msra.mxu0 %v958
  %1248 = vmatprep.subr.mxu0 0.0
  %1249 = vmatpush2.msra.mxu0 %v957
  %1250 = vmatprep.subr.mxu0 0.0
  %1251 = vmatpush2.msra.mxu0 %v956
  %1252 = vmatprep.subr.mxu0 0.0
  %1253 = vmatpush2.msra.mxu0 %v955
  %1254 = vmatprep.subr.mxu0 0.0
  %1255 = vmatpush2.msra.mxu0 %v954
  %1256 = vmatprep.subr.mxu0 0.0
  %1257 = vmatpush2.msra.mxu0 %v953
  %1258 = vmatprep.subr.mxu0 0.0
  %1259 = vmatpush2.msra.mxu0 %v952
  %1260 = vmatprep.subr.mxu0 0.0
  %1261 = vmatpush2.msra.mxu0 %v951
  %1262 = vmatprep.mubr.f32.mxu0 %v872
  %1263 = vmatmul.mubr.f32.gmra.mxu0 %v871
  %v1264 = vpop.f32.mrf.mxu0
  %v1265 = vadd.f32 %v1196, %v1264
  %v1266 = vpop.f32.mrf.mxu0
  %1267 = vmatprep.mubr.f32.mxu0 %v888
  %1268 = vmatmul.mubr.f32.gmra.mxu0 %v887
  %v1269 = vpop.f32.mrf.mxu0
  %v1270 = vadd.f32 %v1196, %v1269
  %v1271 = vpop.f32.mrf.mxu0
  %1272 = vmatprep.mubr.f32.mxu0 %v904
  %1273 = vmatmul.mubr.f32.gmra.mxu0 %v903
  %v1274 = vpop.f32.mrf.mxu0
  %v1275 = vadd.f32 %v1196, %v1274
  %v1276 = vpop.f32.mrf.mxu0
  %1277 = vmatprep.mubr.f32.mxu0 %v920
  %1278 = vmatmul.mubr.f32.gmra.mxu0 %v919
  %v1279 = vpop.f32.mrf.mxu0
  %v1280 = vadd.f32 %v1196, %v1279
  %v1281 = vpop.f32.mrf.mxu0
  %1282 = vdwg.mxu0
  %1283 = vmatprep.subr.mxu0 0.0
  %1284 = vmatpush1.msra.mxu0 %v982
  %1285 = vmatprep.subr.mxu0 0.0
  %1286 = vmatpush1.msra.mxu0 %v981
  %1287 = vmatprep.subr.mxu0 0.0
  %1288 = vmatpush1.msra.mxu0 %v980
  %1289 = vmatprep.subr.mxu0 0.0
  %1290 = vmatpush1.msra.mxu0 %v979
  %1291 = vmatprep.subr.mxu0 0.0
  %1292 = vmatpush1.msra.mxu0 %v978
  %1293 = vmatprep.subr.mxu0 0.0
  %1294 = vmatpush1.msra.mxu0 %v977
  %1295 = vmatprep.subr.mxu0 0.0
  %1296 = vmatpush1.msra.mxu0 %v976
  %1297 = vmatprep.subr.mxu0 0.0
  %1298 = vmatpush1.msra.mxu0 %v975
  %1299 = vmatprep.subr.mxu0 0.0
  %1300 = vmatpush1.msra.mxu0 %v974
  %1301 = vmatprep.subr.mxu0 0.0
  %1302 = vmatpush1.msra.mxu0 %v973
  %1303 = vmatprep.subr.mxu0 0.0
  %1304 = vmatpush1.msra.mxu0 %v972
  %1305 = vmatprep.subr.mxu0 0.0
  %1306 = vmatpush1.msra.mxu0 %v971
  %1307 = vmatprep.subr.mxu0 0.0
  %1308 = vmatpush1.msra.mxu0 %v970
  %1309 = vmatprep.subr.mxu0 0.0
  %1310 = vmatpush1.msra.mxu0 %v969
  %1311 = vmatprep.subr.mxu0 0.0
  %1312 = vmatpush1.msra.mxu0 %v968
  %1313 = vmatprep.subr.mxu0 0.0
  %1314 = vmatpush1.msra.mxu0 %v967
  %1315 = vmatprep.subr.mxu0 0.0
  %1316 = vmatpush2.msra.mxu0 %v998
  %1317 = vmatprep.subr.mxu0 0.0
  %1318 = vmatpush2.msra.mxu0 %v997
  %1319 = vmatprep.subr.mxu0 0.0
  %1320 = vmatpush2.msra.mxu0 %v996
  %1321 = vmatprep.subr.mxu0 0.0
  %1322 = vmatpush2.msra.mxu0 %v995
  %1323 = vmatprep.subr.mxu0 0.0
  %1324 = vmatpush2.msra.mxu0 %v994
  %1325 = vmatprep.subr.mxu0 0.0
  %1326 = vmatpush2.msra.mxu0 %v993
  %1327 = vmatprep.subr.mxu0 0.0
  %1328 = vmatpush2.msra.mxu0 %v992
  %1329 = vmatprep.subr.mxu0 0.0
  %1330 = vmatpush2.msra.mxu0 %v991
  %1331 = vmatprep.subr.mxu0 0.0
  %1332 = vmatpush2.msra.mxu0 %v990
  %1333 = vmatprep.subr.mxu0 0.0
  %1334 = vmatpush2.msra.mxu0 %v989
  %1335 = vmatprep.subr.mxu0 0.0
  %1336 = vmatpush2.msra.mxu0 %v988
  %1337 = vmatprep.subr.mxu0 0.0
  %1338 = vmatpush2.msra.mxu0 %v987
  %1339 = vmatprep.subr.mxu0 0.0
  %1340 = vmatpush2.msra.mxu0 %v986
  %1341 = vmatprep.subr.mxu0 0.0
  %1342 = vmatpush2.msra.mxu0 %v985
  %1343 = vmatprep.subr.mxu0 0.0
  %1344 = vmatpush2.msra.mxu0 %v984
  %1345 = vmatprep.subr.mxu0 0.0
  %1346 = vmatpush2.msra.mxu0 %v983
  %1347 = vmatprep.mubr.f32.mxu0 %v874
  %1348 = vmatmul.mubr.f32.gmra.mxu0 %v873
  %v1349 = vpop.f32.mrf.mxu0
  %v1350 = vadd.f32 %v1265, %v1349
  %v1351 = vpop.f32.mrf.mxu0
  %1352 = vmatprep.mubr.f32.mxu0 %v890
  %1353 = vmatmul.mubr.f32.gmra.mxu0 %v889
  %v1354 = vpop.f32.mrf.mxu0
  %v1355 = vadd.f32 %v1270, %v1354
  %v1356 = vpop.f32.mrf.mxu0
  %1357 = vmatprep.mubr.f32.mxu0 %v906
  %1358 = vmatmul.mubr.f32.gmra.mxu0 %v905
  %v1359 = vpop.f32.mrf.mxu0
  %v1360 = vadd.f32 %v1275, %v1359
  %v1361 = vpop.f32.mrf.mxu0
  %1362 = vmatprep.mubr.f32.mxu0 %v922
  %1363 = vmatmul.mubr.f32.gmra.mxu0 %v921
  %v1364 = vpop.f32.mrf.mxu0
  %v1365 = vadd.f32 %v1280, %v1364
  %v1366 = vpop.f32.mrf.mxu0
  %1367 = vdwg.mxu0
  %1368 = vmatprep.subr.mxu0 0.0
  %1369 = vmatpush1.msra.mxu0 %v1014
  %1370 = vmatprep.subr.mxu0 0.0
  %1371 = vmatpush1.msra.mxu0 %v1013
  %1372 = vmatprep.subr.mxu0 0.0
  %1373 = vmatpush1.msra.mxu0 %v1012
  %1374 = vmatprep.subr.mxu0 0.0
  %1375 = vmatpush1.msra.mxu0 %v1011
  %1376 = vmatprep.subr.mxu0 0.0
  %1377 = vmatpush1.msra.mxu0 %v1010
  %1378 = vmatprep.subr.mxu0 0.0
  %1379 = vmatpush1.msra.mxu0 %v1009
  %1380 = vmatprep.subr.mxu0 0.0
  %1381 = vmatpush1.msra.mxu0 %v1008
  %1382 = vmatprep.subr.mxu0 0.0
  %1383 = vmatpush1.msra.mxu0 %v1007
  %1384 = vmatprep.subr.mxu0 0.0
  %1385 = vmatpush1.msra.mxu0 %v1006
  %1386 = vmatprep.subr.mxu0 0.0
  %1387 = vmatpush1.msra.mxu0 %v1005
  %1388 = vmatprep.subr.mxu0 0.0
  %1389 = vmatpush1.msra.mxu0 %v1004
  %1390 = vmatprep.subr.mxu0 0.0
  %1391 = vmatpush1.msra.mxu0 %v1003
  %1392 = vmatprep.subr.mxu0 0.0
  %1393 = vmatpush1.msra.mxu0 %v1002
  %1394 = vmatprep.subr.mxu0 0.0
  %1395 = vmatpush1.msra.mxu0 %v1001
  %1396 = vmatprep.subr.mxu0 0.0
  %1397 = vmatpush1.msra.mxu0 %v1000
  %1398 = vmatprep.subr.mxu0 0.0
  %1399 = vmatpush1.msra.mxu0 %v999
  %1400 = vmatprep.subr.mxu0 0.0
  %1401 = vmatpush2.msra.mxu0 %v1030
  %1402 = vmatprep.subr.mxu0 0.0
  %1403 = vmatpush2.msra.mxu0 %v1029
  %1404 = vmatprep.subr.mxu0 0.0
  %1405 = vmatpush2.msra.mxu0 %v1028
  %1406 = vmatprep.subr.mxu0 0.0
  %1407 = vmatpush2.msra.mxu0 %v1027
  %1408 = vmatprep.subr.mxu0 0.0
  %1409 = vmatpush2.msra.mxu0 %v1026
  %1410 = vmatprep.subr.mxu0 0.0
  %1411 = vmatpush2.msra.mxu0 %v1025
  %1412 = vmatprep.subr.mxu0 0.0
  %1413 = vmatpush2.msra.mxu0 %v1024
  %1414 = vmatprep.subr.mxu0 0.0
  %1415 = vmatpush2.msra.mxu0 %v1023
  %1416 = vmatprep.subr.mxu0 0.0
  %1417 = vmatpush2.msra.mxu0 %v1022
  %1418 = vmatprep.subr.mxu0 0.0
  %1419 = vmatpush2.msra.mxu0 %v1021
  %1420 = vmatprep.subr.mxu0 0.0
  %1421 = vmatpush2.msra.mxu0 %v1020
  %1422 = vmatprep.subr.mxu0 0.0
  %1423 = vmatpush2.msra.mxu0 %v1019
  %1424 = vmatprep.subr.mxu0 0.0
  %1425 = vmatpush2.msra.mxu0 %v1018
  %1426 = vmatprep.subr.mxu0 0.0
  %1427 = vmatpush2.msra.mxu0 %v1017
  %1428 = vmatprep.subr.mxu0 0.0
  %1429 = vmatpush2.msra.mxu0 %v1016
  %1430 = vmatprep.subr.mxu0 0.0
  %1431 = vmatpush2.msra.mxu0 %v1015
  %1432 = vmatprep.mubr.f32.mxu0 %v876
  %1433 = vmatmul.mubr.f32.gmra.mxu0 %v875
  %v1434 = vpop.f32.mrf.mxu0
  %v1435 = vadd.f32 %v1350, %v1434
  %v1436 = vpop.f32.mrf.mxu0
  %1437 = vmatprep.mubr.f32.mxu0 %v892
  %1438 = vmatmul.mubr.f32.gmra.mxu0 %v891
  %v1439 = vpop.f32.mrf.mxu0
  %v1440 = vadd.f32 %v1355, %v1439
  %v1441 = vpop.f32.mrf.mxu0
  %1442 = vmatprep.mubr.f32.mxu0 %v908
  %1443 = vmatmul.mubr.f32.gmra.mxu0 %v907
  %v1444 = vpop.f32.mrf.mxu0
  %v1445 = vadd.f32 %v1360, %v1444
  %v1446 = vpop.f32.mrf.mxu0
  %1447 = vmatprep.mubr.f32.mxu0 %v924
  %1448 = vmatmul.mubr.f32.gmra.mxu0 %v923
  %v1449 = vpop.f32.mrf.mxu0
  %v1450 = vadd.f32 %v1365, %v1449
  %v1451 = vpop.f32.mrf.mxu0
  %1452 = vdwg.mxu0
  %1453 = vmatprep.subr.mxu0 0.0
  %1454 = vmatpush1.msra.mxu0 %v1046
  %1455 = vmatprep.subr.mxu0 0.0
  %1456 = vmatpush1.msra.mxu0 %v1045
  %1457 = vmatprep.subr.mxu0 0.0
  %1458 = vmatpush1.msra.mxu0 %v1044
  %1459 = vmatprep.subr.mxu0 0.0
  %1460 = vmatpush1.msra.mxu0 %v1043
  %1461 = vmatprep.subr.mxu0 0.0
  %1462 = vmatpush1.msra.mxu0 %v1042
  %1463 = vmatprep.subr.mxu0 0.0
  %1464 = vmatpush1.msra.mxu0 %v1041
  %1465 = vmatprep.subr.mxu0 0.0
  %1466 = vmatpush1.msra.mxu0 %v1040
  %1467 = vmatprep.subr.mxu0 0.0
  %1468 = vmatpush1.msra.mxu0 %v1039
  %1469 = vmatprep.subr.mxu0 0.0
  %1470 = vmatpush1.msra.mxu0 %v1038
  %1471 = vmatprep.subr.mxu0 0.0
  %1472 = vmatpush1.msra.mxu0 %v1037
  %1473 = vmatprep.subr.mxu0 0.0
  %1474 = vmatpush1.msra.mxu0 %v1036
  %1475 = vmatprep.subr.mxu0 0.0
  %1476 = vmatpush1.msra.mxu0 %v1035
  %1477 = vmatprep.subr.mxu0 0.0
  %1478 = vmatpush1.msra.mxu0 %v1034
  %1479 = vmatprep.subr.mxu0 0.0
  %1480 = vmatpush1.msra.mxu0 %v1033
  %1481 = vmatprep.subr.mxu0 0.0
  %1482 = vmatpush1.msra.mxu0 %v1032
  %1483 = vmatprep.subr.mxu0 0.0
  %1484 = vmatpush1.msra.mxu0 %v1031
  %1485 = vmatprep.subr.mxu0 0.0
  %1486 = vmatpush2.msra.mxu0 %v1062
  %1487 = vmatprep.subr.mxu0 0.0
  %1488 = vmatpush2.msra.mxu0 %v1061
  %1489 = vmatprep.subr.mxu0 0.0
  %1490 = vmatpush2.msra.mxu0 %v1060
  %1491 = vmatprep.subr.mxu0 0.0
  %1492 = vmatpush2.msra.mxu0 %v1059
  %1493 = vmatprep.subr.mxu0 0.0
  %1494 = vmatpush2.msra.mxu0 %v1058
  %1495 = vmatprep.subr.mxu0 0.0
  %1496 = vmatpush2.msra.mxu0 %v1057
  %1497 = vmatprep.subr.mxu0 0.0
  %1498 = vmatpush2.msra.mxu0 %v1056
  %1499 = vmatprep.subr.mxu0 0.0
  %1500 = vmatpush2.msra.mxu0 %v1055
  %1501 = vmatprep.subr.mxu0 0.0
  %1502 = vmatpush2.msra.mxu0 %v1054
  %1503 = vmatprep.subr.mxu0 0.0
  %1504 = vmatpush2.msra.mxu0 %v1053
  %1505 = vmatprep.subr.mxu0 0.0
  %1506 = vmatpush2.msra.mxu0 %v1052
  %1507 = vmatprep.subr.mxu0 0.0
  %1508 = vmatpush2.msra.mxu0 %v1051
  %1509 = vmatprep.subr.mxu0 0.0
  %1510 = vmatpush2.msra.mxu0 %v1050
  %1511 = vmatprep.subr.mxu0 0.0
  %1512 = vmatpush2.msra.mxu0 %v1049
  %1513 = vmatprep.subr.mxu0 0.0
  %1514 = vmatpush2.msra.mxu0 %v1048
  %1515 = vmatprep.subr.mxu0 0.0
  %1516 = vmatpush2.msra.mxu0 %v1047
  %1517 = vmatprep.mubr.f32.mxu0 %v878
  %1518 = vmatmul.mubr.f32.gmra.mxu0 %v877
  %v1519 = vpop.f32.mrf.mxu0
  %v1520 = vadd.f32 %v1435, %v1519
  %v1521 = vpop.f32.mrf.mxu0
  %1522 = vmatprep.mubr.f32.mxu0 %v894
  %1523 = vmatmul.mubr.f32.gmra.mxu0 %v893
  %v1524 = vpop.f32.mrf.mxu0
  %v1525 = vadd.f32 %v1440, %v1524
  %v1526 = vpop.f32.mrf.mxu0
  %1527 = vmatprep.mubr.f32.mxu0 %v910
  %1528 = vmatmul.mubr.f32.gmra.mxu0 %v909
  %v1529 = vpop.f32.mrf.mxu0
  %v1530 = vadd.f32 %v1445, %v1529
  %v1531 = vpop.f32.mrf.mxu0
  %1532 = vmatprep.mubr.f32.mxu0 %v926
  %1533 = vmatmul.mubr.f32.gmra.mxu0 %v925
  %v1534 = vpop.f32.mrf.mxu0
  %v1535 = vadd.f32 %v1450, %v1534
  %v1536 = vpop.f32.mrf.mxu0
  %1537 = vdwg.mxu0
  %1538 = vmatprep.subr.mxu0 0.0
  %1539 = vmatpush1.msra.mxu0 %v1078
  %1540 = vmatprep.subr.mxu0 0.0
  %1541 = vmatpush1.msra.mxu0 %v1077
  %1542 = vmatprep.subr.mxu0 0.0
  %1543 = vmatpush1.msra.mxu0 %v1076
  %1544 = vmatprep.subr.mxu0 0.0
  %1545 = vmatpush1.msra.mxu0 %v1075
  %1546 = vmatprep.subr.mxu0 0.0
  %1547 = vmatpush1.msra.mxu0 %v1074
  %1548 = vmatprep.subr.mxu0 0.0
  %1549 = vmatpush1.msra.mxu0 %v1073
  %1550 = vmatprep.subr.mxu0 0.0
  %1551 = vmatpush1.msra.mxu0 %v1072
  %1552 = vmatprep.subr.mxu0 0.0
  %1553 = vmatpush1.msra.mxu0 %v1071
  %1554 = vmatprep.subr.mxu0 0.0
  %1555 = vmatpush1.msra.mxu0 %v1070
  %1556 = vmatprep.subr.mxu0 0.0
  %1557 = vmatpush1.msra.mxu0 %v1069
  %1558 = vmatprep.subr.mxu0 0.0
  %1559 = vmatpush1.msra.mxu0 %v1068
  %1560 = vmatprep.subr.mxu0 0.0
  %1561 = vmatpush1.msra.mxu0 %v1067
  %1562 = vmatprep.subr.mxu0 0.0
  %1563 = vmatpush1.msra.mxu0 %v1066
  %1564 = vmatprep.subr.mxu0 0.0
  %1565 = vmatpush1.msra.mxu0 %v1065
  %1566 = vmatprep.subr.mxu0 0.0
  %1567 = vmatpush1.msra.mxu0 %v1064
  %1568 = vmatprep.subr.mxu0 0.0
  %1569 = vmatpush1.msra.mxu0 %v1063
  %1570 = vmatprep.subr.mxu0 0.0
  %1571 = vmatpush2.msra.mxu0 %v1094
  %1572 = vmatprep.subr.mxu0 0.0
  %1573 = vmatpush2.msra.mxu0 %v1093
  %1574 = vmatprep.subr.mxu0 0.0
  %1575 = vmatpush2.msra.mxu0 %v1092
  %1576 = vmatprep.subr.mxu0 0.0
  %1577 = vmatpush2.msra.mxu0 %v1091
  %1578 = vmatprep.subr.mxu0 0.0
  %1579 = vmatpush2.msra.mxu0 %v1090
  %1580 = vmatprep.subr.mxu0 0.0
  %1581 = vmatpush2.msra.mxu0 %v1089
  %1582 = vmatprep.subr.mxu0 0.0
  %1583 = vmatpush2.msra.mxu0 %v1088
  %1584 = vmatprep.subr.mxu0 0.0
  %1585 = vmatpush2.msra.mxu0 %v1087
  %1586 = vmatprep.subr.mxu0 0.0
  %1587 = vmatpush2.msra.mxu0 %v1086
  %1588 = vmatprep.subr.mxu0 0.0
  %1589 = vmatpush2.msra.mxu0 %v1085
  %1590 = vmatprep.subr.mxu0 0.0
  %1591 = vmatpush2.msra.mxu0 %v1084
  %1592 = vmatprep.subr.mxu0 0.0
  %1593 = vmatpush2.msra.mxu0 %v1083
  %1594 = vmatprep.subr.mxu0 0.0
  %1595 = vmatpush2.msra.mxu0 %v1082
  %1596 = vmatprep.subr.mxu0 0.0
  %1597 = vmatpush2.msra.mxu0 %v1081
  %1598 = vmatprep.subr.mxu0 0.0
  %1599 = vmatpush2.msra.mxu0 %v1080
  %1600 = vmatprep.subr.mxu0 0.0
  %1601 = vmatpush2.msra.mxu0 %v1079
  %1602 = vmatprep.mubr.f32.mxu0 %v880
  %1603 = vmatmul.mubr.f32.gmra.mxu0 %v879
  %v1604 = vpop.f32.mrf.mxu0
  %v1605 = vadd.f32 %v1520, %v1604
  %v1606 = vpop.f32.mrf.mxu0
  %1607 = vmatprep.mubr.f32.mxu0 %v896
  %1608 = vmatmul.mubr.f32.gmra.mxu0 %v895
  %v1609 = vpop.f32.mrf.mxu0
  %v1610 = vadd.f32 %v1525, %v1609
  %v1611 = vpop.f32.mrf.mxu0
  %1612 = vmatprep.mubr.f32.mxu0 %v912
  %1613 = vmatmul.mubr.f32.gmra.mxu0 %v911
  %v1614 = vpop.f32.mrf.mxu0
  %v1615 = vadd.f32 %v1530, %v1614
  %v1616 = vpop.f32.mrf.mxu0
  %1617 = vmatprep.mubr.f32.mxu0 %v928
  %1618 = vmatmul.mubr.f32.gmra.mxu0 %v927
  %v1619 = vpop.f32.mrf.mxu0
  %v1620 = vadd.f32 %v1535, %v1619
  %v1621 = vpop.f32.mrf.mxu0
  %1622 = vdwg.mxu0
  %1623 = vmatprep.subr.mxu0 0.0
  %1624 = vmatpush1.msra.mxu0 %v1110
  %1625 = vmatprep.subr.mxu0 0.0
  %1626 = vmatpush1.msra.mxu0 %v1109
  %1627 = vmatprep.subr.mxu0 0.0
  %1628 = vmatpush1.msra.mxu0 %v1108
  %1629 = vmatprep.subr.mxu0 0.0
  %1630 = vmatpush1.msra.mxu0 %v1107
  %1631 = vmatprep.subr.mxu0 0.0
  %1632 = vmatpush1.msra.mxu0 %v1106
  %1633 = vmatprep.subr.mxu0 0.0
  %1634 = vmatpush1.msra.mxu0 %v1105
  %1635 = vmatprep.subr.mxu0 0.0
  %1636 = vmatpush1.msra.mxu0 %v1104
  %1637 = vmatprep.subr.mxu0 0.0
  %1638 = vmatpush1.msra.mxu0 %v1103
  %1639 = vmatprep.subr.mxu0 0.0
  %1640 = vmatpush1.msra.mxu0 %v1102
  %1641 = vmatprep.subr.mxu0 0.0
  %1642 = vmatpush1.msra.mxu0 %v1101
  %1643 = vmatprep.subr.mxu0 0.0
  %1644 = vmatpush1.msra.mxu0 %v1100
  %1645 = vmatprep.subr.mxu0 0.0
  %1646 = vmatpush1.msra.mxu0 %v1099
  %1647 = vmatprep.subr.mxu0 0.0
  %1648 = vmatpush1.msra.mxu0 %v1098
  %1649 = vmatprep.subr.mxu0 0.0
  %1650 = vmatpush1.msra.mxu0 %v1097
  %1651 = vmatprep.subr.mxu0 0.0
  %1652 = vmatpush1.msra.mxu0 %v1096
  %1653 = vmatprep.subr.mxu0 0.0
  %1654 = vmatpush1.msra.mxu0 %v1095
  %1655 = vmatprep.subr.mxu0 0.0
  %1656 = vmatpush2.msra.mxu0 %v1126
  %1657 = vmatprep.subr.mxu0 0.0
  %1658 = vmatpush2.msra.mxu0 %v1125
  %1659 = vmatprep.subr.mxu0 0.0
  %1660 = vmatpush2.msra.mxu0 %v1124
  %1661 = vmatprep.subr.mxu0 0.0
  %1662 = vmatpush2.msra.mxu0 %v1123
  %1663 = vmatprep.subr.mxu0 0.0
  %1664 = vmatpush2.msra.mxu0 %v1122
  %1665 = vmatprep.subr.mxu0 0.0
  %1666 = vmatpush2.msra.mxu0 %v1121
  %1667 = vmatprep.subr.mxu0 0.0
  %1668 = vmatpush2.msra.mxu0 %v1120
  %1669 = vmatprep.subr.mxu0 0.0
  %1670 = vmatpush2.msra.mxu0 %v1119
  %1671 = vmatprep.subr.mxu0 0.0
  %1672 = vmatpush2.msra.mxu0 %v1118
  %1673 = vmatprep.subr.mxu0 0.0
  %1674 = vmatpush2.msra.mxu0 %v1117
  %1675 = vmatprep.subr.mxu0 0.0
  %1676 = vmatpush2.msra.mxu0 %v1116
  %1677 = vmatprep.subr.mxu0 0.0
  %1678 = vmatpush2.msra.mxu0 %v1115
  %1679 = vmatprep.subr.mxu0 0.0
  %1680 = vmatpush2.msra.mxu0 %v1114
  %1681 = vmatprep.subr.mxu0 0.0
  %1682 = vmatpush2.msra.mxu0 %v1113
  %1683 = vmatprep.subr.mxu0 0.0
  %1684 = vmatpush2.msra.mxu0 %v1112
  %1685 = vmatprep.subr.mxu0 0.0
  %1686 = vmatpush2.msra.mxu0 %v1111
  %1687 = vmatprep.mubr.f32.mxu0 %v882
  %1688 = vmatmul.mubr.f32.gmra.mxu0 %v881
  %v1689 = vpop.f32.mrf.mxu0
  %v1690 = vadd.f32 %v1605, %v1689
  %v1691 = vpop.f32.mrf.mxu0
  %1692 = vmatprep.mubr.f32.mxu0 %v898
  %1693 = vmatmul.mubr.f32.gmra.mxu0 %v897
  %v1694 = vpop.f32.mrf.mxu0
  %v1695 = vadd.f32 %v1610, %v1694
  %v1696 = vpop.f32.mrf.mxu0
  %1697 = vmatprep.mubr.f32.mxu0 %v914
  %1698 = vmatmul.mubr.f32.gmra.mxu0 %v913
  %v1699 = vpop.f32.mrf.mxu0
  %v1700 = vadd.f32 %v1615, %v1699
  %v1701 = vpop.f32.mrf.mxu0
  %1702 = vmatprep.mubr.f32.mxu0 %v930
  %1703 = vmatmul.mubr.f32.gmra.mxu0 %v929
  %v1704 = vpop.f32.mrf.mxu0
  %v1705 = vadd.f32 %v1620, %v1704
  %v1706 = vpop.f32.mrf.mxu0
  %1707 = vdwg.mxu0
  %1708 = vmatprep.subr.mxu0 0.0
  %1709 = vmatpush1.msra.mxu0 %v1142
  %1710 = vmatprep.subr.mxu0 0.0
  %1711 = vmatpush1.msra.mxu0 %v1141
  %1712 = vmatprep.subr.mxu0 0.0
  %1713 = vmatpush1.msra.mxu0 %v1140
  %1714 = vmatprep.subr.mxu0 0.0
  %1715 = vmatpush1.msra.mxu0 %v1139
  %1716 = vmatprep.subr.mxu0 0.0
  %1717 = vmatpush1.msra.mxu0 %v1138
  %1718 = vmatprep.subr.mxu0 0.0
  %1719 = vmatpush1.msra.mxu0 %v1137
  %1720 = vmatprep.subr.mxu0 0.0
  %1721 = vmatpush1.msra.mxu0 %v1136
  %1722 = vmatprep.subr.mxu0 0.0
  %1723 = vmatpush1.msra.mxu0 %v1135
  %1724 = vmatprep.subr.mxu0 0.0
  %1725 = vmatpush1.msra.mxu0 %v1134
  %1726 = vmatprep.subr.mxu0 0.0
  %1727 = vmatpush1.msra.mxu0 %v1133
  %1728 = vmatprep.subr.mxu0 0.0
  %1729 = vmatpush1.msra.mxu0 %v1132
  %1730 = vmatprep.subr.mxu0 0.0
  %1731 = vmatpush1.msra.mxu0 %v1131
  %1732 = vmatprep.subr.mxu0 0.0
  %1733 = vmatpush1.msra.mxu0 %v1130
  %1734 = vmatprep.subr.mxu0 0.0
  %1735 = vmatpush1.msra.mxu0 %v1129
  %1736 = vmatprep.subr.mxu0 0.0
  %1737 = vmatpush1.msra.mxu0 %v1128
  %1738 = vmatprep.subr.mxu0 0.0
  %1739 = vmatpush1.msra.mxu0 %v1127
  %1740 = vmatprep.subr.mxu0 0.0
  %1741 = vmatpush2.msra.mxu0 %v1158
  %1742 = vmatprep.subr.mxu0 0.0
  %1743 = vmatpush2.msra.mxu0 %v1157
  %1744 = vmatprep.subr.mxu0 0.0
  %1745 = vmatpush2.msra.mxu0 %v1156
  %1746 = vmatprep.subr.mxu0 0.0
  %1747 = vmatpush2.msra.mxu0 %v1155
  %1748 = vmatprep.subr.mxu0 0.0
  %1749 = vmatpush2.msra.mxu0 %v1154
  %1750 = vmatprep.subr.mxu0 0.0
  %1751 = vmatpush2.msra.mxu0 %v1153
  %1752 = vmatprep.subr.mxu0 0.0
  %1753 = vmatpush2.msra.mxu0 %v1152
  %1754 = vmatprep.subr.mxu0 0.0
  %1755 = vmatpush2.msra.mxu0 %v1151
  %1756 = vmatprep.subr.mxu0 0.0
  %1757 = vmatpush2.msra.mxu0 %v1150
  %1758 = vmatprep.subr.mxu0 0.0
  %1759 = vmatpush2.msra.mxu0 %v1149
  %1760 = vmatprep.subr.mxu0 0.0
  %1761 = vmatpush2.msra.mxu0 %v1148
  %1762 = vmatprep.subr.mxu0 0.0
  %1763 = vmatpush2.msra.mxu0 %v1147
  %1764 = vmatprep.subr.mxu0 0.0
  %1765 = vmatpush2.msra.mxu0 %v1146
  %1766 = vmatprep.subr.mxu0 0.0
  %1767 = vmatpush2.msra.mxu0 %v1145
  %1768 = vmatprep.subr.mxu0 0.0
  %1769 = vmatpush2.msra.mxu0 %v1144
  %1770 = vmatprep.subr.mxu0 0.0
  %1771 = vmatpush2.msra.mxu0 %v1143
  %1772 = vmatprep.mubr.f32.mxu0 %v884
  %1773 = vmatmul.mubr.f32.gmra.mxu0 %v883
  %v1774 = vpop.f32.mrf.mxu0
  %v1775 = vadd.f32 %v1690, %v1774
  %v1776 = vpop.f32.mrf.mxu0
  %1777 = vmatprep.mubr.f32.mxu0 %v900
  %1778 = vmatmul.mubr.f32.gmra.mxu0 %v899
  %v1779 = vpop.f32.mrf.mxu0
  %v1780 = vadd.f32 %v1695, %v1779
  %v1781 = vpop.f32.mrf.mxu0
  %1782 = vmatprep.mubr.f32.mxu0 %v916
  %1783 = vmatmul.mubr.f32.gmra.mxu0 %v915
  %v1784 = vpop.f32.mrf.mxu0
  %v1785 = vadd.f32 %v1700, %v1784
  %v1786 = vpop.f32.mrf.mxu0
  %1787 = vmatprep.mubr.f32.mxu0 %v932
  %1788 = vmatmul.mubr.f32.gmra.mxu0 %v931
  %v1789 = vpop.f32.mrf.mxu0
  %v1790 = vadd.f32 %v1705, %v1789
  %v1791 = vpop.f32.mrf.mxu0
  %1792 = vdwg.mxu0
  %1793 = vmatprep.subr.mxu0 0.0
  %1794 = vmatpush1.msra.mxu0 %v1174
  %1795 = vmatprep.subr.mxu0 0.0
  %1796 = vmatpush1.msra.mxu0 %v1173
  %1797 = vmatprep.subr.mxu0 0.0
  %1798 = vmatpush1.msra.mxu0 %v1172
  %1799 = vmatprep.subr.mxu0 0.0
  %1800 = vmatpush1.msra.mxu0 %v1171
  %1801 = vmatprep.subr.mxu0 0.0
  %1802 = vmatpush1.msra.mxu0 %v1170
  %1803 = vmatprep.subr.mxu0 0.0
  %1804 = vmatpush1.msra.mxu0 %v1169
  %1805 = vmatprep.subr.mxu0 0.0
  %1806 = vmatpush1.msra.mxu0 %v1168
  %1807 = vmatprep.subr.mxu0 0.0
  %1808 = vmatpush1.msra.mxu0 %v1167
  %1809 = vmatprep.subr.mxu0 0.0
  %1810 = vmatpush1.msra.mxu0 %v1166
  %1811 = vmatprep.subr.mxu0 0.0
  %1812 = vmatpush1.msra.mxu0 %v1165
  %1813 = vmatprep.subr.mxu0 0.0
  %1814 = vmatpush1.msra.mxu0 %v1164
  %1815 = vmatprep.subr.mxu0 0.0
  %1816 = vmatpush1.msra.mxu0 %v1163
  %1817 = vmatprep.subr.mxu0 0.0
  %1818 = vmatpush1.msra.mxu0 %v1162
  %1819 = vmatprep.subr.mxu0 0.0
  %1820 = vmatpush1.msra.mxu0 %v1161
  %1821 = vmatprep.subr.mxu0 0.0
  %1822 = vmatpush1.msra.mxu0 %v1160
  %1823 = vmatprep.subr.mxu0 0.0
  %1824 = vmatpush1.msra.mxu0 %v1159
  %1825 = vmatprep.subr.mxu0 0.0
  %1826 = vmatpush2.msra.mxu0 %v1190
  %1827 = vmatprep.subr.mxu0 0.0
  %1828 = vmatpush2.msra.mxu0 %v1189
  %1829 = vmatprep.subr.mxu0 0.0
  %1830 = vmatpush2.msra.mxu0 %v1188
  %1831 = vmatprep.subr.mxu0 0.0
  %1832 = vmatpush2.msra.mxu0 %v1187
  %1833 = vmatprep.subr.mxu0 0.0
  %1834 = vmatpush2.msra.mxu0 %v1186
  %1835 = vmatprep.subr.mxu0 0.0
  %1836 = vmatpush2.msra.mxu0 %v1185
  %1837 = vmatprep.subr.mxu0 0.0
  %1838 = vmatpush2.msra.mxu0 %v1184
  %1839 = vmatprep.subr.mxu0 0.0
  %1840 = vmatpush2.msra.mxu0 %v1183
  %1841 = vmatprep.subr.mxu0 0.0
  %1842 = vmatpush2.msra.mxu0 %v1182
  %1843 = vmatprep.subr.mxu0 0.0
  %1844 = vmatpush2.msra.mxu0 %v1181
  %1845 = vmatprep.subr.mxu0 0.0
  %1846 = vmatpush2.msra.mxu0 %v1180
  %1847 = vmatprep.subr.mxu0 0.0
  %1848 = vmatpush2.msra.mxu0 %v1179
  %1849 = vmatprep.subr.mxu0 0.0
  %1850 = vmatpush2.msra.mxu0 %v1178
  %1851 = vmatprep.subr.mxu0 0.0
  %1852 = vmatpush2.msra.mxu0 %v1177
  %1853 = vmatprep.subr.mxu0 0.0
  %1854 = vmatpush2.msra.mxu0 %v1176
  %1855 = vmatprep.subr.mxu0 0.0
  %1856 = vmatpush2.msra.mxu0 %v1175
  %1857 = vmatprep.mubr.f32.mxu0 %v886
  %1858 = vmatmul.mubr.f32.gmra.mxu0 %v885
  %v1859 = vpop.f32.mrf.mxu0
  %v1860 = vadd.f32 %v1775, %v1859
  %v1861 = vpop.f32.mrf.mxu0
  %1862 = vmatprep.mubr.f32.mxu0 %v902
  %1863 = vmatmul.mubr.f32.gmra.mxu0 %v901
  %v1864 = vpop.f32.mrf.mxu0
  %v1865 = vadd.f32 %v1780, %v1864
  %v1866 = vpop.f32.mrf.mxu0
  %1867 = vmatprep.mubr.f32.mxu0 %v918
  %1868 = vmatmul.mubr.f32.gmra.mxu0 %v917
  %v1869 = vpop.f32.mrf.mxu0
  %v1870 = vadd.f32 %v1785, %v1869
  %v1871 = vpop.f32.mrf.mxu0
  %1872 = vmatprep.mubr.f32.mxu0 %v934
  %1873 = vmatmul.mubr.f32.gmra.mxu0 %v933
  %v1874 = vpop.f32.mrf.mxu0
  %v1875 = vadd.f32 %v1790, %v1874
  %v1876 = vpop.f32.mrf.mxu0
  %1877 = vdwg.mxu0
  %v1878 = vadd.f32 %v1860, %v26
  %v1879 = vadd.f32 %v1865, %v27
  %v1880 = vadd.f32 %v1870, %v28
  %v1881 = vadd.f32 %v1875, %v29
  %v1882 = vsel %vm146, %v1878, 0.0
  %1883 = vadd.xlane.f32.xlu0 %v1882
  %v1884 = vpop.xlane.xlu0 %1883
  %v1885 = vsel %vm146, %v1879, 0.0
  %1886 = vadd.xlane.f32.xlu0 %v1885
  %v1887 = vpop.xlane.xlu0 %1886
  %v1888 = vsel %vm146, %v1880, 0.0
  %1889 = vadd.xlane.f32.xlu0 %v1888
  %v1890 = vpop.xlane.xlu0 %1889
  %v1891 = vsel %vm146, %v1881, 0.0
  %1892 = vadd.xlane.f32.xlu0 %v1891
  %v1893 = vpop.xlane.xlu0 %1892
  %v1894 = vrcp.pop 16.0
  %v1895 = vmul.f32 %v1884, %v1894
  %v1896 = vmul.f32 %v1887, %v1894
  %v1897 = vmul.f32 %v1890, %v1894
  %v1898 = vmul.f32 %v1893, %v1894
  %v1899 = vsub.f32 %v1878, %v1895
  %v1900 = vsub.f32 %v1879, %v1896
  %v1901 = vsub.f32 %v1880, %v1897
  %v1902 = vsub.f32 %v1881, %v1898
  %v1903 = vmul.f32 %v1899, %v1899
  %v1904 = vmul.f32 %v1900, %v1900
  %v1905 = vmul.f32 %v1901, %v1901
  %v1906 = vmul.f32 %v1902, %v1902
  %v1907 = vsel %vm146, %v1903, 0.0
  %1908 = vadd.xlane.f32.xlu0 %v1907
  %v1909 = vpop.xlane.xlu0 %1908
  %v1910 = vsel %vm146, %v1904, 0.0
  %1911 = vadd.xlane.f32.xlu0 %v1910
  %v1912 = vpop.xlane.xlu0 %1911
  %v1913 = vsel %vm146, %v1905, 0.0
  %1914 = vadd.xlane.f32.xlu0 %v1913
  %v1915 = vpop.xlane.xlu0 %1914
  %v1916 = vsel %vm146, %v1906, 0.0
  %1917 = vadd.xlane.f32.xlu0 %v1916
  %v1918 = vpop.xlane.xlu0 %1917
  %v1919 = vmul.f32 %v1909, %v1894
  %v1920 = vmul.f32 %v1912, %v1894
  %v1921 = vmul.f32 %v1915, %v1894
  %v1922 = vmul.f32 %v1918, %v1894
  %v1923 = vadd.f32 %v1919, 1e-05
  %v1924 = vadd.f32 %v1920, 1e-05
  %v1925 = vadd.f32 %v1921, 1e-05
  %v1926 = vadd.f32 %v1922, 1e-05
  %v1927 = vrsqrt.pop %v1923
  %v1928 = vrsqrt.pop %v1924
  %v1929 = vrsqrt.pop %v1925
  %v1930 = vrsqrt.pop %v1926
  %v1931 = vmul.f32 %v1899, %v1927
  %v1932 = vmul.f32 %v1900, %v1928
  %v1933 = vmul.f32 %v1901, %v1929
  %v1934 = vmul.f32 %v1902, %v1930
  %v1935 = vld [vmem:[%s5] sm:$0x1]
  %v1937 = vlaneseq
  %v1938 = vshrl.u32 %v1937, 7
  %v1939 = vsub.s32 0, %v1938
  %v1940 = vrot.slane %v1935, %v1939
  %v1942 = vmul.f32 %v1931, %v1940
  %v1943 = vmul.f32 %v1932, %v1940
  %v1944 = vmul.f32 %v1933, %v1940
  %v1945 = vmul.f32 %v1934, %v1940
  %v1946 = vld [vmem:[%s6] sm:$0x1]
  %v1948 = vlaneseq
  %v1949 = vshrl.u32 %v1948, 7
  %v1950 = vsub.s32 0, %v1949
  %v1951 = vrot.slane %v1946, %v1950
  %v1953 = vadd.f32 %v1942, %v1951
  %v1954 = vadd.f32 %v1943, %v1951
  %v1955 = vadd.f32 %v1944, %v1951
  %v1956 = vadd.f32 %v1945, %v1951
  %1957 = vst.msk [vmem:[%s7] sm:$0xff] %vm146, %v1953
  %1958 = vst.msk [vmem:[%s7 + $0x8] sm:$0xff] %vm146, %v1954
  %1959 = vst.msk [vmem:[%s7 + $0x10] sm:$0xff] %vm146, %v1955
  %1960 = vst.msk [vmem:[%s7 + $0x18] sm:$0xff] %vm146, %v1956
  // Predicated region
  $region30: #{contact_attention_simple_forward.19} parent=0 // pred_check
    _
  $region31: #{contact_attention_simple_forward.19} parent=0 // pred_check_branch
    %1962 = sbr.rel (0) target = $region33
  $region32: #{contact_attention_simple_forward.19} parent=0 // pred_region
    _
  $region33: #{contact_attention_simple_forward.19} parent=0 // pred_fallthru
    _
  // Predicated region
  $region34: #{contact_attention_simple_forward.19} parent=0 // pred_check
    _
  $region35: #{contact_attention_simple_forward.19} parent=0 // pred_check_branch
    %1964 = sbr.rel (0) target = $region37
  $region36: #{contact_attention_simple_forward.19} parent=0 // pred_region
    _
  $region37: #{contact_attention_simple_forward.19} parent=0 // pred_fallthru
    _

// kernel: contact_attention_simple_forward.29
$region0: #{contact_attention_simple_forward.29}
  #allocation0 [shape = 'u32[]', space=smem, size = 0x4, offset = 0x4, fixed_abs, tag = 'smem constant byte address 0x4 - core index']
  #allocation1 [shape = 'u32[144,128]{1,0:T(1,128)}', space=vmem, size = 0x12000, scoped, tag = 'internal scratch']
  #allocation2 [shape = 'f32[1,1]{1,0:T(1,128)S(6)}', space=smem, size = 0x200, scoped, tag = 'scoped memory for contact_attention_simple_forward.29']
  %s0 = inlined_call_operand.vmem [shape: f32[2,16,16], index: 0, kind: input, shape index: {}, may-alias: {0,1}]
  %s1 = inlined_call_operand.vmem [shape: f32[2,16,16], index: 1, kind: input, shape index: {}, may-alias: {0,1}]
  %s2 = inlined_call_operand.vmem [shape: f32[1,8], index: 2, kind: input, shape index: {}]
  %s3 = inlined_call_operand.vmem [shape: f32[8,8], index: 3, kind: input, shape index: {}]
  %s4 = inlined_call_operand.vmem [shape: f32[1,8], index: 4, kind: input, shape index: {}]
  %s5 = inlined_call_operand.vmem [shape: f32[1,8], index: 5, kind: input, shape index: {}]
  %s6 = inlined_call_operand.<no memory space> [shape: f32[1,1], index: 6, kind: input, shape index: {}]
  %s7 = inlined_call_operand.hbm [shape: f32[2,16,16], index: 7, kind: output, shape index: {}]
  %s8 = sld [smem:[#allocation0]]
  $region61: #{contact_attention_simple_forward.29} parent=0
    _
  %s10 = ssub.s32 1, %s8
  %s11 = scalar_select 0, %s10, %s8
  %12 = sst [smem:[#allocation2]] %s6
  $region1: #{contact_attention_simple_forward.29} parent=0
    #allocation3 [shape = 'u8[16384]{0}', space=vmem, size = 0x4000, scoped, tag = 'output window, operand 0']
    #allocation4 [shape = 's32[2]{0}', space=sflag, size = 0x8, scoped, tag = 'scoped memory for contact_attention_simple_forward.29']
    %13 = vsyncpa [#allocation4], 0
    %s14 = scalar_lea.sflag [#allocation4], 1
    %15 = vsyncpa %s14, 0
    loop: start=0, step=1, limit=4
    $region2: #{contact_attention_simple_forward.29} parent=1 // loop_pre_header
      _
    $region3: #{contact_attention_simple_forward.29} parent=1 // loop_header
      %s17 = sphi 0, %s21
      %p18 = scmp.ge.s32.totalorder %s17, 4
      %s24 = sphi 0, %s43
      %s25 = sphi 0, %s39
      %s26 = sphi 0, %s35
      %s27 = sphi 0, %s24
      %s28 = sphi 0, %s25
      %s29 = sphi 0, %s26
      %s30 = sphi 0, %s27
      %s31 = sphi 0, %s28
      %s32 = sphi 0, %s29
      %s48 = sphi 0, %s50
      %s51 = sphi 0, %s48
      %s52 = sphi 0, %s51
      %s68 = sphi 0, %s52
      %s76 = sphi 0, %s78
      %s79 = sphi 0, %s76
      %s80 = sphi 0, %s79
      %s96 = sphi 0, %s80
      %s100 = sphi 0, %s100
      %s102 = sphi 0, %s100
      %s103 = sphi 0, %s102
      %s117 = sphi 0, %s103
      %s121 = sphi 0, %s121
      %s123 = sphi 0, %s121
      %s124 = sphi 0, %s123
      %s138 = sphi 0, %s124
      %s142 = sphi 0, %s142
      %s144 = sphi 0, %s142
      %s145 = sphi 0, %s144
      %s159 = sphi 0, %s145
      %s163 = sphi 0, %s163
      %s165 = sphi 0, %s163
      %s166 = sphi 0, %s165
      %s180 = sphi 0, %s166
      %s184 = sphi 0, %s184
      %s186 = sphi 0, %s184
      %s187 = sphi 0, %s186
      %s201 = sphi 0, %s187
      %s211 = sphi 0, %s213
      %s214 = sphi 0, %s211
      %s215 = sphi 0, %s214
      %s231 = sphi 0, %s215
    $region4: #{contact_attention_simple_forward.29} parent=1 // loop_header_branch
      %20 = sbr.rel (%p18) target = $region8
    $region5: #{contact_attention_simple_forward.29} parent=1 // loop_body
      %s22 = ssub.s32 %s17, 1
      %s23 = ssub.s32 %s17, 2
      %s33 = sadd.s32 1, %s26
      %p34 = scmp.ge.s32.totalorder %s33, 1
      %s35 = scalar_select %p34, 0, %s33
      %s36 = sadd.s32 1, %s25
      %s37 = scalar_select %p34, %s36, %s25
      %p38 = scmp.ge.s32.totalorder %s37, 1
      %s39 = scalar_select %p38, 0, %s37
      %s40 = sadd.s32 1, %s24
      %s41 = scalar_select %p38, %s40, %s24
      %p42 = scmp.ge.s32.totalorder %s41, 2
      %s43 = scalar_select %p42, 0, %s41
      %s44 = ssub.s32 %s24, %s43
      %s45 = ssub.s32 %s25, %s39
      %s46 = sor.u32 %s44, %s45
      %p47 = scmp.eq.s32.totalorder %s46, 0
      %s49 = sadd.s32 %s48, 1
      %s50 = scalar_select %p47, %s48, %s49
      %p53 = pneg %p47
      %p54 = scmp.eq.s32.totalorder %s17, 1
      %p55 = por %p53, %p54
      %p56 = scmp.ne.s32.totalorder %s48, %s51
      %p57 = scmp.eq.s32.totalorder %s17, 0
      %p58 = por %p56, %p57
      %p59 = scmp.ne.s32.totalorder %s48, %s51
      %p60 = scmp.eq.s32.totalorder %s22, 1
      %p61 = por %p59, %p60
      %p62 = scmp.ne.s32.totalorder %s51, %s52
      %p63 = scmp.eq.s32.totalorder %s22, 0
      %p64 = por %p62, %p63
      %p65 = scmp.ne.s32.totalorder %s51, %s52
      %p66 = scmp.eq.s32.totalorder %s23, 1
      %p67 = por %p65, %p66
      %p69 = scmp.ne.s32.totalorder %s52, %s68
      %p70 = scmp.eq.s32.totalorder %s23, 0
      %p71 = por %p69, %p70
      %s72 = ssub.s32 %s24, %s43
      %s73 = ssub.s32 %s26, %s35
      %s74 = sor.u32 %s72, %s73
      %p75 = scmp.eq.s32.totalorder %s74, 0
      %s77 = sadd.s32 %s76, 1
      %s78 = scalar_select %p75, %s76, %s77
      %p81 = pneg %p75
      %p82 = scmp.eq.s32.totalorder %s17, 1
      %p83 = por %p81, %p82
      %p84 = scmp.ne.s32.totalorder %s76, %s79
      %p85 = scmp.eq.s32.totalorder %s17, 0
      %p86 = por %p84, %p85
      %p87 = scmp.ne.s32.totalorder %s76, %s79
      %p88 = scmp.eq.s32.totalorder %s22, 1
      %p89 = por %p87, %p88
      %p90 = scmp.ne.s32.totalorder %s79, %s80
      %p91 = scmp.eq.s32.totalorder %s22, 0
      %p92 = por %p90, %p91
      %p93 = scmp.ne.s32.totalorder %s79, %s80
      %p94 = scmp.eq.s32.totalorder %s23, 1
      %p95 = por %p93, %p94
      %p97 = scmp.ne.s32.totalorder %s80, %s96
      %p98 = scmp.eq.s32.totalorder %s23, 0
      %p99 = por %p97, %p98
      %s101 = sadd.s32 %s100, 1
      %p104 = scmp.eq.s32.totalorder %s17, 1
      %p105 = scmp.ne.s32.totalorder %s100, %s102
      %p106 = scmp.eq.s32.totalorder %s17, 0
      %p107 = por %p105, %p106
      %p108 = scmp.ne.s32.totalorder %s100, %s102
      %p109 = scmp.eq.s32.totalorder %s22, 1
      %p110 = por %p108, %p109
      %p111 = scmp.ne.s32.totalorder %s102, %s103
      %p112 = scmp.eq.s32.totalorder %s22, 0
      %p113 = por %p111, %p112
      %p114 = scmp.ne.s32.totalorder %s102, %s103
      %p115 = scmp.eq.s32.totalorder %s23, 1
      %p116 = por %p114, %p115
      %p118 = scmp.ne.s32.totalorder %s103, %s117
      %p119 = scmp.eq.s32.totalorder %s23, 0
      %p120 = por %p118, %p119
      %s122 = sadd.s32 %s121, 1
      %p125 = scmp.eq.s32.totalorder %s17, 1
      %p126 = scmp.ne.s32.totalorder %s121, %s123
      %p127 = scmp.eq.s32.totalorder %s17, 0
      %p128 = por %p126, %p127
      %p129 = scmp.ne.s32.totalorder %s121, %s123
      %p130 = scmp.eq.s32.totalorder %s22, 1
      %p131 = por %p129, %p130
      %p132 = scmp.ne.s32.totalorder %s123, %s124
      %p133 = scmp.eq.s32.totalorder %s22, 0
      %p134 = por %p132, %p133
      %p135 = scmp.ne.s32.totalorder %s123, %s124
      %p136 = scmp.eq.s32.totalorder %s23, 1
      %p137 = por %p135, %p136
      %p139 = scmp.ne.s32.totalorder %s124, %s138
      %p140 = scmp.eq.s32.totalorder %s23, 0
      %p141 = por %p139, %p140
      %s143 = sadd.s32 %s142, 1
      %p146 = scmp.eq.s32.totalorder %s17, 1
      %p147 = scmp.ne.s32.totalorder %s142, %s144
      %p148 = scmp.eq.s32.totalorder %s17, 0
      %p149 = por %p147, %p148
      %p150 = scmp.ne.s32.totalorder %s142, %s144
      %p151 = scmp.eq.s32.totalorder %s22, 1
      %p152 = por %p150, %p151
      %p153 = scmp.ne.s32.totalorder %s144, %s145
      %p154 = scmp.eq.s32.totalorder %s22, 0
      %p155 = por %p153, %p154
      %p156 = scmp.ne.s32.totalorder %s144, %s145
      %p157 = scmp.eq.s32.totalorder %s23, 1
      %p158 = por %p156, %p157
      %p160 = scmp.ne.s32.totalorder %s145, %s159
      %p161 = scmp.eq.s32.totalorder %s23, 0
      %p162 = por %p160, %p161
      %s164 = sadd.s32 %s163, 1
      %p167 = scmp.eq.s32.totalorder %s17, 1
      %p168 = scmp.ne.s32.totalorder %s163, %s165
      %p169 = scmp.eq.s32.totalorder %s17, 0
      %p170 = por %p168, %p169
      %p171 = scmp.ne.s32.totalorder %s163, %s165
      %p172 = scmp.eq.s32.totalorder %s22, 1
      %p173 = por %p171, %p172
      %p174 = scmp.ne.s32.totalorder %s165, %s166
      %p175 = scmp.eq.s32.totalorder %s22, 0
      %p176 = por %p174, %p175
      %p177 = scmp.ne.s32.totalorder %s165, %s166
      %p178 = scmp.eq.s32.totalorder %s23, 1
      %p179 = por %p177, %p178
      %p181 = scmp.ne.s32.totalorder %s166, %s180
      %p182 = scmp.eq.s32.totalorder %s23, 0
      %p183 = por %p181, %p182
      %s185 = sadd.s32 %s184, 1
      %p188 = scmp.eq.s32.totalorder %s17, 1
      %p189 = scmp.ne.s32.totalorder %s184, %s186
      %p190 = scmp.eq.s32.totalorder %s17, 0
      %p191 = por %p189, %p190
      %p192 = scmp.ne.s32.totalorder %s184, %s186
      %p193 = scmp.eq.s32.totalorder %s22, 1
      %p194 = por %p192, %p193
      %p195 = scmp.ne.s32.totalorder %s186, %s187
      %p196 = scmp.eq.s32.totalorder %s22, 0
      %p197 = por %p195, %p196
      %p198 = scmp.ne.s32.totalorder %s186, %s187
      %p199 = scmp.eq.s32.totalorder %s23, 1
      %p200 = por %p198, %p199
      %p202 = scmp.ne.s32.totalorder %s187, %s201
      %p203 = scmp.eq.s32.totalorder %s23, 0
      %p204 = por %p202, %p203
      %s205 = ssub.s32 %s24, %s43
      %s206 = ssub.s32 %s25, %s39
      %s207 = sor.u32 %s205, %s206
      %s208 = ssub.s32 %s26, %s35
      %s209 = sor.u32 %s207, %s208
      %p210 = scmp.eq.s32.totalorder %s209, 0
      %s212 = sadd.s32 %s211, 1
      %s213 = scalar_select %p210, %s211, %s212
      %p216 = pneg %p210
      %p217 = scmp.eq.s32.totalorder %s17, 1
      %p218 = por %p216, %p217
      %p219 = scmp.ne.s32.totalorder %s211, %s214
      %p220 = scmp.eq.s32.totalorder %s17, 0
      %p221 = por %p219, %p220
      %p222 = scmp.ne.s32.totalorder %s211, %s214
      %p223 = scmp.eq.s32.totalorder %s22, 1
      %p224 = por %p222, %p223
      %p225 = scmp.ne.s32.totalorder %s214, %s215
      %p226 = scmp.eq.s32.totalorder %s22, 0
      %p227 = por %p225, %p226
      %p228 = scmp.ne.s32.totalorder %s214, %s215
      %p229 = scmp.eq.s32.totalorder %s23, 1
      %p230 = por %p228, %p229
      %p232 = scmp.ne.s32.totalorder %s215, %s231
      %p233 = scmp.eq.s32.totalorder %s23, 0
      %p234 = por %p232, %p233
      %p235 = scmp.le.s32.totalorder 1, %s17
      %p236 = scmp.lt.s32.totalorder %s17, 3
      %p237 = pnand %p235, %p236
      %p238 = pneg %p237
      // Predicated region
      $region9: #{contact_attention_simple_forward.29} parent=5 // pred_check
        _
      $region10: #{contact_attention_simple_forward.29} parent=5 // pred_check_branch
        %240 = sbr.rel (%p237) target = $region12
      $region11: #{contact_attention_simple_forward.29} parent=5 // pred_region
        %s241 = ssub.s32 %s17, 1
        // Predicated region
        $region13: #{contact_attention_simple_forward.29} parent=11 // pred_check
          %p242 = pneg %p113
        $region14: #{contact_attention_simple_forward.29} parent=11 // pred_check_branch
          %244 = sbr.rel (%p242) target = $region16
        $region15: #{contact_attention_simple_forward.29} parent=11 // pred_region
          _
        $region16: #{contact_attention_simple_forward.29} parent=11 // pred_fallthru
          _
        // Predicated region
        $region17: #{contact_attention_simple_forward.29} parent=11 // pred_check
          %p245 = pneg %p134
        $region18: #{contact_attention_simple_forward.29} parent=11 // pred_check_branch
          %247 = sbr.rel (%p245) target = $region20
        $region19: #{contact_attention_simple_forward.29} parent=11 // pred_region
          _
        $region20: #{contact_attention_simple_forward.29} parent=11 // pred_fallthru
          _
        // Predicated region
        $region21: #{contact_attention_simple_forward.29} parent=11 // pred_check
          %p248 = pneg %p155
        $region22: #{contact_attention_simple_forward.29} parent=11 // pred_check_branch
          %250 = sbr.rel (%p248) target = $region24
        $region23: #{contact_attention_simple_forward.29} parent=11 // pred_region
          _
        $region24: #{contact_attention_simple_forward.29} parent=11 // pred_fallthru
          _
        // Predicated region
        $region25: #{contact_attention_simple_forward.29} parent=11 // pred_check
          %p251 = pneg %p176
        $region26: #{contact_attention_simple_forward.29} parent=11 // pred_check_branch
          %253 = sbr.rel (%p251) target = $region28
        $region27: #{contact_attention_simple_forward.29} parent=11 // pred_region
          _
        $region28: #{contact_attention_simple_forward.29} parent=11 // pred_fallthru
          _
        // Predicated region
        $region29: #{contact_attention_simple_forward.29} parent=11 // pred_check
          %p254 = pneg %p197
        $region30: #{contact_attention_simple_forward.29} parent=11 // pred_check_branch
          %256 = sbr.rel (%p254) target = $region32
        $region31: #{contact_attention_simple_forward.29} parent=11 // pred_region
          _
        $region32: #{contact_attention_simple_forward.29} parent=11 // pred_fallthru
          _
      $region12: #{contact_attention_simple_forward.29} parent=5 // pred_fallthru
        _
      %p257 = scmp.lt.s32.totalorder %s17, 2
      // Predicated region
      $region33: #{contact_attention_simple_forward.29} parent=5 // pred_check
        %p258 = pneg %p257
      $region34: #{contact_attention_simple_forward.29} parent=5 // pred_check_branch
        %260 = sbr.rel (%p258) target = $region36
      $region35: #{contact_attention_simple_forward.29} parent=5 // pred_region
        // Predicated region
        $region37: #{contact_attention_simple_forward.29} parent=35 // pred_check
          %p261 = pneg %p58
        $region38: #{contact_attention_simple_forward.29} parent=35 // pred_check_branch
          %263 = sbr.rel (%p261) target = $region40
        $region39: #{contact_attention_simple_forward.29} parent=35 // pred_region
          %s264 = smul.u32 2, %s25
          %p265 = scmp.lt.s32.totalorder %s24, 1
          %s266 = scalar_select %p265, %s24, 1
          %p267 = scmp.lt.s32.totalorder %s264, 1
          %s268 = scalar_select %p267, %s264, 1
          %s269 = smul.addr %s266, 2
          %s270 = sadd.s32 %s268, %s269
          %s271 = smul.addr %s270, 8
          %s272 = scalar_lea.vmem %s0, %s271
          %s273 = smul.u32 2, %s25
        $region40: #{contact_attention_simple_forward.29} parent=35 // pred_fallthru
          _
        // Predicated region
        $region41: #{contact_attention_simple_forward.29} parent=35 // pred_check
          %p274 = pneg %p86
        $region42: #{contact_attention_simple_forward.29} parent=35 // pred_check_branch
          %276 = sbr.rel (%p274) target = $region44
        $region43: #{contact_attention_simple_forward.29} parent=35 // pred_region
          %s277 = smul.u32 2, %s26
          %p278 = scmp.lt.s32.totalorder %s24, 1
          %s279 = scalar_select %p278, %s24, 1
          %p280 = scmp.lt.s32.totalorder %s277, 1
          %s281 = scalar_select %p280, %s277, 1
          %s282 = smul.addr %s279, 2
          %s283 = sadd.s32 %s281, %s282
          %s284 = smul.addr %s283, 8
          %s285 = scalar_lea.vmem %s1, %s284
          %s286 = smul.u32 2, %s26
        $region44: #{contact_attention_simple_forward.29} parent=35 // pred_fallthru
          _
      $region36: #{contact_attention_simple_forward.29} parent=5 // pred_fallthru
        _
      %p287 = scmp.le.s32.totalorder 1, %s17
      %p288 = scmp.lt.s32.totalorder %s17, 3
      %p289 = pnand %p287, %p288
      %p290 = pneg %p289
      // Predicated region
      $region45: #{contact_attention_simple_forward.29} parent=5 // pred_check
        _
      $region46: #{contact_attention_simple_forward.29} parent=5 // pred_check_branch
        %292 = sbr.rel (%p289) target = $region48
      $region47: #{contact_attention_simple_forward.29} parent=5 // pred_region
        %s293 = ssub.s32 %s17, 1
        %s294 = smul.u32 2, %s28
        %p295 = scmp.lt.s32.totalorder %s27, 1
        %s296 = scalar_select %p295, %s27, 1
        %p297 = scmp.lt.s32.totalorder %s294, 1
        %s298 = scalar_select %p297, %s294, 1
        %s299 = smul.addr %s296, 2
        %s300 = sadd.s32 %s298, %s299
        %s301 = smul.addr %s300, 8
        %s302 = scalar_lea.vmem %s0, %s301
        %p303 = pneg %p64
        %p304 = pneg %p61
        %s305 = smul.u32 2, %s29
        %p306 = scmp.lt.s32.totalorder %s27, 1
        %s307 = scalar_select %p306, %s27, 1
        %p308 = scmp.lt.s32.totalorder %s305, 1
        %s309 = scalar_select %p308, %s305, 1
        %s310 = smul.addr %s307, 2
        %s311 = sadd.s32 %s309, %s310
        %s312 = smul.addr %s311, 8
        %s313 = scalar_lea.vmem %s1, %s312
        %p314 = pneg %p92
        %p315 = pneg %p89
        %p316 = pneg %p113
        %p317 = pneg %p110
        %p318 = pneg %p134
        %p319 = pneg %p131
        %p320 = pneg %p155
        %p321 = pneg %p152
        %p322 = pneg %p176
        %p323 = pneg %p173
        %p324 = pneg %p197
        %p325 = pneg %p194
        %p326 = pneg %p227
        %p327 = pneg %p224
        %s328 = sand.u32 %s214, 1
        %s329 = scalar_lea.sflag [#allocation4], %s328
        %s330 = sand.u32 %s214, 1
        %s331 = smul.addr %s330, 16
        %s332 = scalar_lea.vmem [#allocation3], %s331
        %s333 = smul.u32 2, %s28
        %p334 = scmp.lt.s32.totalorder %s27, 1
        %s335 = scalar_select %p334, %s27, 1
        %p336 = scmp.lt.s32.totalorder %s333, 1
        %s337 = scalar_select %p336, %s333, 1
        %s338 = smul.addr %s335, 2
        %s339 = sadd.s32 %s337, %s338
        %s340 = smul.addr %s339, 8
        %s341 = scalar_lea.vmem %s0, %s340
        %s342 = smul.u32 2, %s28
        %s343 = smul.u32 2, %s29
        %p344 = scmp.lt.s32.totalorder %s27, 1
        %s345 = scalar_select %p344, %s27, 1
        %p346 = scmp.lt.s32.totalorder %s343, 1
        %s347 = scalar_select %p346, %s343, 1
        %s348 = smul.addr %s345, 2
        %s349 = sadd.s32 %s347, %s348
        %s350 = smul.addr %s349, 8
        %s351 = scalar_lea.vmem %s1, %s350
        %s352 = smul.u32 2, %s29
        %s353 = smul.u32 2, %s28
        %v354 = vld [vmem:[%s341] sm:$0xff]
        %v355 = vld [vmem:[%s341 + $0x8] sm:$0xff]
        %v356 = vld [vmem:[%s351] sm:$0xff]
        %v357 = vld [vmem:[%s351 + $0x8] sm:$0xff]
        %s358 = smul.u32 %s28, 16
        %v359 = vstv %s358
        %v360 = vadd.s32 %v359, 1
        %v361 = vadd.s32 %v359, 2
        %v362 = vadd.s32 %v359, 3
        %v363 = vadd.s32 %v359, 4
        %v364 = vadd.s32 %v359, 5
        %v365 = vadd.s32 %v359, 6
        %v366 = vadd.s32 %v359, 7
        %v367 = vadd.s32 %v359, 8
        %v368 = vadd.s32 %v359, 9
        %v369 = vadd.s32 %v359, 10
        %v370 = vadd.s32 %v359, 11
        %v371 = vadd.s32 %v359, 12
        %v372 = vadd.s32 %v359, 13
        %v373 = vadd.s32 %v359, 14
        %v374 = vadd.s32 %v359, 15
        %s375 = smul.u32 %s29, 16
        %v376 = vlaneseq
        %v377 = vshrl.u32 %v376, 7
        %v378 = vadd.s32 %v377, 8
        %v379 = vstv %s375
        %v380 = vadd.s32 %v379, %v377
        %v381 = vadd.s32 %v379, %v378
        %vm382 = vcmp.le.s32.totalorder %v359, %v380
        %vm383 = vcmp.le.s32.totalorder %v359, %v381
        %vm384 = vcmp.le.s32.totalorder %v360, %v380
        %vm385 = vcmp.le.s32.totalorder %v360, %v381
        %vm386 = vcmp.le.s32.totalorder %v361, %v380
        %vm387 = vcmp.le.s32.totalorder %v361, %v381
        %vm388 = vcmp.le.s32.totalorder %v362, %v380
        %vm389 = vcmp.le.s32.totalorder %v362, %v381
        %vm390 = vcmp.le.s32.totalorder %v363, %v380
        %vm391 = vcmp.le.s32.totalorder %v363, %v381
        %vm392 = vcmp.le.s32.totalorder %v364, %v380
        %vm393 = vcmp.le.s32.totalorder %v364, %v381
        %vm394 = vcmp.le.s32.totalorder %v365, %v380
        %vm395 = vcmp.le.s32.totalorder %v365, %v381
        %vm396 = vcmp.le.s32.totalorder %v366, %v380
        %vm397 = vcmp.le.s32.totalorder %v366, %v381
        %vm398 = vcmp.le.s32.totalorder %v367, %v380
        %vm399 = vcmp.le.s32.totalorder %v367, %v381
        %vm400 = vcmp.le.s32.totalorder %v368, %v380
        %vm401 = vcmp.le.s32.totalorder %v368, %v381
        %vm402 = vcmp.le.s32.totalorder %v369, %v380
        %vm403 = vcmp.le.s32.totalorder %v369, %v381
        %vm404 = vcmp.le.s32.totalorder %v370, %v380
        %vm405 = vcmp.le.s32.totalorder %v370, %v381
        %vm406 = vcmp.le.s32.totalorder %v371, %v380
        %vm407 = vcmp.le.s32.totalorder %v371, %v381
        %vm408 = vcmp.le.s32.totalorder %v372, %v380
        %vm409 = vcmp.le.s32.totalorder %v372, %v381
        %vm410 = vcmp.le.s32.totalorder %v373, %v380
        %vm411 = vcmp.le.s32.totalorder %v373, %v381
        %vm412 = vcmp.le.s32.totalorder %v374, %v380
        %vm413 = vcmp.le.s32.totalorder %v374, %v381
        %v416 = vcombine.high %v354, %v354
        %v418 = vunpack.c.l.s4 1966171168
        %v419 = vunpack.c.0.s8 %v418
        %v420 = vlaneseq
        %v421 = vshrl.u32 %v420, 7
        %v422 = vsub.s32 %v419, %v421
        %v423 = vrot.slane %v354, %v422
        %v425 = vunpack.c.l.s4 1966171168
        %v426 = vunpack.c.0.s8 %v425
        %v427 = vlaneseq
        %v428 = vshrl.u32 %v427, 7
        %v429 = vsub.s32 %v426, %v428
        %v430 = vrot.slane %v416, %v429
        %v431 = vcombine.high %v423, %v423
        %v432 = vcombine.high %v430, %v430
        %v434 = vunpack.c.l.s4 1966171168
        %v435 = vunpack.c.0.s8 %v434
        %v436 = vlaneseq
        %v437 = vshrl.u32 %v436, 7
        %v438 = vsub.s32 %v435, %v437
        %v439 = vrot.slane %v423, %v438
        %v441 = vunpack.c.l.s4 1966171168
        %v442 = vunpack.c.0.s8 %v441
        %v443 = vlaneseq
        %v444 = vshrl.u32 %v443, 7
        %v445 = vsub.s32 %v442, %v444
        %v446 = vrot.slane %v430, %v445
        %v448 = vunpack.c.l.s4 1966171168
        %v449 = vunpack.c.0.s8 %v448
        %v450 = vlaneseq
        %v451 = vshrl.u32 %v450, 7
        %v452 = vsub.s32 %v449, %v451
        %v453 = vrot.slane %v431, %v452
        %v455 = vunpack.c.l.s4 1966171168
        %v456 = vunpack.c.0.s8 %v455
        %v457 = vlaneseq
        %v458 = vshrl.u32 %v457, 7
        %v459 = vsub.s32 %v456, %v458
        %v460 = vrot.slane %v432, %v459
        %v461 = vcombine.high %v439, %v439
        %v462 = vcombine.high %v446, %v446
        %v463 = vcombine.high %v453, %v453
        %v464 = vcombine.high %v460, %v460
        %v465 = vcombine.high %v355, %v355
        %v467 = vunpack.c.l.s4 1966171168
        %v468 = vunpack.c.0.s8 %v467
        %v469 = vlaneseq
        %v470 = vshrl.u32 %v469, 7
        %v471 = vsub.s32 %v468, %v470
        %v472 = vrot.slane %v355, %v471
        %v474 = vunpack.c.l.s4 1966171168
        %v475 = vunpack.c.0.s8 %v474
        %v476 = vlaneseq
        %v477 = vshrl.u32 %v476, 7
        %v478 = vsub.s32 %v475, %v477
        %v479 = vrot.slane %v465, %v478
        %v480 = vcombine.high %v472, %v472
        %v481 = vcombine.high %v479, %v479
        %v483 = vunpack.c.l.s4 1966171168
        %v484 = vunpack.c.0.s8 %v483
        %v485 = vlaneseq
        %v486 = vshrl.u32 %v485, 7
        %v487 = vsub.s32 %v484, %v486
        %v488 = vrot.slane %v472, %v487
        %v490 = vunpack.c.l.s4 1966171168
        %v491 = vunpack.c.0.s8 %v490
        %v492 = vlaneseq
        %v493 = vshrl.u32 %v492, 7
        %v494 = vsub.s32 %v491, %v493
        %v495 = vrot.slane %v479, %v494
        %v497 = vunpack.c.l.s4 1966171168
        %v498 = vunpack.c.0.s8 %v497
        %v499 = vlaneseq
        %v500 = vshrl.u32 %v499, 7
        %v501 = vsub.s32 %v498, %v500
        %v502 = vrot.slane %v480, %v501
        %v504 = vunpack.c.l.s4 1966171168
        %v505 = vunpack.c.0.s8 %v504
        %v506 = vlaneseq
        %v507 = vshrl.u32 %v506, 7
        %v508 = vsub.s32 %v505, %v507
        %v509 = vrot.slane %v481, %v508
        %v510 = vcombine.high %v488, %v488
        %v511 = vcombine.high %v495, %v495
        %v512 = vcombine.high %v502, %v502
        %v513 = vcombine.high %v509, %v509
        %v514 = vlaneseq
        %v515 = vshrl.u32 %v514, 7
        %v516 = vsub.s32 0, %v515
        %v517 = vrot.slane %v439, %v516
        %v518 = vlaneseq
        %v519 = vshrl.u32 %v518, 7
        %v520 = vsub.s32 0, %v519
        %v521 = vrot.slane %v453, %v520
        %v522 = vlaneseq
        %v523 = vshrl.u32 %v522, 7
        %v524 = vsub.s32 0, %v523
        %v525 = vrot.slane %v461, %v524
        %v526 = vlaneseq
        %v527 = vshrl.u32 %v526, 7
        %v528 = vsub.s32 0, %v527
        %v529 = vrot.slane %v463, %v528
        %v530 = vlaneseq
        %v531 = vshrl.u32 %v530, 7
        %v532 = vsub.s32 0, %v531
        %v533 = vrot.slane %v446, %v532
        %v534 = vlaneseq
        %v535 = vshrl.u32 %v534, 7
        %v536 = vsub.s32 0, %v535
        %v537 = vrot.slane %v460, %v536
        %v538 = vlaneseq
        %v539 = vshrl.u32 %v538, 7
        %v540 = vsub.s32 0, %v539
        %v541 = vrot.slane %v462, %v540
        %v542 = vlaneseq
        %v543 = vshrl.u32 %v542, 7
        %v544 = vsub.s32 0, %v543
        %v545 = vrot.slane %v464, %v544
        %v546 = vlaneseq
        %v547 = vshrl.u32 %v546, 7
        %v548 = vsub.s32 0, %v547
        %v549 = vrot.slane %v488, %v548
        %v550 = vlaneseq
        %v551 = vshrl.u32 %v550, 7
        %v552 = vsub.s32 0, %v551
        %v553 = vrot.slane %v502, %v552
        %v554 = vlaneseq
        %v555 = vshrl.u32 %v554, 7
        %v556 = vsub.s32 0, %v555
        %v557 = vrot.slane %v510, %v556
        %v558 = vlaneseq
        %v559 = vshrl.u32 %v558, 7
        %v560 = vsub.s32 0, %v559
        %v561 = vrot.slane %v512, %v560
        %v562 = vlaneseq
        %v563 = vshrl.u32 %v562, 7
        %v564 = vsub.s32 0, %v563
        %v565 = vrot.slane %v495, %v564
        %v566 = vlaneseq
        %v567 = vshrl.u32 %v566, 7
        %v568 = vsub.s32 0, %v567
        %v569 = vrot.slane %v509, %v568
        %v570 = vlaneseq
        %v571 = vshrl.u32 %v570, 7
        %v572 = vsub.s32 0, %v571
        %v573 = vrot.slane %v511, %v572
        %v574 = vlaneseq
        %v575 = vshrl.u32 %v574, 7
        %v576 = vsub.s32 0, %v575
        %v577 = vrot.slane %v513, %v576
        %596 = vrot.lane.b32.xlu0 %v356, 120
        %v597 = vpop.permute.xlu0 %596
        %598 = vrot.lane.b32.xlu0 %v357, 120
        %v599 = vpop.permute.xlu0 %598
        %v602 = vadd.f32 %v517, %v597
        %v603 = vadd.f32 %v517, %v599
        %v604 = vadd.f32 %v521, %v597
        %v605 = vadd.f32 %v521, %v599
        %v606 = vadd.f32 %v525, %v597
        %v607 = vadd.f32 %v525, %v599
        %v608 = vadd.f32 %v529, %v597
        %v609 = vadd.f32 %v529, %v599
        %v610 = vadd.f32 %v533, %v597
        %v611 = vadd.f32 %v533, %v599
        %v612 = vadd.f32 %v537, %v597
        %v613 = vadd.f32 %v537, %v599
        %v614 = vadd.f32 %v541, %v597
        %v615 = vadd.f32 %v541, %v599
        %v616 = vadd.f32 %v545, %v597
        %v617 = vadd.f32 %v545, %v599
        %v618 = vadd.f32 %v549, %v597
        %v619 = vadd.f32 %v549, %v599
        %v620 = vadd.f32 %v553, %v597
        %v621 = vadd.f32 %v553, %v599
        %v622 = vadd.f32 %v557, %v597
        %v623 = vadd.f32 %v557, %v599
        %v624 = vadd.f32 %v561, %v597
        %v625 = vadd.f32 %v561, %v599
        %v626 = vadd.f32 %v565, %v597
        %v627 = vadd.f32 %v565, %v599
        %v628 = vadd.f32 %v569, %v597
        %v629 = vadd.f32 %v569, %v599
        %v630 = vadd.f32 %v573, %v597
        %v631 = vadd.f32 %v573, %v599
        %v632 = vadd.f32 %v577, %v597
        %v633 = vadd.f32 %v577, %v599
        %634 = vrot.lane.b32.xlu0 %v517, 120
        %v635 = vpop.permute.xlu0 %634
        %636 = vrot.lane.b32.xlu0 %v521, 120
        %v637 = vpop.permute.xlu0 %636
        %638 = vrot.lane.b32.xlu0 %v525, 120
        %v639 = vpop.permute.xlu0 %638
        %640 = vrot.lane.b32.xlu0 %v529, 120
        %v641 = vpop.permute.xlu0 %640
        %642 = vrot.lane.b32.xlu0 %v533, 120
        %v643 = vpop.permute.xlu0 %642
        %644 = vrot.lane.b32.xlu0 %v537, 120
        %v645 = vpop.permute.xlu0 %644
        %646 = vrot.lane.b32.xlu0 %v541, 120
        %v647 = vpop.permute.xlu0 %646
        %648 = vrot.lane.b32.xlu0 %v545, 120
        %v649 = vpop.permute.xlu0 %648
        %650 = vrot.lane.b32.xlu0 %v549, 120
        %v651 = vpop.permute.xlu0 %650
        %652 = vrot.lane.b32.xlu0 %v553, 120
        %v653 = vpop.permute.xlu0 %652
        %654 = vrot.lane.b32.xlu0 %v557, 120
        %v655 = vpop.permute.xlu0 %654
        %656 = vrot.lane.b32.xlu0 %v561, 120
        %v657 = vpop.permute.xlu0 %656
        %658 = vrot.lane.b32.xlu0 %v565, 120
        %v659 = vpop.permute.xlu0 %658
        %660 = vrot.lane.b32.xlu0 %v569, 120
        %v661 = vpop.permute.xlu0 %660
        %662 = vrot.lane.b32.xlu0 %v573, 120
        %v663 = vpop.permute.xlu0 %662
        %664 = vrot.lane.b32.xlu0 %v577, 120
        %v665 = vpop.permute.xlu0 %664
        %v682 = vadd.f32 %v356, %v635
        %v683 = vadd.f32 %v357, %v635
        %v684 = vadd.f32 %v356, %v637
        %v685 = vadd.f32 %v357, %v637
        %v686 = vadd.f32 %v356, %v639
        %v687 = vadd.f32 %v357, %v639
        %v688 = vadd.f32 %v356, %v641
        %v689 = vadd.f32 %v357, %v641
        %v690 = vadd.f32 %v356, %v643
        %v691 = vadd.f32 %v357, %v643
        %v692 = vadd.f32 %v356, %v645
        %v693 = vadd.f32 %v357, %v645
        %v694 = vadd.f32 %v356, %v647
        %v695 = vadd.f32 %v357, %v647
        %v696 = vadd.f32 %v356, %v649
        %v697 = vadd.f32 %v357, %v649
        %v698 = vadd.f32 %v356, %v651
        %v699 = vadd.f32 %v357, %v651
        %v700 = vadd.f32 %v356, %v653
        %v701 = vadd.f32 %v357, %v653
        %v702 = vadd.f32 %v356, %v655
        %v703 = vadd.f32 %v357, %v655
        %v704 = vadd.f32 %v356, %v657
        %v705 = vadd.f32 %v357, %v657
        %v706 = vadd.f32 %v356, %v659
        %v707 = vadd.f32 %v357, %v659
        %v708 = vadd.f32 %v356, %v661
        %v709 = vadd.f32 %v357, %v661
        %v710 = vadd.f32 %v356, %v663
        %v711 = vadd.f32 %v357, %v663
        %v712 = vadd.f32 %v356, %v665
        %v713 = vadd.f32 %v357, %v665
        %v714 = vsel %vm382, 1, 0
        %v715 = vsel %vm383, 1, 0
        %v716 = vsel %vm384, 1, 0
        %v717 = vsel %vm385, 1, 0
        %v718 = vsel %vm386, 1, 0
        %v719 = vsel %vm387, 1, 0
        %v720 = vsel %vm388, 1, 0
        %v721 = vsel %vm389, 1, 0
        %v722 = vsel %vm390, 1, 0
        %v723 = vsel %vm391, 1, 0
        %v724 = vsel %vm392, 1, 0
        %v725 = vsel %vm393, 1, 0
        %v726 = vsel %vm394, 1, 0
        %v727 = vsel %vm395, 1, 0
        %v728 = vsel %vm396, 1, 0
        %v729 = vsel %vm397, 1, 0
        %v730 = vsel %vm398, 1, 0
        %v731 = vsel %vm399, 1, 0
        %v732 = vsel %vm400, 1, 0
        %v733 = vsel %vm401, 1, 0
        %v734 = vsel %vm402, 1, 0
        %v735 = vsel %vm403, 1, 0
        %v736 = vsel %vm404, 1, 0
        %v737 = vsel %vm405, 1, 0
        %v738 = vsel %vm406, 1, 0
        %v739 = vsel %vm407, 1, 0
        %v740 = vsel %vm408, 1, 0
        %v741 = vsel %vm409, 1, 0
        %v742 = vsel %vm410, 1, 0
        %v743 = vsel %vm411, 1, 0
        %v744 = vsel %vm412, 1, 0
        %v745 = vsel %vm413, 1, 0
        %vm746 = vcmp.eq.s32.totalorder %v714, 1
        %vm747 = vcmp.eq.s32.totalorder %v715, 1
        %vm748 = vcmp.eq.s32.totalorder %v716, 1
        %vm749 = vcmp.eq.s32.totalorder %v717, 1
        %vm750 = vcmp.eq.s32.totalorder %v718, 1
        %vm751 = vcmp.eq.s32.totalorder %v719, 1
        %vm752 = vcmp.eq.s32.totalorder %v720, 1
        %vm753 = vcmp.eq.s32.totalorder %v721, 1
        %vm754 = vcmp.eq.s32.totalorder %v722, 1
        %vm755 = vcmp.eq.s32.totalorder %v723, 1
        %vm756 = vcmp.eq.s32.totalorder %v724, 1
        %vm757 = vcmp.eq.s32.totalorder %v725, 1
        %vm758 = vcmp.eq.s32.totalorder %v726, 1
        %vm759 = vcmp.eq.s32.totalorder %v727, 1
        %vm760 = vcmp.eq.s32.totalorder %v728, 1
        %vm761 = vcmp.eq.s32.totalorder %v729, 1
        %vm762 = vcmp.eq.s32.totalorder %v730, 1
        %vm763 = vcmp.eq.s32.totalorder %v731, 1
        %vm764 = vcmp.eq.s32.totalorder %v732, 1
        %vm765 = vcmp.eq.s32.totalorder %v733, 1
        %vm766 = vcmp.eq.s32.totalorder %v734, 1
        %vm767 = vcmp.eq.s32.totalorder %v735, 1
        %vm768 = vcmp.eq.s32.totalorder %v736, 1
        %vm769 = vcmp.eq.s32.totalorder %v737, 1
        %vm770 = vcmp.eq.s32.totalorder %v738, 1
        %vm771 = vcmp.eq.s32.totalorder %v739, 1
        %vm772 = vcmp.eq.s32.totalorder %v740, 1
        %vm773 = vcmp.eq.s32.totalorder %v741, 1
        %vm774 = vcmp.eq.s32.totalorder %v742, 1
        %vm775 = vcmp.eq.s32.totalorder %v743, 1
        %vm776 = vcmp.eq.s32.totalorder %v744, 1
        %vm777 = vcmp.eq.s32.totalorder %v745, 1
        %v778 = vsel %vm746, %v602, %v682
        %v779 = vsel %vm747, %v603, %v683
        %v780 = vsel %vm748, %v604, %v684
        %v781 = vsel %vm749, %v605, %v685
        %v782 = vsel %vm750, %v606, %v686
        %v783 = vsel %vm751, %v607, %v687
        %v784 = vsel %vm752, %v608, %v688
        %v785 = vsel %vm753, %v609, %v689
        %v786 = vsel %vm754, %v610, %v690
        %v787 = vsel %vm755, %v611, %v691
        %v788 = vsel %vm756, %v612, %v692
        %v789 = vsel %vm757, %v613, %v693
        %v790 = vsel %vm758, %v614, %v694
        %v791 = vsel %vm759, %v615, %v695
        %v792 = vsel %vm760, %v616, %v696
        %v793 = vsel %vm761, %v617, %v697
        %v794 = vsel %vm762, %v618, %v698
        %v795 = vsel %vm763, %v619, %v699
        %v796 = vsel %vm764, %v620, %v700
        %v797 = vsel %vm765, %v621, %v701
        %v798 = vsel %vm766, %v622, %v702
        %v799 = vsel %vm767, %v623, %v703
        %v800 = vsel %vm768, %v624, %v704
        %v801 = vsel %vm769, %v625, %v705
        %v802 = vsel %vm770, %v626, %v706
        %v803 = vsel %vm771, %v627, %v707
        %v804 = vsel %vm772, %v628, %v708
        %v805 = vsel %vm773, %v629, %v709
        %v806 = vsel %vm774, %v630, %v710
        %v807 = vsel %vm775, %v631, %v711
        %v808 = vsel %vm776, %v632, %v712
        %v809 = vsel %vm777, %v633, %v713
        %v810 = vld [vmem:[%s2] sm:$0x1]
        %v812 = vlaneseq
        %v813 = vshrl.u32 %v812, 7
        %v814 = vsub.s32 0, %v813
        %v815 = vrot.slane %v810, %v814
        %v817 = vadd.f32 %v778, %v815
        %v818 = vadd.f32 %v779, %v815
        %v819 = vadd.f32 %v780, %v815
        %v820 = vadd.f32 %v781, %v815
        %v821 = vadd.f32 %v782, %v815
        %v822 = vadd.f32 %v783, %v815
        %v823 = vadd.f32 %v784, %v815
        %v824 = vadd.f32 %v785, %v815
        %v825 = vadd.f32 %v786, %v815
        %v826 = vadd.f32 %v787, %v815
        %v827 = vadd.f32 %v788, %v815
        %v828 = vadd.f32 %v789, %v815
        %v829 = vadd.f32 %v790, %v815
        %v830 = vadd.f32 %v791, %v815
        %v831 = vadd.f32 %v792, %v815
        %v832 = vadd.f32 %v793, %v815
        %v833 = vadd.f32 %v794, %v815
        %v834 = vadd.f32 %v795, %v815
        %v835 = vadd.f32 %v796, %v815
        %v836 = vadd.f32 %v797, %v815
        %v837 = vadd.f32 %v798, %v815
        %v838 = vadd.f32 %v799, %v815
        %v839 = vadd.f32 %v800, %v815
        %v840 = vadd.f32 %v801, %v815
        %v841 = vadd.f32 %v802, %v815
        %v842 = vadd.f32 %v803, %v815
        %v843 = vadd.f32 %v804, %v815
        %v844 = vadd.f32 %v805, %v815
        %v845 = vadd.f32 %v806, %v815
        %v846 = vadd.f32 %v807, %v815
        %v847 = vadd.f32 %v808, %v815
        %v848 = vadd.f32 %v809, %v815
        %v849 = vmax.f32 %v817, 0.0
        %v850 = vmax.f32 %v818, 0.0
        %v851 = vmax.f32 %v819, 0.0
        %v852 = vmax.f32 %v820, 0.0
        %v853 = vmax.f32 %v821, 0.0
        %v854 = vmax.f32 %v822, 0.0
        %v855 = vmax.f32 %v823, 0.0
        %v856 = vmax.f32 %v824, 0.0
        %v857 = vmax.f32 %v825, 0.0
        %v858 = vmax.f32 %v826, 0.0
        %v859 = vmax.f32 %v827, 0.0
        %v860 = vmax.f32 %v828, 0.0
        %v861 = vmax.f32 %v829, 0.0
        %v862 = vmax.f32 %v830, 0.0
        %v863 = vmax.f32 %v831, 0.0
        %v864 = vmax.f32 %v832, 0.0
        %v865 = vmax.f32 %v833, 0.0
        %v866 = vmax.f32 %v834, 0.0
        %v867 = vmax.f32 %v835, 0.0
        %v868 = vmax.f32 %v836, 0.0
        %v869 = vmax.f32 %v837, 0.0
        %v870 = vmax.f32 %v838, 0.0
        %v871 = vmax.f32 %v839, 0.0
        %v872 = vmax.f32 %v840, 0.0
        %v873 = vmax.f32 %v841, 0.0
        %v874 = vmax.f32 %v842, 0.0
        %v875 = vmax.f32 %v843, 0.0
        %v876 = vmax.f32 %v844, 0.0
        %v877 = vmax.f32 %v845, 0.0
        %v878 = vmax.f32 %v846, 0.0
        %v879 = vmax.f32 %v847, 0.0
        %v880 = vmax.f32 %v848, 0.0
        %v881 = vld [vmem:[%s3] sm:$0xff]
        %v882 = vld [vmem:[%s4] sm:$0x1]
        %v884 = vlaneseq
        %v885 = vshrl.u32 %v884, 7
        %v886 = vsub.s32 0, %v885
        %v887 = vrot.slane %v882, %v886
        %vm889 = vcmask 64512
        %v891 = vsel %vm889, %v849, 0
        %v894 = vsel %vm889, %v850, 0
        %v897 = vsel %vm889, %v851, 0
        %v900 = vsel %vm889, %v852, 0
        %v903 = vsel %vm889, %v853, 0
        %v906 = vsel %vm889, %v854, 0
        %v909 = vsel %vm889, %v855, 0
        %v912 = vsel %vm889, %v856, 0
        %v915 = vsel %vm889, %v857, 0
        %v918 = vsel %vm889, %v858, 0
        %v921 = vsel %vm889, %v859, 0
        %v924 = vsel %vm889, %v860, 0
        %v927 = vsel %vm889, %v861, 0
        %v930 = vsel %vm889, %v862, 0
        %v933 = vsel %vm889, %v863, 0
        %v936 = vsel %vm889, %v864, 0
        %v939 = vsel %vm889, %v865, 0
        %v942 = vsel %vm889, %v866, 0
        %v945 = vsel %vm889, %v867, 0
        %v948 = vsel %vm889, %v868, 0
        %v951 = vsel %vm889, %v869, 0
        %v954 = vsel %vm889, %v870, 0
        %v957 = vsel %vm889, %v871, 0
        %v960 = vsel %vm889, %v872, 0
        %v963 = vsel %vm889, %v873, 0
        %v966 = vsel %vm889, %v874, 0
        %v969 = vsel %vm889, %v875, 0
        %v972 = vsel %vm889, %v876, 0
        %v975 = vsel %vm889, %v877, 0
        %v978 = vsel %vm889, %v878, 0
        %v981 = vsel %vm889, %v879, 0
        %v984 = vsel %vm889, %v880, 0
        %986 = vmatprep.subr.mxu0 0.0
        %987 = vmatpush1.msra.mxu0 0.0
        %988 = vmatprep.subr.mxu0 0.0
        %989 = vmatpush1.msra.mxu0 0.0
        %990 = vmatprep.subr.mxu0 0.0
        %991 = vmatpush1.msra.mxu0 0.0
        %992 = vmatprep.subr.mxu0 0.0
        %993 = vmatpush1.msra.mxu0 0.0
        %994 = vmatprep.subr.mxu0 0.0
        %995 = vmatpush1.msra.mxu0 0.0
        %996 = vmatprep.subr.mxu0 0.0
        %997 = vmatpush1.msra.mxu0 0.0
        %998 = vmatprep.subr.mxu0 0.0
        %999 = vmatpush1.msra.mxu0 0.0
        %1000 = vmatprep.subr.mxu0 0.0
        %1001 = vmatpush1.msra.mxu0 0.0
        %1002 = vmatprep.subr.mxu0 0.0
        %1003 = vmatpush1.msra.mxu0 0.0
        %1004 = vmatprep.subr.mxu0 0.0
        %1005 = vmatpush1.msra.mxu0 0.0
        %1006 = vmatprep.subr.mxu0 0.0
        %1007 = vmatpush1.msra.mxu0 0.0
        %1008 = vmatprep.subr.mxu0 0.0
        %1009 = vmatpush1.msra.mxu0 0.0
        %1010 = vmatprep.subr.mxu0 0.0
        %1011 = vmatpush1.msra.mxu0 0.0
        %1012 = vmatprep.subr.mxu0 0.0
        %1013 = vmatpush1.msra.mxu0 0.0
        %1014 = vmatprep.subr.mxu0 0.0
        %1015 = vmatpush1.msra.mxu0 0.0
        %1016 = vmatprep.subr.mxu0 0.0
        %1017 = vmatpush1.msra.mxu0 %v881
        %1018 = vmatprep.subr.mxu0 0.0
        %1019 = vmatpush2.msra.mxu0 0.0
        %1020 = vmatprep.subr.mxu0 0.0
        %1021 = vmatpush2.msra.mxu0 0.0
        %1022 = vmatprep.subr.mxu0 0.0
        %1023 = vmatpush2.msra.mxu0 0.0
        %1024 = vmatprep.subr.mxu0 0.0
        %1025 = vmatpush2.msra.mxu0 0.0
        %1026 = vmatprep.subr.mxu0 0.0
        %1027 = vmatpush2.msra.mxu0 0.0
        %1028 = vmatprep.subr.mxu0 0.0
        %1029 = vmatpush2.msra.mxu0 0.0
        %1030 = vmatprep.subr.mxu0 0.0
        %1031 = vmatpush2.msra.mxu0 0.0
        %1032 = vmatprep.subr.mxu0 0.0
        %1033 = vmatpush2.msra.mxu0 0.0
        %1034 = vmatprep.subr.mxu0 0.0
        %1035 = vmatpush2.msra.mxu0 0.0
        %1036 = vmatprep.subr.mxu0 0.0
        %1037 = vmatpush2.msra.mxu0 0.0
        %1038 = vmatprep.subr.mxu0 0.0
        %1039 = vmatpush2.msra.mxu0 0.0
        %1040 = vmatprep.subr.mxu0 0.0
        %1041 = vmatpush2.msra.mxu0 0.0
        %1042 = vmatprep.subr.mxu0 0.0
        %1043 = vmatpush2.msra.mxu0 0.0
        %1044 = vmatprep.subr.mxu0 0.0
        %1045 = vmatpush2.msra.mxu0 0.0
        %1046 = vmatprep.subr.mxu0 0.0
        %1047 = vmatpush2.msra.mxu0 0.0
        %1048 = vmatprep.subr.mxu0 0.0
        %1049 = vmatpush2.msra.mxu0 0.0
        %1050 = vmatprep.mubr.f32.mxu0 0.0
        %1051 = vmatmul.mubr.f32.gmra.mxu0 %v891
        %v1052 = vpop.f32.mrf.mxu0
        %v1053 = vadd.f32 %v887, %v1052
        %v1054 = vpop.f32.mrf.mxu0
        %1055 = vmatprep.mubr.f32.mxu0 0.0
        %1056 = vmatmul.mubr.f32.gmra.mxu0 %v894
        %v1057 = vpop.f32.mrf.mxu0
        %v1058 = vadd.f32 %v887, %v1057
        %v1059 = vpop.f32.mrf.mxu0
        %1060 = vmatprep.mubr.f32.mxu0 0.0
        %1061 = vmatmul.mubr.f32.gmra.mxu0 %v897
        %v1062 = vpop.f32.mrf.mxu0
        %v1063 = vadd.f32 %v887, %v1062
        %v1064 = vpop.f32.mrf.mxu0
        %1065 = vmatprep.mubr.f32.mxu0 0.0
        %1066 = vmatmul.mubr.f32.gmra.mxu0 %v900
        %v1067 = vpop.f32.mrf.mxu0
        %v1068 = vadd.f32 %v887, %v1067
        %v1069 = vpop.f32.mrf.mxu0
        %1070 = vmatprep.mubr.f32.mxu0 0.0
        %1071 = vmatmul.mubr.f32.gmra.mxu0 %v903
        %v1072 = vpop.f32.mrf.mxu0
        %v1073 = vadd.f32 %v887, %v1072
        %v1074 = vpop.f32.mrf.mxu0
        %1075 = vmatprep.mubr.f32.mxu0 0.0
        %1076 = vmatmul.mubr.f32.gmra.mxu0 %v906
        %v1077 = vpop.f32.mrf.mxu0
        %v1078 = vadd.f32 %v887, %v1077
        %v1079 = vpop.f32.mrf.mxu0
        %1080 = vmatprep.mubr.f32.mxu0 0.0
        %1081 = vmatmul.mubr.f32.gmra.mxu0 %v909
        %v1082 = vpop.f32.mrf.mxu0
        %v1083 = vadd.f32 %v887, %v1082
        %v1084 = vpop.f32.mrf.mxu0
        %1085 = vmatprep.mubr.f32.mxu0 0.0
        %1086 = vmatmul.mubr.f32.gmra.mxu0 %v912
        %v1087 = vpop.f32.mrf.mxu0
        %v1088 = vadd.f32 %v887, %v1087
        %v1089 = vpop.f32.mrf.mxu0
        %1090 = vmatprep.mubr.f32.mxu0 0.0
        %1091 = vmatmul.mubr.f32.gmra.mxu0 %v915
        %v1092 = vpop.f32.mrf.mxu0
        %v1093 = vadd.f32 %v887, %v1092
        %v1094 = vpop.f32.mrf.mxu0
        %1095 = vmatprep.mubr.f32.mxu0 0.0
        %1096 = vmatmul.mubr.f32.gmra.mxu0 %v918
        %v1097 = vpop.f32.mrf.mxu0
        %v1098 = vadd.f32 %v887, %v1097
        %v1099 = vpop.f32.mrf.mxu0
        %1100 = vmatprep.mubr.f32.mxu0 0.0
        %1101 = vmatmul.mubr.f32.gmra.mxu0 %v921
        %v1102 = vpop.f32.mrf.mxu0
        %v1103 = vadd.f32 %v887, %v1102
        %v1104 = vpop.f32.mrf.mxu0
        %1105 = vmatprep.mubr.f32.mxu0 0.0
        %1106 = vmatmul.mubr.f32.gmra.mxu0 %v924
        %v1107 = vpop.f32.mrf.mxu0
        %v1108 = vadd.f32 %v887, %v1107
        %v1109 = vpop.f32.mrf.mxu0
        %1110 = vmatprep.mubr.f32.mxu0 0.0
        %1111 = vmatmul.mubr.f32.gmra.mxu0 %v927
        %v1112 = vpop.f32.mrf.mxu0
        %v1113 = vadd.f32 %v887, %v1112
        %v1114 = vpop.f32.mrf.mxu0
        %1115 = vmatprep.mubr.f32.mxu0 0.0
        %1116 = vmatmul.mubr.f32.gmra.mxu0 %v930
        %v1117 = vpop.f32.mrf.mxu0
        %v1118 = vadd.f32 %v887, %v1117
        %v1119 = vpop.f32.mrf.mxu0
        %1120 = vmatprep.mubr.f32.mxu0 0.0
        %1121 = vmatmul.mubr.f32.gmra.mxu0 %v933
        %v1122 = vpop.f32.mrf.mxu0
        %v1123 = vadd.f32 %v887, %v1122
        %v1124 = vpop.f32.mrf.mxu0
        %1125 = vmatprep.mubr.f32.mxu0 0.0
        %1126 = vmatmul.mubr.f32.gmra.mxu0 %v936
        %v1127 = vpop.f32.mrf.mxu0
        %v1128 = vadd.f32 %v887, %v1127
        %v1129 = vpop.f32.mrf.mxu0
        %1130 = vmatprep.mubr.f32.mxu0 0.0
        %1131 = vmatmul.mubr.f32.gmra.mxu0 %v939
        %v1132 = vpop.f32.mrf.mxu0
        %v1133 = vadd.f32 %v887, %v1132
        %v1134 = vpop.f32.mrf.mxu0
        %1135 = vmatprep.mubr.f32.mxu0 0.0
        %1136 = vmatmul.mubr.f32.gmra.mxu0 %v942
        %v1137 = vpop.f32.mrf.mxu0
        %v1138 = vadd.f32 %v887, %v1137
        %v1139 = vpop.f32.mrf.mxu0
        %1140 = vmatprep.mubr.f32.mxu0 0.0
        %1141 = vmatmul.mubr.f32.gmra.mxu0 %v945
        %v1142 = vpop.f32.mrf.mxu0
        %v1143 = vadd.f32 %v887, %v1142
        %v1144 = vpop.f32.mrf.mxu0
        %1145 = vmatprep.mubr.f32.mxu0 0.0
        %1146 = vmatmul.mubr.f32.gmra.mxu0 %v948
        %v1147 = vpop.f32.mrf.mxu0
        %v1148 = vadd.f32 %v887, %v1147
        %v1149 = vpop.f32.mrf.mxu0
        %1150 = vmatprep.mubr.f32.mxu0 0.0
        %1151 = vmatmul.mubr.f32.gmra.mxu0 %v951
        %v1152 = vpop.f32.mrf.mxu0
        %v1153 = vadd.f32 %v887, %v1152
        %v1154 = vpop.f32.mrf.mxu0
        %1155 = vmatprep.mubr.f32.mxu0 0.0
        %1156 = vmatmul.mubr.f32.gmra.mxu0 %v954
        %v1157 = vpop.f32.mrf.mxu0
        %v1158 = vadd.f32 %v887, %v1157
        %v1159 = vpop.f32.mrf.mxu0
        %1160 = vmatprep.mubr.f32.mxu0 0.0
        %1161 = vmatmul.mubr.f32.gmra.mxu0 %v957
        %v1162 = vpop.f32.mrf.mxu0
        %v1163 = vadd.f32 %v887, %v1162
        %v1164 = vpop.f32.mrf.mxu0
        %1165 = vmatprep.mubr.f32.mxu0 0.0
        %1166 = vmatmul.mubr.f32.gmra.mxu0 %v960
        %v1167 = vpop.f32.mrf.mxu0
        %v1168 = vadd.f32 %v887, %v1167
        %v1169 = vpop.f32.mrf.mxu0
        %1170 = vmatprep.mubr.f32.mxu0 0.0
        %1171 = vmatmul.mubr.f32.gmra.mxu0 %v963
        %v1172 = vpop.f32.mrf.mxu0
        %v1173 = vadd.f32 %v887, %v1172
        %v1174 = vpop.f32.mrf.mxu0
        %1175 = vmatprep.mubr.f32.mxu0 0.0
        %1176 = vmatmul.mubr.f32.gmra.mxu0 %v966
        %v1177 = vpop.f32.mrf.mxu0
        %v1178 = vadd.f32 %v887, %v1177
        %v1179 = vpop.f32.mrf.mxu0
        %1180 = vmatprep.mubr.f32.mxu0 0.0
        %1181 = vmatmul.mubr.f32.gmra.mxu0 %v969
        %v1182 = vpop.f32.mrf.mxu0
        %v1183 = vadd.f32 %v887, %v1182
        %v1184 = vpop.f32.mrf.mxu0
        %1185 = vmatprep.mubr.f32.mxu0 0.0
        %1186 = vmatmul.mubr.f32.gmra.mxu0 %v972
        %v1187 = vpop.f32.mrf.mxu0
        %v1188 = vadd.f32 %v887, %v1187
        %v1189 = vpop.f32.mrf.mxu0
        %1190 = vmatprep.mubr.f32.mxu0 0.0
        %1191 = vmatmul.mubr.f32.gmra.mxu0 %v975
        %v1192 = vpop.f32.mrf.mxu0
        %v1193 = vadd.f32 %v887, %v1192
        %v1194 = vpop.f32.mrf.mxu0
        %1195 = vmatprep.mubr.f32.mxu0 0.0
        %1196 = vmatmul.mubr.f32.gmra.mxu0 %v978
        %v1197 = vpop.f32.mrf.mxu0
        %v1198 = vadd.f32 %v887, %v1197
        %v1199 = vpop.f32.mrf.mxu0
        %1200 = vmatprep.mubr.f32.mxu0 0.0
        %1201 = vmatmul.mubr.f32.gmra.mxu0 %v981
        %v1202 = vpop.f32.mrf.mxu0
        %v1203 = vadd.f32 %v887, %v1202
        %v1204 = vpop.f32.mrf.mxu0
        %1205 = vmatprep.mubr.f32.mxu0 0.0
        %1206 = vmatmul.mubr.f32.gmra.mxu0 %v984
        %v1207 = vpop.f32.mrf.mxu0
        %v1208 = vadd.f32 %v887, %v1207
        %v1209 = vpop.f32.mrf.mxu0
        %1210 = vdwg.mxu0
        %v1211 = vmax.f32 %v1053, 0.0
        %v1212 = vmax.f32 %v1058, 0.0
        %v1213 = vmax.f32 %v1063, 0.0
        %v1214 = vmax.f32 %v1068, 0.0
        %v1215 = vmax.f32 %v1073, 0.0
        %v1216 = vmax.f32 %v1078, 0.0
        %v1217 = vmax.f32 %v1083, 0.0
        %v1218 = vmax.f32 %v1088, 0.0
        %v1219 = vmax.f32 %v1093, 0.0
        %v1220 = vmax.f32 %v1098, 0.0
        %v1221 = vmax.f32 %v1103, 0.0
        %v1222 = vmax.f32 %v1108, 0.0
        %v1223 = vmax.f32 %v1113, 0.0
        %v1224 = vmax.f32 %v1118, 0.0
        %v1225 = vmax.f32 %v1123, 0.0
        %v1226 = vmax.f32 %v1128, 0.0
        %v1227 = vmax.f32 %v1133, 0.0
        %v1228 = vmax.f32 %v1138, 0.0
        %v1229 = vmax.f32 %v1143, 0.0
        %v1230 = vmax.f32 %v1148, 0.0
        %v1231 = vmax.f32 %v1153, 0.0
        %v1232 = vmax.f32 %v1158, 0.0
        %v1233 = vmax.f32 %v1163, 0.0
        %v1234 = vmax.f32 %v1168, 0.0
        %v1235 = vmax.f32 %v1173, 0.0
        %v1236 = vmax.f32 %v1178, 0.0
        %v1237 = vmax.f32 %v1183, 0.0
        %v1238 = vmax.f32 %v1188, 0.0
        %v1239 = vmax.f32 %v1193, 0.0
        %v1240 = vmax.f32 %v1198, 0.0
        %v1241 = vmax.f32 %v1203, 0.0
        %v1242 = vmax.f32 %v1208, 0.0
        %v1243 = vld [vmem:[%s5] sm:$0x1]
        %v1245 = vlaneseq
        %v1246 = vshrl.u32 %v1245, 7
        %v1247 = vsub.s32 0, %v1246
        %v1248 = vrot.slane %v1243, %v1247
        %v1250 = vmul.f32 %v1211, %v1248
        %v1251 = vmul.f32 %v1212, %v1248
        %v1252 = vmul.f32 %v1213, %v1248
        %v1253 = vmul.f32 %v1214, %v1248
        %v1254 = vmul.f32 %v1215, %v1248
        %v1255 = vmul.f32 %v1216, %v1248
        %v1256 = vmul.f32 %v1217, %v1248
        %v1257 = vmul.f32 %v1218, %v1248
        %v1258 = vmul.f32 %v1219, %v1248
        %v1259 = vmul.f32 %v1220, %v1248
        %v1260 = vmul.f32 %v1221, %v1248
        %v1261 = vmul.f32 %v1222, %v1248
        %v1262 = vmul.f32 %v1223, %v1248
        %v1263 = vmul.f32 %v1224, %v1248
        %v1264 = vmul.f32 %v1225, %v1248
        %v1265 = vmul.f32 %v1226, %v1248
        %v1266 = vmul.f32 %v1227, %v1248
        %v1267 = vmul.f32 %v1228, %v1248
        %v1268 = vmul.f32 %v1229, %v1248
        %v1269 = vmul.f32 %v1230, %v1248
        %v1270 = vmul.f32 %v1231, %v1248
        %v1271 = vmul.f32 %v1232, %v1248
        %v1272 = vmul.f32 %v1233, %v1248
        %v1273 = vmul.f32 %v1234, %v1248
        %v1274 = vmul.f32 %v1235, %v1248
        %v1275 = vmul.f32 %v1236, %v1248
        %v1276 = vmul.f32 %v1237, %v1248
        %v1277 = vmul.f32 %v1238, %v1248
        %v1278 = vmul.f32 %v1239, %v1248
        %v1279 = vmul.f32 %v1240, %v1248
        %v1280 = vmul.f32 %v1241, %v1248
        %v1281 = vmul.f32 %v1242, %v1248
        %v1282 = vsel %vm889, %v1250, 0.0
        %1283 = vadd.xlane.f32.xlu0 %v1282
        %v1284 = vpop.xlane.xlu0 %1283
        %v1285 = vsel %vm889, %v1251, 0.0
        %1286 = vadd.xlane.f32.xlu0 %v1285
        %v1287 = vpop.xlane.xlu0 %1286
        %v1288 = vsel %vm889, %v1252, 0.0
        %1289 = vadd.xlane.f32.xlu0 %v1288
        %v1290 = vpop.xlane.xlu0 %1289
        %v1291 = vsel %vm889, %v1253, 0.0
        %1292 = vadd.xlane.f32.xlu0 %v1291
        %v1293 = vpop.xlane.xlu0 %1292
        %v1294 = vsel %vm889, %v1254, 0.0
        %1295 = vadd.xlane.f32.xlu0 %v1294
        %v1296 = vpop.xlane.xlu0 %1295
        %v1297 = vsel %vm889, %v1255, 0.0
        %1298 = vadd.xlane.f32.xlu0 %v1297
        %v1299 = vpop.xlane.xlu0 %1298
        %v1300 = vsel %vm889, %v1256, 0.0
        %1301 = vadd.xlane.f32.xlu0 %v1300
        %v1302 = vpop.xlane.xlu0 %1301
        %v1303 = vsel %vm889, %v1257, 0.0
        %1304 = vadd.xlane.f32.xlu0 %v1303
        %v1305 = vpop.xlane.xlu0 %1304
        %v1306 = vsel %vm889, %v1258, 0.0
        %1307 = vadd.xlane.f32.xlu0 %v1306
        %v1308 = vpop.xlane.xlu0 %1307
        %v1309 = vsel %vm889, %v1259, 0.0
        %1310 = vadd.xlane.f32.xlu0 %v1309
        %v1311 = vpop.xlane.xlu0 %1310
        %v1312 = vsel %vm889, %v1260, 0.0
        %1313 = vadd.xlane.f32.xlu0 %v1312
        %v1314 = vpop.xlane.xlu0 %1313
        %v1315 = vsel %vm889, %v1261, 0.0
        %1316 = vadd.xlane.f32.xlu0 %v1315
        %v1317 = vpop.xlane.xlu0 %1316
        %v1318 = vsel %vm889, %v1262, 0.0
        %1319 = vadd.xlane.f32.xlu0 %v1318
        %v1320 = vpop.xlane.xlu0 %1319
        %v1321 = vsel %vm889, %v1263, 0.0
        %1322 = vadd.xlane.f32.xlu0 %v1321
        %v1323 = vpop.xlane.xlu0 %1322
        %v1324 = vsel %vm889, %v1264, 0.0
        %1325 = vadd.xlane.f32.xlu0 %v1324
        %v1326 = vpop.xlane.xlu0 %1325
        %v1327 = vsel %vm889, %v1265, 0.0
        %1328 = vadd.xlane.f32.xlu0 %v1327
        %v1329 = vpop.xlane.xlu0 %1328
        %v1330 = vsel %vm889, %v1266, 0.0
        %1331 = vadd.xlane.f32.xlu0 %v1330
        %v1332 = vpop.xlane.xlu0 %1331
        %v1333 = vsel %vm889, %v1267, 0.0
        %1334 = vadd.xlane.f32.xlu0 %v1333
        %v1335 = vpop.xlane.xlu0 %1334
        %v1336 = vsel %vm889, %v1268, 0.0
        %1337 = vadd.xlane.f32.xlu0 %v1336
        %v1338 = vpop.xlane.xlu0 %1337
        %v1339 = vsel %vm889, %v1269, 0.0
        %1340 = vadd.xlane.f32.xlu0 %v1339
        %v1341 = vpop.xlane.xlu0 %1340
        %v1342 = vsel %vm889, %v1270, 0.0
        %1343 = vadd.xlane.f32.xlu0 %v1342
        %v1344 = vpop.xlane.xlu0 %1343
        %v1345 = vsel %vm889, %v1271, 0.0
        %1346 = vadd.xlane.f32.xlu0 %v1345
        %v1347 = vpop.xlane.xlu0 %1346
        %v1348 = vsel %vm889, %v1272, 0.0
        %1349 = vadd.xlane.f32.xlu0 %v1348
        %v1350 = vpop.xlane.xlu0 %1349
        %v1351 = vsel %vm889, %v1273, 0.0
        %1352 = vadd.xlane.f32.xlu0 %v1351
        %v1353 = vpop.xlane.xlu0 %1352
        %v1354 = vsel %vm889, %v1274, 0.0
        %1355 = vadd.xlane.f32.xlu0 %v1354
        %v1356 = vpop.xlane.xlu0 %1355
        %v1357 = vsel %vm889, %v1275, 0.0
        %1358 = vadd.xlane.f32.xlu0 %v1357
        %v1359 = vpop.xlane.xlu0 %1358
        %v1360 = vsel %vm889, %v1276, 0.0
        %1361 = vadd.xlane.f32.xlu0 %v1360
        %v1362 = vpop.xlane.xlu0 %1361
        %v1363 = vsel %vm889, %v1277, 0.0
        %1364 = vadd.xlane.f32.xlu0 %v1363
        %v1365 = vpop.xlane.xlu0 %1364
        %v1366 = vsel %vm889, %v1278, 0.0
        %1367 = vadd.xlane.f32.xlu0 %v1366
        %v1368 = vpop.xlane.xlu0 %1367
        %v1369 = vsel %vm889, %v1279, 0.0
        %1370 = vadd.xlane.f32.xlu0 %v1369
        %v1371 = vpop.xlane.xlu0 %1370
        %v1372 = vsel %vm889, %v1280, 0.0
        %1373 = vadd.xlane.f32.xlu0 %v1372
        %v1374 = vpop.xlane.xlu0 %1373
        %v1375 = vsel %vm889, %v1281, 0.0
        %1376 = vadd.xlane.f32.xlu0 %v1375
        %v1377 = vpop.xlane.xlu0 %1376
        %s1378 = sld [smem:[#allocation2]]
        %v1379 = vstv %s1378
        %v1380 = vadd.f32 %v1284, %v1379
        %v1381 = vadd.f32 %v1287, %v1379
        %v1382 = vadd.f32 %v1290, %v1379
        %v1383 = vadd.f32 %v1293, %v1379
        %v1384 = vadd.f32 %v1296, %v1379
        %v1385 = vadd.f32 %v1299, %v1379
        %v1386 = vadd.f32 %v1302, %v1379
        %v1387 = vadd.f32 %v1305, %v1379
        %v1388 = vadd.f32 %v1308, %v1379
        %v1389 = vadd.f32 %v1311, %v1379
        %v1390 = vadd.f32 %v1314, %v1379
        %v1391 = vadd.f32 %v1317, %v1379
        %v1392 = vadd.f32 %v1320, %v1379
        %v1393 = vadd.f32 %v1323, %v1379
        %v1394 = vadd.f32 %v1326, %v1379
        %v1395 = vadd.f32 %v1329, %v1379
        %v1396 = vadd.f32 %v1332, %v1379
        %v1397 = vadd.f32 %v1335, %v1379
        %v1398 = vadd.f32 %v1338, %v1379
        %v1399 = vadd.f32 %v1341, %v1379
        %v1400 = vadd.f32 %v1344, %v1379
        %v1401 = vadd.f32 %v1347, %v1379
        %v1402 = vadd.f32 %v1350, %v1379
        %v1403 = vadd.f32 %v1353, %v1379
        %v1404 = vadd.f32 %v1356, %v1379
        %v1405 = vadd.f32 %v1359, %v1379
        %v1406 = vadd.f32 %v1362, %v1379
        %v1407 = vadd.f32 %v1365, %v1379
        %v1408 = vadd.f32 %v1368, %v1379
        %v1409 = vadd.f32 %v1371, %v1379
        %v1410 = vadd.f32 %v1374, %v1379
        %v1411 = vadd.f32 %v1377, %v1379
        %v1444 = vlaneseq
        %v1445 = vand.u32 %v1444, 127
        %v1446 = vlaneseq
        %v1447 = vshrl.u32 %v1446, 7
        %v1448 = vsub.s32 %v1445, %v1447
        %v1449 = vrot.slane %v1380, %v1448
        %v1450 = vadd.s32 %v1445, 4294967288
        %v1451 = vlaneseq
        %v1452 = vshrl.u32 %v1451, 7
        %v1453 = vsub.s32 %v1450, %v1452
        %v1454 = vrot.slane %v1381, %v1453
        %vm1455 = vcmask 130112
        %v1456 = vsel %vm1455, %v1454, %v1449
        %v1457 = vlaneseq
        %v1458 = vshrl.u32 %v1457, 7
        %v1459 = vsub.s32 %v1445, %v1458
        %v1460 = vrot.slane %v1382, %v1459
        %v1461 = vlaneseq
        %v1462 = vshrl.u32 %v1461, 7
        %v1463 = vsub.s32 %v1450, %v1462
        %v1464 = vrot.slane %v1383, %v1463
        %v1465 = vsel %vm1455, %v1464, %v1460
        %v1466 = vlaneseq
        %v1467 = vshrl.u32 %v1466, 7
        %v1468 = vsub.s32 %v1445, %v1467
        %v1469 = vrot.slane %v1384, %v1468
        %v1470 = vlaneseq
        %v1471 = vshrl.u32 %v1470, 7
        %v1472 = vsub.s32 %v1450, %v1471
        %v1473 = vrot.slane %v1385, %v1472
        %v1474 = vsel %vm1455, %v1473, %v1469
        %v1475 = vlaneseq
        %v1476 = vshrl.u32 %v1475, 7
        %v1477 = vsub.s32 %v1445, %v1476
        %v1478 = vrot.slane %v1386, %v1477
        %v1479 = vlaneseq
        %v1480 = vshrl.u32 %v1479, 7
        %v1481 = vsub.s32 %v1450, %v1480
        %v1482 = vrot.slane %v1387, %v1481
        %v1483 = vsel %vm1455, %v1482, %v1478
        %v1484 = vlaneseq
        %v1485 = vshrl.u32 %v1484, 7
        %v1486 = vsub.s32 %v1445, %v1485
        %v1487 = vrot.slane %v1388, %v1486
        %v1488 = vlaneseq
        %v1489 = vshrl.u32 %v1488, 7
        %v1490 = vsub.s32 %v1450, %v1489
        %v1491 = vrot.slane %v1389, %v1490
        %v1492 = vsel %vm1455, %v1491, %v1487
        %v1493 = vlaneseq
        %v1494 = vshrl.u32 %v1493, 7
        %v1495 = vsub.s32 %v1445, %v1494
        %v1496 = vrot.slane %v1390, %v1495
        %v1497 = vlaneseq
        %v1498 = vshrl.u32 %v1497, 7
        %v1499 = vsub.s32 %v1450, %v1498
        %v1500 = vrot.slane %v1391, %v1499
        %v1501 = vsel %vm1455, %v1500, %v1496
        %v1502 = vlaneseq
        %v1503 = vshrl.u32 %v1502, 7
        %v1504 = vsub.s32 %v1445, %v1503
        %v1505 = vrot.slane %v1392, %v1504
        %v1506 = vlaneseq
        %v1507 = vshrl.u32 %v1506, 7
        %v1508 = vsub.s32 %v1450, %v1507
        %v1509 = vrot.slane %v1393, %v1508
        %v1510 = vsel %vm1455, %v1509, %v1505
        %v1511 = vlaneseq
        %v1512 = vshrl.u32 %v1511, 7
        %v1513 = vsub.s32 %v1445, %v1512
        %v1514 = vrot.slane %v1394, %v1513
        %v1515 = vlaneseq
        %v1516 = vshrl.u32 %v1515, 7
        %v1517 = vsub.s32 %v1450, %v1516
        %v1518 = vrot.slane %v1395, %v1517
        %v1519 = vsel %vm1455, %v1518, %v1514
        %v1520 = vlaneseq
        %v1521 = vshrl.u32 %v1520, 7
        %v1522 = vsub.s32 %v1445, %v1521
        %v1523 = vrot.slane %v1396, %v1522
        %v1524 = vlaneseq
        %v1525 = vshrl.u32 %v1524, 7
        %v1526 = vsub.s32 %v1450, %v1525
        %v1527 = vrot.slane %v1397, %v1526
        %v1528 = vsel %vm1455, %v1527, %v1523
        %v1529 = vlaneseq
        %v1530 = vshrl.u32 %v1529, 7
        %v1531 = vsub.s32 %v1445, %v1530
        %v1532 = vrot.slane %v1398, %v1531
        %v1533 = vlaneseq
        %v1534 = vshrl.u32 %v1533, 7
        %v1535 = vsub.s32 %v1450, %v1534
        %v1536 = vrot.slane %v1399, %v1535
        %v1537 = vsel %vm1455, %v1536, %v1532
        %v1538 = vlaneseq
        %v1539 = vshrl.u32 %v1538, 7
        %v1540 = vsub.s32 %v1445, %v1539
        %v1541 = vrot.slane %v1400, %v1540
        %v1542 = vlaneseq
        %v1543 = vshrl.u32 %v1542, 7
        %v1544 = vsub.s32 %v1450, %v1543
        %v1545 = vrot.slane %v1401, %v1544
        %v1546 = vsel %vm1455, %v1545, %v1541
        %v1547 = vlaneseq
        %v1548 = vshrl.u32 %v1547, 7
        %v1549 = vsub.s32 %v1445, %v1548
        %v1550 = vrot.slane %v1402, %v1549
        %v1551 = vlaneseq
        %v1552 = vshrl.u32 %v1551, 7
        %v1553 = vsub.s32 %v1450, %v1552
        %v1554 = vrot.slane %v1403, %v1553
        %v1555 = vsel %vm1455, %v1554, %v1550
        %v1556 = vlaneseq
        %v1557 = vshrl.u32 %v1556, 7
        %v1558 = vsub.s32 %v1445, %v1557
        %v1559 = vrot.slane %v1404, %v1558
        %v1560 = vlaneseq
        %v1561 = vshrl.u32 %v1560, 7
        %v1562 = vsub.s32 %v1450, %v1561
        %v1563 = vrot.slane %v1405, %v1562
        %v1564 = vsel %vm1455, %v1563, %v1559
        %v1565 = vlaneseq
        %v1566 = vshrl.u32 %v1565, 7
        %v1567 = vsub.s32 %v1445, %v1566
        %v1568 = vrot.slane %v1406, %v1567
        %v1569 = vlaneseq
        %v1570 = vshrl.u32 %v1569, 7
        %v1571 = vsub.s32 %v1450, %v1570
        %v1572 = vrot.slane %v1407, %v1571
        %v1573 = vsel %vm1455, %v1572, %v1568
        %v1574 = vlaneseq
        %v1575 = vshrl.u32 %v1574, 7
        %v1576 = vsub.s32 %v1445, %v1575
        %v1577 = vrot.slane %v1408, %v1576
        %v1578 = vlaneseq
        %v1579 = vshrl.u32 %v1578, 7
        %v1580 = vsub.s32 %v1450, %v1579
        %v1581 = vrot.slane %v1409, %v1580
        %v1582 = vsel %vm1455, %v1581, %v1577
        %v1583 = vlaneseq
        %v1584 = vshrl.u32 %v1583, 7
        %v1585 = vsub.s32 %v1445, %v1584
        %v1586 = vrot.slane %v1410, %v1585
        %v1587 = vlaneseq
        %v1588 = vshrl.u32 %v1587, 7
        %v1589 = vsub.s32 %v1450, %v1588
        %v1590 = vrot.slane %v1411, %v1589
        %v1591 = vsel %vm1455, %v1590, %v1586
        %vm1592 = vcmask 1041409
        %v1593 = vsel %vm1592, %v1465, %v1456
        %vm1594 = vcmask 1042434
        %v1595 = vsel %vm1594, %v1474, %v1593
        %vm1596 = vcmask 1043459
        %v1597 = vsel %vm1596, %v1483, %v1595
        %vm1598 = vcmask 1044484
        %v1599 = vsel %vm1598, %v1492, %v1597
        %vm1600 = vcmask 1045509
        %v1601 = vsel %vm1600, %v1501, %v1599
        %vm1602 = vcmask 1046534
        %v1603 = vsel %vm1602, %v1510, %v1601
        %vm1604 = vcmask 1047559
        %v1605 = vsel %vm1604, %v1519, %v1603
        %v1606 = vsel %vm1592, %v1537, %v1528
        %v1607 = vsel %vm1594, %v1546, %v1606
        %v1608 = vsel %vm1596, %v1555, %v1607
        %v1609 = vsel %vm1598, %v1564, %v1608
        %v1610 = vsel %vm1600, %v1573, %v1609
        %v1611 = vsel %vm1602, %v1582, %v1610
        %v1612 = vsel %vm1604, %v1591, %v1611
        %vm1615 = vcmask 130048
        %1616 = vst.msk [vmem:[%s332] sm:$0xff] %vm1615, %v1605
        %1617 = vst.msk [vmem:[%s332 + $0x8] sm:$0xff] %vm1615, %v1612
        %s1618 = sand.u32 %s214, 1
        %s1619 = scalar_lea.sflag [#allocation4], %s1618
        %s1620 = sand.u32 %s214, 1
        %s1621 = smul.addr %s1620, 16
        %s1622 = scalar_lea.vmem [#allocation3], %s1621
        // Predicated region
        $region49: #{contact_attention_simple_forward.29} parent=47 // pred_check
          %p1623 = pneg %p224
        $region50: #{contact_attention_simple_forward.29} parent=47 // pred_check_branch
          %1625 = sbr.rel (%p1623) target = $region52
        $region51: #{contact_attention_simple_forward.29} parent=47 // pred_region
          %s1626 = smul.u32 2, %s28
          %s1628 = ssub.s32 256, 256
          %1629 = vsyncadd %s1619, %s1628
          %s1630 = sadd.s32 %s29, %s1626
          %s1631 = smul.addr %s27, 2
          %s1632 = sadd.s32 %s1630, %s1631
          %s1633 = smul.addr %s1632, 128
          %s1634 = scalar_lea.hbm %s7, %s1633
          %s1635 = sshll.u32 %s1622, 4
          %s1636 = int_to_ptr.vmem [resolvable:$true] %s1635
          %1641 = dma.vmem_to_hbm [thread:$0]  %s1636, 256, %s1634, %s1619, 128, 128, 8
        $region52: #{contact_attention_simple_forward.29} parent=47 // pred_fallthru
          _
      $region48: #{contact_attention_simple_forward.29} parent=5 // pred_fallthru
        _
      %p1642 = scmp.le.s32.totalorder 2, %s17
      // Predicated region
      $region53: #{contact_attention_simple_forward.29} parent=5 // pred_check
        %p1643 = pneg %p1642
      $region54: #{contact_attention_simple_forward.29} parent=5 // pred_check_branch
        %1645 = sbr.rel (%p1643) target = $region56
      $region55: #{contact_attention_simple_forward.29} parent=5 // pred_region
        %s1646 = ssub.s32 %s17, 2
        // Predicated region
        $region57: #{contact_attention_simple_forward.29} parent=55 // pred_check
          %p1647 = pneg %p230
        $region58: #{contact_attention_simple_forward.29} parent=55 // pred_check_branch
          %1649 = sbr.rel (%p1647) target = $region60
        $region59: #{contact_attention_simple_forward.29} parent=55 // pred_region
          %s1650 = sand.u32 %s215, 1
          %s1651 = scalar_lea.sflag [#allocation4], %s1650
          %s1652 = sand.u32 %s215, 1
          %s1653 = smul.addr %s1652, 16
          %s1654 = scalar_lea.vmem [#allocation3], %s1653
          %1655 = dma.done %s1651, 256
        $region60: #{contact_attention_simple_forward.29} parent=55 // pred_fallthru
          _
      $region56: #{contact_attention_simple_forward.29} parent=5 // pred_fallthru
        _
    $region6: #{contact_attention_simple_forward.29} parent=1 // loop_footer
      %s21 = sadd.s32 1, %s17
    $region7: #{contact_attention_simple_forward.29} parent=1 // loop_footer_branch
      %16 = sbr.rel target = $region3
    $region8: #{contact_attention_simple_forward.29} parent=1 // loop_exit
      _
    %1656 = vsyncpa [#allocation4], 1
    %s1657 = scalar_lea.sflag [#allocation4], 1
    %1658 = vsyncpa %s1657, 1

</llo_original>
